<compile_context>
chip_gen: v6e
topology: v6e:2x2x1
jax: 0.10.0
libtpu: 0.0.40
codegen_flags: <defaults>
</compile_context>

<pallas_src>
import functools

import numpy as np
import jax
import jax.numpy as jnp
from jax import lax
from jax.experimental import pallas as pl
from jax.experimental.pallas import tpu as pltpu


# ---------------------------------------------------------------------------
# Positional encoding table (host-side, deterministic; same math as PyTorch)
# ---------------------------------------------------------------------------
def get_sinusoid_encoding_table(positions, d_hid, T=1000):
    if isinstance(positions, int):
        positions = list(range(positions))

    def cal_angle(position, hid_idx):
        return position / np.power(T, 2 * (hid_idx // 2) / d_hid)

    table = np.array(
        [[cal_angle(pos, j) for j in range(d_hid)] for pos in positions],
        dtype=np.float64,
    )
    table[:, 0::2] = np.sin(table[:, 0::2])
    table[:, 1::2] = np.cos(table[:, 1::2])
    return jnp.asarray(table, dtype=jnp.float32)


# ---------------------------------------------------------------------------
# Fully fused forward kernel
# ---------------------------------------------------------------------------
def _transformer_kernel(x_ref, pos_ref, bmask_ref,
                        win_ref, bin_ref, wout_ref, bout_ref,
                        lnw_ref, lnb_ref,
                        w1_ref, b1_ref, w23_ref, b23_ref,
                        o_ref, attn_scratch,
                        *, batch, seq_len, embed_dim, num_layers, num_heads,
                        fc1_dim):
    B, S, E, H = batch, seq_len, embed_dim, num_heads
    hd = E // H
    N = B * S
    scale = float(1.0 / np.sqrt(hd))
    inv_se = float(1.0 / (S * E))

    def mm(a, b):
        return jnp.dot(a, b, preferred_element_type=jnp.float32)

    def mm_nt(a, b):  # a @ b.T expressed via dimension numbers (no transpose op)
        return lax.dot_general(a, b, (((1,), (1,)), ((), ())),
                               preferred_element_type=jnp.float32)

    # positional-encoding add (pos is pre-tiled to (B*S, E) on the host)
    x = x_ref[...] + pos_ref[...]                       # (N, E)

    bmask = bmask_ref[...]                              # (N, N) 1.0 same-batch
    neg_mask = (bmask - 1.0) * 1e30                     # 0 / -1e30 additive mask
    ln_w = lnw_ref[...]                                 # (N, E), batch-tiled
    ln_b = lnb_ref[...]

    for li in range(num_layers):
        w_in = win_ref[li]                              # (E, 3E) = in_proj_w.T
        b_in = bin_ref[li]                              # (1, 3E)
        w_out = wout_ref[li]                            # (E, E)  = out_proj_w.T
        b_out = bout_ref[li]                            # (1, E)

        # qkv projection for the whole batch in one matmul
        qkv = mm(x, w_in) + b_in                        # (N, 3E)
        q = qkv[:, 0:E] * scale
        k = qkv[:, E:2 * E]
        v = qkv[:, 2 * E:3 * E]

        # per-head attention, batched over the batch dim via the block mask
        for h in range(H):
            sl = slice(h * hd, (h + 1) * hd)
            s_h = mm_nt(q[:, sl], k[:, sl]) + neg_mask  # (N, N)
            s_h = s_h - jnp.max(s_h, axis=-1, keepdims=True)
            p = jnp.exp(s_h)
            denom = jnp.sum(p, axis=-1, keepdims=True)
            p = p * pl.reciprocal(denom, approx=True)
            attn_scratch[:, sl] = mm(p, v[:, sl])       # (N, hd) into its columns

        # single output projection over the concatenated heads
        attn = mm(attn_scratch[...], w_out) + b_out     # (N, E)

        # residual + LayerNorm over the (S, E) slab of each batch element
        y = x + attn
        row_sum = jnp.sum(y, axis=1, keepdims=True)     # (N, 1)
        mean = mm(bmask, row_sum) * inv_se              # per-row batch mean
        c = y - mean
        row_sq = jnp.sum(c * c, axis=1, keepdims=True)
        var = mm(bmask, row_sq) * inv_se
        x = c * lax.rsqrt(var + 1e-5) * ln_w + ln_b     # (N, E)

    # ---- MLP head: fc1 -> relu -> dropout(identity, eval) -> fc2 -> fc3 ----
    # TODO(synk): training-mode dropout (p=0.8) not implemented; eval-mode
    #             identity only.
    w1 = w1_ref[...]                                    # (S*E, fc1_dim)
    b1 = b1_ref[...]                                    # (1, fc1_dim)
    w23 = w23_ref[...]                                  # (fc1_dim, 2) folded fc3@fc2
    b23 = b23_ref[...]                                  # (1, 2)
    w1_blocks = [w1[s * E:(s + 1) * E, :] for s in range(S)]
    for b in range(B):
        # fc1 on the flattened (S*E,) row, done block-wise to avoid an
        # in-kernel lane-merging reshape.
        h1 = b1
        for s in range(S):
            n = b * S + s
            h1 = h1 + mm(x[n:n + 1, :], w1_blocks[s])   # (1, fc1_dim)
        h1 = jnp.maximum(h1, 0.0)
        o_ref[b:b + 1, :] = (mm(h1, w23) + b23).astype(o_ref.dtype)


def transformer_forward(x, prep):
    """x: (B, S, E) float32.  prep: output of prepare_params()."""
    B, S, E = x.shape
    N = B * S
    F = S * E
    L = prep["w_in_t"].shape[0]
    H = prep["num_heads"]
    H1 = prep["fc1_w_t"].shape[1]

    kernel = functools.partial(
        _transformer_kernel, batch=B, seq_len=S, embed_dim=E,
        num_layers=L, num_heads=H, fc1_dim=H1)

    def fs(shape):  # full-array block, single grid step
        return pl.BlockSpec(shape, lambda i, _s=shape: (0,) * len(_s))

    out = pl.pallas_call(
        kernel,
        out_shape=jax.ShapeDtypeStruct((B, 2), jnp.float32),
        grid=(1,),
        in_specs=[
            fs((N, E)),               # x (reshaped to (B*S, E) outside, free)
            fs((N, E)),               # positional table, batch-tiled
            fs((N, N)),               # same-batch indicator
            fs((L, E, 3 * E)),        # in_proj weights, transposed, stacked
            fs((L, 1, 3 * E)),        # in_proj biases
            fs((L, E, E)),            # out_proj weights, transposed, stacked
            fs((L, 1, E)),            # out_proj biases
            fs((N, E)),               # LayerNorm weight, batch-tiled
            fs((N, E)),               # LayerNorm bias, batch-tiled
            fs((F, H1)),              # fc1 weight, transposed
            fs((1, H1)),              # fc1 bias
            fs((H1, 2)),              # folded fc3(fc2(.)) weight, transposed
            fs((1, 2)),               # folded bias
        ],
        out_specs=fs((B, 2)),
        scratch_shapes=[pltpu.VMEM((N, E), jnp.float32)],
        compiler_params=pltpu.CompilerParams(dimension_semantics=("arbitrary",)),
    )(
        x.reshape(N, E),
        prep["pos_tiled"], prep["bmask"],
        prep["w_in_t"], prep["b_in"], prep["w_out_t"], prep["b_out"],
        prep["ln_w_tiled"], prep["ln_b_tiled"],
        prep["fc1_w_t"], prep["fc1_b"], prep["fc23_w_t"], prep["fc23_b"],
    )
    return out


# ---------------------------------------------------------------------------
# Parameters: raw (PyTorch layout) + host-side preprocessing for the kernel
# ---------------------------------------------------------------------------
def make_params(key, *, seq_length, embed_dim, num_layers):
    F = seq_length * embed_dim
    keys = jax.random.split(key, 6 + 4 * num_layers)
    layers = []
    for i in range(num_layers):
        k0, k1, k2, k3 = keys[6 + 4 * i: 10 + 4 * i]
        layers.append(dict(
            in_proj_w=0.1 * jax.random.normal(k0, (3 * embed_dim, embed_dim), jnp.float32),
            in_proj_b=0.1 * jax.random.normal(k1, (3 * embed_dim,), jnp.float32),
            out_proj_w=0.1 * jax.random.normal(k2, (embed_dim, embed_dim), jnp.float32),
            out_proj_b=0.1 * jax.random.normal(k3, (embed_dim,), jnp.float32),
        ))
    return dict(
        pos_enc=get_sinusoid_encoding_table(seq_length + 1, d_hid=embed_dim, T=1000),
        layers=layers,
        # nn.LayerNorm((S, E)) default init (shared across layers, as in the module)
        ln_w=jnp.ones((seq_length, embed_dim), jnp.float32),
        ln_b=jnp.zeros((seq_length, embed_dim), jnp.float32),
        fc1_w=0.1 * jax.random.normal(keys[0], (128, F), jnp.float32),
        fc1_b=0.1 * jax.random.normal(keys[1], (128,), jnp.float32),
        fc2_w=0.1 * jax.random.normal(keys[2], (8, 128), jnp.float32),
        fc2_b=0.1 * jax.random.normal(keys[3], (8,), jnp.float32),
        fc3_w=0.1 * jax.random.normal(keys[4], (2, 8), jnp.float32),
        fc3_b=0.1 * jax.random.normal(keys[5], (2,), jnp.float32),
    )


def prepare_params(params, *, batch, seq_length, embed_dim, num_heads):
    """One-time host-side prep: transpose/stack/fold weights, tile constants."""
    B, S, E = batch, seq_length, embed_dim
    assert E % num_heads == 0
    layers = params["layers"]
    w_in_t = jnp.stack([l["in_proj_w"].T for l in layers], axis=0)          # (L,E,3E)
    b_in = jnp.stack([l["in_proj_b"].reshape(1, -1) for l in layers], 0)    # (L,1,3E)
    w_out_t = jnp.stack([l["out_proj_w"].T for l in layers], axis=0)        # (L,E,E)
    b_out = jnp.stack([l["out_proj_b"].reshape(1, -1) for l in layers], 0)  # (L,1,E)
    # exact fold: fc3(fc2(h)) = h @ (W3 @ W2).T + (W3 @ b2 + b3)
    w23 = params["fc3_w"] @ params["fc2_w"]                                 # (2,128)
    b23 = params["fc3_w"] @ params["fc2_b"] + params["fc3_b"]               # (2,)
    bid = jnp.repeat(jnp.arange(B), S)
    bmask = (bid[:, None] == bid[None, :]).astype(jnp.float32)              # (B*S,B*S)
    return dict(
        num_heads=num_heads,
        pos_tiled=jnp.tile(params["pos_enc"][:S, :], (B, 1)),               # (B*S,E)
        bmask=bmask,
        w_in_t=w_in_t, b_in=b_in, w_out_t=w_out_t, b_out=b_out,
        ln_w_tiled=jnp.tile(params["ln_w"], (B, 1)),
        ln_b_tiled=jnp.tile(params["ln_b"], (B, 1)),
        fc1_w_t=params["fc1_w"].T,                                          # (S*E,128)
        fc1_b=params["fc1_b"].reshape(1, -1),
        fc23_w_t=w23.T,                                                     # (128,2)
        fc23_b=b23.reshape(1, -1),
    )


# ---------------------------------------------------------------------------
# Pure-JAX reference (mirrors the PyTorch forward, eval mode)
# ---------------------------------------------------------------------------
def transformer_reference(x, params, *, num_heads):
    B, S, E = x.shape
    H = num_heads
    hd = E // H
    x = x + params["pos_enc"][None, :S, :]
    for lyr in params["layers"]:
        qkv = jnp.einsum("bse,fe->bsf", x, lyr["in_proj_w"]) + lyr["in_proj_b"]
        q, k, v = qkv[..., :E], qkv[..., E:2 * E], qkv[..., 2 * E:]
        q = q.reshape(B, S, H, hd).transpose(0, 2, 1, 3) / np.sqrt(hd)
        k = k.reshape(B, S, H, hd).transpose(0, 2, 1, 3)
        v = v.reshape(B, S, H, hd).transpose(0, 2, 1, 3)
        s = jnp.einsum("bhqd,bhkd->bhqk", q, k)
        p = jax.nn.softmax(s, axis=-1)
        o = jnp.einsum("bhqk,bhkd->bhqd", p, v).transpose(0, 2, 1, 3).reshape(B, S, E)
        attn = jnp.einsum("bse,fe->bsf", o, lyr["out_proj_w"]) + lyr["out_proj_b"]
        y = x + attn
        mean = y.mean(axis=(1, 2), keepdims=True)
        var = ((y - mean) ** 2).mean(axis=(1, 2), keepdims=True)
        x = (y - mean) / jnp.sqrt(var + 1e-5) * params["ln_w"] + params["ln_b"]
    xf = x.reshape(B, S * E)
    h1 = jax.nn.relu(xf @ params["fc1_w"].T + params["fc1_b"])
    h2 = h1 @ params["fc2_w"].T + params["fc2_b"]          # dropout = identity (eval)
    return h2 @ params["fc3_w"].T + params["fc3_b"]


if __name__ == "__main__":
    # Small shapes consistent with the module:
    #   batch=2, seq_length=8, embed_dim=32, num_heads=4, num_layers=1
    B, S, E, H, L = 2, 8, 32, 4, 1

    key = jax.random.PRNGKey(0)
    k_x, k_p = jax.random.split(key)
    x = jax.random.normal(k_x, (B, S, E), jnp.float32)
    params = make_params(k_p, seq_length=S, embed_dim=E, num_layers=L)
    prep = prepare_params(params, batch=B, seq_length=S, embed_dim=E, num_heads=H)

    out = transformer_forward(x, prep)
    out = jax.block_until_ready(out)

    assert out.shape == (B, 2) and out.dtype == jnp.float32
    assert bool(jnp.all(jnp.isfinite(out)))

    ref = transformer_reference(x, params, num_heads=H)
    assert bool(jnp.allclose(out, ref, atol=5e-2, rtol=5e-2)), (out, ref)

    print("KERNEL_OK")
</pallas_src>

<mosaic_0001>
module attributes {stable_mosaic.version = 11 : i64} {
  func.func @_transformer_kernel(%arg0: i32, %arg1: memref<16x32xf32, #tpu.memory_space<vmem>>, %arg2: memref<16x32xf32, #tpu.memory_space<vmem>>, %arg3: memref<16x16xf32, #tpu.memory_space<vmem>>, %arg4: memref<1x32x96xf32, #tpu.memory_space<vmem>>, %arg5: memref<1x1x96xf32, #tpu.memory_space<vmem>>, %arg6: memref<1x32x32xf32, #tpu.memory_space<vmem>>, %arg7: memref<1x1x32xf32, #tpu.memory_space<vmem>>, %arg8: memref<16x32xf32, #tpu.memory_space<vmem>>, %arg9: memref<16x32xf32, #tpu.memory_space<vmem>>, %arg10: memref<256x128xf32, #tpu.memory_space<vmem>>, %arg11: memref<1x128xf32, #tpu.memory_space<vmem>>, %arg12: memref<128x2xf32, #tpu.memory_space<vmem>>, %arg13: memref<1x2xf32, #tpu.memory_space<vmem>>, %arg14: memref<2x2xf32, #tpu.memory_space<vmem>>, %arg15: memref<16x32xf32, #tpu.memory_space<vmem>>) attributes {dimension_semantics = [#tpu.dimension_semantics<arbitrary>], iteration_bounds = array<i64: 1>, scalar_prefetch = 0 : i64, scratch_operands = 1 : i64, tpu.core_type = #tpu.core_type<tc>, window_params = [{pipeline_mode = #tpu.pipeline_mode<synchronous>, transform_indices = @transform_0, window_bounds = array<i64: 16, 32>}, {pipeline_mode = #tpu.pipeline_mode<synchronous>, transform_indices = @transform_1, window_bounds = array<i64: 16, 32>}, {pipeline_mode = #tpu.pipeline_mode<synchronous>, transform_indices = @transform_2, window_bounds = array<i64: 16, 16>}, {pipeline_mode = #tpu.pipeline_mode<synchronous>, transform_indices = @transform_3, window_bounds = array<i64: 1, 32, 96>}, {pipeline_mode = #tpu.pipeline_mode<synchronous>, transform_indices = @transform_4, window_bounds = array<i64: 1, 1, 96>}, {pipeline_mode = #tpu.pipeline_mode<synchronous>, transform_indices = @transform_5, window_bounds = array<i64: 1, 32, 32>}, {pipeline_mode = #tpu.pipeline_mode<synchronous>, transform_indices = @transform_6, window_bounds = array<i64: 1, 1, 32>}, {pipeline_mode = #tpu.pipeline_mode<synchronous>, transform_indices = @transform_7, window_bounds = array<i64: 16, 32>}, {pipeline_mode = #tpu.pipeline_mode<synchronous>, transform_indices = @transform_8, window_bounds = array<i64: 16, 32>}, {pipeline_mode = #tpu.pipeline_mode<synchronous>, transform_indices = @transform_9, window_bounds = array<i64: 256, 128>}, {pipeline_mode = #tpu.pipeline_mode<synchronous>, transform_indices = @transform_10, window_bounds = array<i64: 1, 128>}, {pipeline_mode = #tpu.pipeline_mode<synchronous>, transform_indices = @transform_11, window_bounds = array<i64: 128, 2>}, {pipeline_mode = #tpu.pipeline_mode<synchronous>, transform_indices = @transform_12, window_bounds = array<i64: 1, 2>}, {pipeline_mode = #tpu.pipeline_mode<synchronous>, transform_indices = @transform_13, window_bounds = array<i64: 2, 2>}]} {
    %c0 = arith.constant 0 : index
    %c0_0 = arith.constant 0 : index
    %0 = vector.load %arg1[%c0, %c0_0] : memref<16x32xf32, #tpu.memory_space<vmem>>, vector<16x32xf32>
    %c0_1 = arith.constant 0 : index
    %c0_2 = arith.constant 0 : index
    %1 = vector.load %arg2[%c0_1, %c0_2] : memref<16x32xf32, #tpu.memory_space<vmem>>, vector<16x32xf32>
    %2 = arith.addf %0, %1 : vector<16x32xf32>
    %c0_3 = arith.constant 0 : index
    %c0_4 = arith.constant 0 : index
    %3 = vector.load %arg3[%c0_3, %c0_4] : memref<16x16xf32, #tpu.memory_space<vmem>>, vector<16x16xf32>
    %cst = arith.constant 1.000000e+00 : f32
    %4 = vector.broadcast %cst : f32 to vector<16x16xf32>
    %5 = arith.subf %3, %4 : vector<16x16xf32>
    %cst_5 = arith.constant 1.000000e+30 : f32
    %6 = vector.broadcast %cst_5 : f32 to vector<16x16xf32>
    %7 = arith.mulf %5, %6 : vector<16x16xf32>
    %c0_6 = arith.constant 0 : index
    %c0_7 = arith.constant 0 : index
    %8 = vector.load %arg8[%c0_6, %c0_7] : memref<16x32xf32, #tpu.memory_space<vmem>>, vector<16x32xf32>
    %c0_8 = arith.constant 0 : index
    %c0_9 = arith.constant 0 : index
    %9 = vector.load %arg9[%c0_8, %c0_9] : memref<16x32xf32, #tpu.memory_space<vmem>>, vector<16x32xf32>
    %c0_10 = arith.constant 0 : index
    %c0_11 = arith.constant 0 : index
    %c0_12 = arith.constant 0 : index
    %10 = vector.load %arg4[%c0_10, %c0_11, %c0_12] : memref<1x32x96xf32, #tpu.memory_space<vmem>>, vector<1x32x96xf32>
    %11 = vector.shape_cast %10 : vector<1x32x96xf32> to vector<32x96xf32>
    %c0_13 = arith.constant 0 : index
    %c0_14 = arith.constant 0 : index
    %c0_15 = arith.constant 0 : index
    %12 = vector.load %arg5[%c0_13, %c0_14, %c0_15] : memref<1x1x96xf32, #tpu.memory_space<vmem>>, vector<1x1x96xf32>
    %13 = vector.shape_cast %12 : vector<1x1x96xf32> to vector<1x96xf32>
    %c0_16 = arith.constant 0 : index
    %c0_17 = arith.constant 0 : index
    %c0_18 = arith.constant 0 : index
    %14 = vector.load %arg6[%c0_16, %c0_17, %c0_18] : memref<1x32x32xf32, #tpu.memory_space<vmem>>, vector<1x32x32xf32>
    %15 = vector.shape_cast %14 : vector<1x32x32xf32> to vector<32x32xf32>
    %c0_19 = arith.constant 0 : index
    %c0_20 = arith.constant 0 : index
    %c0_21 = arith.constant 0 : index
    %16 = vector.load %arg7[%c0_19, %c0_20, %c0_21] : memref<1x1x32xf32, #tpu.memory_space<vmem>>, vector<1x1x32xf32>
    %17 = vector.shape_cast %16 : vector<1x1x32xf32> to vector<1x32xf32>
    %cst_22 = arith.constant dense<0.000000e+00> : vector<16x96xf32>
    %18 = tpu.matmul %2, %11, %cst_22 {dimension_numbers = #tpu.dot_dimension_numbers<[1], [0], [0], [1], [0, 0, 1, 1], [], []>} : vector<16x32xf32>, vector<32x96xf32>, vector<16x96xf32> -> vector<16x96xf32>
    %19 = vector.broadcast %13 : vector<1x96xf32> to vector<16x96xf32>
    %20 = arith.addf %18, %19 : vector<16x96xf32>
    %21 = vector.extract_strided_slice %20 {offsets = [0, 0], sizes = [16, 32], strides = [1, 1]} : vector<16x96xf32> to vector<16x32xf32>
    %cst_23 = arith.constant 0.353553385 : f32
    %22 = vector.broadcast %cst_23 : f32 to vector<16x32xf32>
    %23 = arith.mulf %21, %22 : vector<16x32xf32>
    %24 = vector.extract_strided_slice %20 {offsets = [0, 32], sizes = [16, 32], strides = [1, 1]} : vector<16x96xf32> to vector<16x32xf32>
    %25 = vector.extract_strided_slice %20 {offsets = [0, 64], sizes = [16, 32], strides = [1, 1]} : vector<16x96xf32> to vector<16x32xf32>
    %26 = vector.extract_strided_slice %23 {offsets = [0, 0], sizes = [16, 8], strides = [1, 1]} : vector<16x32xf32> to vector<16x8xf32>
    %27 = vector.extract_strided_slice %24 {offsets = [0, 0], sizes = [16, 8], strides = [1, 1]} : vector<16x32xf32> to vector<16x8xf32>
    %cst_24 = arith.constant dense<0.000000e+00> : vector<16x16xf32>
    %28 = tpu.matmul %26, %27, %cst_24 {dimension_numbers = #tpu.dot_dimension_numbers<[1], [1], [0], [0], [0, 0, 1, 0], [], []>} : vector<16x8xf32>, vector<16x8xf32>, vector<16x16xf32> -> vector<16x16xf32>
    %29 = arith.addf %28, %7 : vector<16x16xf32>
    %cst_25 = arith.constant dense<0xFF800000> : vector<16xf32>
    %30 = vector.multi_reduction <maximumf>, %29, %cst_25 [1] : vector<16x16xf32> to vector<16xf32>
    %31 = vector.shape_cast %30 : vector<16xf32> to vector<16x1xf32>
    %32 = vector.broadcast %31 : vector<16x1xf32> to vector<16x16xf32>
    %33 = arith.subf %29, %32 : vector<16x16xf32>
    %34 = math.exp %33 : vector<16x16xf32>
    %cst_26 = arith.constant dense<0.000000e+00> : vector<16xf32>
    %35 = vector.multi_reduction <add>, %34, %cst_26 [1] : vector<16x16xf32> to vector<16xf32>
    %36 = vector.shape_cast %35 : vector<16xf32> to vector<16x1xf32>
    %37 = tpu.reciprocal %36 {approx = true} : vector<16x1xf32> -> vector<16x1xf32>
    %38 = vector.broadcast %37 : vector<16x1xf32> to vector<16x16xf32>
    %39 = arith.mulf %34, %38 : vector<16x16xf32>
    %40 = vector.extract_strided_slice %25 {offsets = [0, 0], sizes = [16, 8], strides = [1, 1]} : vector<16x32xf32> to vector<16x8xf32>
    %cst_27 = arith.constant dense<0.000000e+00> : vector<16x8xf32>
    %41 = tpu.matmul %39, %40, %cst_27 {dimension_numbers = #tpu.dot_dimension_numbers<[1], [0], [0], [1], [0, 0, 1, 1], [], []>} : vector<16x16xf32>, vector<16x8xf32>, vector<16x8xf32> -> vector<16x8xf32>
    %c0_28 = arith.constant 0 : index
    %c0_29 = arith.constant 0 : index
    %42 = vector.load %arg15[%c0_28, %c0_29] : memref<16x32xf32, #tpu.memory_space<vmem>>, vector<16x8xf32>
    tpu.vector_store %arg15[%c0_28, %c0_29], %41 {strides = array<i32>} : memref<16x32xf32, #tpu.memory_space<vmem>>, vector<16x8xf32>,
    %43 = vector.extract_strided_slice %23 {offsets = [0, 8], sizes = [16, 8], strides = [1, 1]} : vector<16x32xf32> to vector<16x8xf32>
    %44 = vector.extract_strided_slice %24 {offsets = [0, 8], sizes = [16, 8], strides = [1, 1]} : vector<16x32xf32> to vector<16x8xf32>
    %cst_30 = arith.constant dense<0.000000e+00> : vector<16x16xf32>
    %45 = tpu.matmul %43, %44, %cst_30 {dimension_numbers = #tpu.dot_dimension_numbers<[1], [1], [0], [0], [0, 0, 1, 0], [], []>} : vector<16x8xf32>, vector<16x8xf32>, vector<16x16xf32> -> vector<16x16xf32>
    %46 = arith.addf %45, %7 : vector<16x16xf32>
    %cst_31 = arith.constant dense<0xFF800000> : vector<16xf32>
    %47 = vector.multi_reduction <maximumf>, %46, %cst_31 [1] : vector<16x16xf32> to vector<16xf32>
    %48 = vector.shape_cast %47 : vector<16xf32> to vector<16x1xf32>
    %49 = vector.broadcast %48 : vector<16x1xf32> to vector<16x16xf32>
    %50 = arith.subf %46, %49 : vector<16x16xf32>
    %51 = math.exp %50 : vector<16x16xf32>
    %cst_32 = arith.constant dense<0.000000e+00> : vector<16xf32>
    %52 = vector.multi_reduction <add>, %51, %cst_32 [1] : vector<16x16xf32> to vector<16xf32>
    %53 = vector.shape_cast %52 : vector<16xf32> to vector<16x1xf32>
    %54 = tpu.reciprocal %53 {approx = true} : vector<16x1xf32> -> vector<16x1xf32>
    %55 = vector.broadcast %54 : vector<16x1xf32> to vector<16x16xf32>
    %56 = arith.mulf %51, %55 : vector<16x16xf32>
    %57 = vector.extract_strided_slice %25 {offsets = [0, 8], sizes = [16, 8], strides = [1, 1]} : vector<16x32xf32> to vector<16x8xf32>
    %cst_33 = arith.constant dense<0.000000e+00> : vector<16x8xf32>
    %58 = tpu.matmul %56, %57, %cst_33 {dimension_numbers = #tpu.dot_dimension_numbers<[1], [0], [0], [1], [0, 0, 1, 1], [], []>} : vector<16x16xf32>, vector<16x8xf32>, vector<16x8xf32> -> vector<16x8xf32>
    %c0_34 = arith.constant 0 : index
    %c8 = arith.constant 8 : index
    %59 = vector.load %arg15[%c0_34, %c8] : memref<16x32xf32, #tpu.memory_space<vmem>>, vector<16x8xf32>
    tpu.vector_store %arg15[%c0_34, %c8], %58 {strides = array<i32>} : memref<16x32xf32, #tpu.memory_space<vmem>>, vector<16x8xf32>,
    %60 = vector.extract_strided_slice %23 {offsets = [0, 16], sizes = [16, 8], strides = [1, 1]} : vector<16x32xf32> to vector<16x8xf32>
    %61 = vector.extract_strided_slice %24 {offsets = [0, 16], sizes = [16, 8], strides = [1, 1]} : vector<16x32xf32> to vector<16x8xf32>
    %cst_35 = arith.constant dense<0.000000e+00> : vector<16x16xf32>
    %62 = tpu.matmul %60, %61, %cst_35 {dimension_numbers = #tpu.dot_dimension_numbers<[1], [1], [0], [0], [0, 0, 1, 0], [], []>} : vector<16x8xf32>, vector<16x8xf32>, vector<16x16xf32> -> vector<16x16xf32>
    %63 = arith.addf %62, %7 : vector<16x16xf32>
    %cst_36 = arith.constant dense<0xFF800000> : vector<16xf32>
    %64 = vector.multi_reduction <maximumf>, %63, %cst_36 [1] : vector<16x16xf32> to vector<16xf32>
    %65 = vector.shape_cast %64 : vector<16xf32> to vector<16x1xf32>
    %66 = vector.broadcast %65 : vector<16x1xf32> to vector<16x16xf32>
    %67 = arith.subf %63, %66 : vector<16x16xf32>
    %68 = math.exp %67 : vector<16x16xf32>
    %cst_37 = arith.constant dense<0.000000e+00> : vector<16xf32>
    %69 = vector.multi_reduction <add>, %68, %cst_37 [1] : vector<16x16xf32> to vector<16xf32>
    %70 = vector.shape_cast %69 : vector<16xf32> to vector<16x1xf32>
    %71 = tpu.reciprocal %70 {approx = true} : vector<16x1xf32> -> vector<16x1xf32>
    %72 = vector.broadcast %71 : vector<16x1xf32> to vector<16x16xf32>
    %73 = arith.mulf %68, %72 : vector<16x16xf32>
    %74 = vector.extract_strided_slice %25 {offsets = [0, 16], sizes = [16, 8], strides = [1, 1]} : vector<16x32xf32> to vector<16x8xf32>
    %cst_38 = arith.constant dense<0.000000e+00> : vector<16x8xf32>
    %75 = tpu.matmul %73, %74, %cst_38 {dimension_numbers = #tpu.dot_dimension_numbers<[1], [0], [0], [1], [0, 0, 1, 1], [], []>} : vector<16x16xf32>, vector<16x8xf32>, vector<16x8xf32> -> vector<16x8xf32>
    %c0_39 = arith.constant 0 : index
    %c16 = arith.constant 16 : index
    %76 = vector.load %arg15[%c0_39, %c16] : memref<16x32xf32, #tpu.memory_space<vmem>>, vector<16x8xf32>
    tpu.vector_store %arg15[%c0_39, %c16], %75 {strides = array<i32>} : memref<16x32xf32, #tpu.memory_space<vmem>>, vector<16x8xf32>,
    %77 = vector.extract_strided_slice %23 {offsets = [0, 24], sizes = [16, 8], strides = [1, 1]} : vector<16x32xf32> to vector<16x8xf32>
    %78 = vector.extract_strided_slice %24 {offsets = [0, 24], sizes = [16, 8], strides = [1, 1]} : vector<16x32xf32> to vector<16x8xf32>
    %cst_40 = arith.constant dense<0.000000e+00> : vector<16x16xf32>
    %79 = tpu.matmul %77, %78, %cst_40 {dimension_numbers = #tpu.dot_dimension_numbers<[1], [1], [0], [0], [0, 0, 1, 0], [], []>} : vector<16x8xf32>, vector<16x8xf32>, vector<16x16xf32> -> vector<16x16xf32>
    %80 = arith.addf %79, %7 : vector<16x16xf32>
    %cst_41 = arith.constant dense<0xFF800000> : vector<16xf32>
    %81 = vector.multi_reduction <maximumf>, %80, %cst_41 [1] : vector<16x16xf32> to vector<16xf32>
    %82 = vector.shape_cast %81 : vector<16xf32> to vector<16x1xf32>
    %83 = vector.broadcast %82 : vector<16x1xf32> to vector<16x16xf32>
    %84 = arith.subf %80, %83 : vector<16x16xf32>
    %85 = math.exp %84 : vector<16x16xf32>
    %cst_42 = arith.constant dense<0.000000e+00> : vector<16xf32>
    %86 = vector.multi_reduction <add>, %85, %cst_42 [1] : vector<16x16xf32> to vector<16xf32>
    %87 = vector.shape_cast %86 : vector<16xf32> to vector<16x1xf32>
    %88 = tpu.reciprocal %87 {approx = true} : vector<16x1xf32> -> vector<16x1xf32>
    %89 = vector.broadcast %88 : vector<16x1xf32> to vector<16x16xf32>
    %90 = arith.mulf %85, %89 : vector<16x16xf32>
    %91 = vector.extract_strided_slice %25 {offsets = [0, 24], sizes = [16, 8], strides = [1, 1]} : vector<16x32xf32> to vector<16x8xf32>
    %cst_43 = arith.constant dense<0.000000e+00> : vector<16x8xf32>
    %92 = tpu.matmul %90, %91, %cst_43 {dimension_numbers = #tpu.dot_dimension_numbers<[1], [0], [0], [1], [0, 0, 1, 1], [], []>} : vector<16x16xf32>, vector<16x8xf32>, vector<16x8xf32> -> vector<16x8xf32>
    %c0_44 = arith.constant 0 : index
    %c24 = arith.constant 24 : index
    %93 = vector.load %arg15[%c0_44, %c24] : memref<16x32xf32, #tpu.memory_space<vmem>>, vector<16x8xf32>
    tpu.vector_store %arg15[%c0_44, %c24], %92 {strides = array<i32>} : memref<16x32xf32, #tpu.memory_space<vmem>>, vector<16x8xf32>,
    %c0_45 = arith.constant 0 : index
    %c0_46 = arith.constant 0 : index
    %94 = vector.load %arg15[%c0_45, %c0_46] : memref<16x32xf32, #tpu.memory_space<vmem>>, vector<16x32xf32>
    %cst_47 = arith.constant dense<0.000000e+00> : vector<16x32xf32>
    %95 = tpu.matmul %94, %15, %cst_47 {dimension_numbers = #tpu.dot_dimension_numbers<[1], [0], [0], [1], [0, 0, 1, 1], [], []>} : vector<16x32xf32>, vector<32x32xf32>, vector<16x32xf32> -> vector<16x32xf32>
    %96 = vector.broadcast %17 : vector<1x32xf32> to vector<16x32xf32>
    %97 = arith.addf %95, %96 : vector<16x32xf32>
    %98 = arith.addf %2, %97 : vector<16x32xf32>
    %cst_48 = arith.constant dense<0.000000e+00> : vector<16xf32>
    %99 = vector.multi_reduction <add>, %98, %cst_48 [1] : vector<16x32xf32> to vector<16xf32>
    %100 = vector.shape_cast %99 : vector<16xf32> to vector<16x1xf32>
    %cst_49 = arith.constant dense<0.000000e+00> : vector<16x1xf32>
    %101 = tpu.matmul %3, %100, %cst_49 {dimension_numbers = #tpu.dot_dimension_numbers<[1], [0], [0], [1], [0, 0, 1, 1], [], []>} : vector<16x16xf32>, vector<16x1xf32>, vector<16x1xf32> -> vector<16x1xf32>
    %cst_50 = arith.constant 3.906250e-03 : f32
    %102 = vector.broadcast %cst_50 : f32 to vector<16x1xf32>
    %103 = arith.mulf %101, %102 : vector<16x1xf32>
    %104 = vector.broadcast %103 : vector<16x1xf32> to vector<16x32xf32>
    %105 = arith.subf %98, %104 : vector<16x32xf32>
    %106 = arith.mulf %105, %105 : vector<16x32xf32>
    %cst_51 = arith.constant dense<0.000000e+00> : vector<16xf32>
    %107 = vector.multi_reduction <add>, %106, %cst_51 [1] : vector<16x32xf32> to vector<16xf32>
    %108 = vector.shape_cast %107 : vector<16xf32> to vector<16x1xf32>
    %cst_52 = arith.constant dense<0.000000e+00> : vector<16x1xf32>
    %109 = tpu.matmul %3, %108, %cst_52 {dimension_numbers = #tpu.dot_dimension_numbers<[1], [0], [0], [1], [0, 0, 1, 1], [], []>} : vector<16x16xf32>, vector<16x1xf32>, vector<16x1xf32> -> vector<16x1xf32>
    %cst_53 = arith.constant 3.906250e-03 : f32
    %110 = vector.broadcast %cst_53 : f32 to vector<16x1xf32>
    %111 = arith.mulf %109, %110 : vector<16x1xf32>
    %cst_54 = arith.constant 9.99999974E-6 : f32
    %112 = vector.broadcast %cst_54 : f32 to vector<16x1xf32>
    %113 = arith.addf %111, %112 : vector<16x1xf32>
    %114 = math.rsqrt %113 : vector<16x1xf32>
    %115 = vector.broadcast %114 : vector<16x1xf32> to vector<16x32xf32>
    %116 = arith.mulf %105, %115 : vector<16x32xf32>
    %117 = arith.mulf %116, %8 : vector<16x32xf32>
    %118 = arith.addf %117, %9 : vector<16x32xf32>
    %c0_55 = arith.constant 0 : index
    %c0_56 = arith.constant 0 : index
    %119 = vector.load %arg10[%c0_55, %c0_56] : memref<256x128xf32, #tpu.memory_space<vmem>>, vector<256x128xf32>
    %c0_57 = arith.constant 0 : index
    %c0_58 = arith.constant 0 : index
    %120 = vector.load %arg11[%c0_57, %c0_58] : memref<1x128xf32, #tpu.memory_space<vmem>>, vector<1x128xf32>
    %c0_59 = arith.constant 0 : index
    %c0_60 = arith.constant 0 : index
    %121 = vector.load %arg12[%c0_59, %c0_60] : memref<128x2xf32, #tpu.memory_space<vmem>>, vector<128x2xf32>
    %c0_61 = arith.constant 0 : index
    %c0_62 = arith.constant 0 : index
    %122 = vector.load %arg13[%c0_61, %c0_62] : memref<1x2xf32, #tpu.memory_space<vmem>>, vector<1x2xf32>
    %123 = vector.extract_strided_slice %119 {offsets = [0, 0], sizes = [32, 128], strides = [1, 1]} : vector<256x128xf32> to vector<32x128xf32>
    %124 = vector.extract_strided_slice %119 {offsets = [32, 0], sizes = [32, 128], strides = [1, 1]} : vector<256x128xf32> to vector<32x128xf32>
    %125 = vector.extract_strided_slice %119 {offsets = [64, 0], sizes = [32, 128], strides = [1, 1]} : vector<256x128xf32> to vector<32x128xf32>
    %126 = vector.extract_strided_slice %119 {offsets = [96, 0], sizes = [32, 128], strides = [1, 1]} : vector<256x128xf32> to vector<32x128xf32>
    %127 = vector.extract_strided_slice %119 {offsets = [128, 0], sizes = [32, 128], strides = [1, 1]} : vector<256x128xf32> to vector<32x128xf32>
    %128 = vector.extract_strided_slice %119 {offsets = [160, 0], sizes = [32, 128], strides = [1, 1]} : vector<256x128xf32> to vector<32x128xf32>
    %129 = vector.extract_strided_slice %119 {offsets = [192, 0], sizes = [32, 128], strides = [1, 1]} : vector<256x128xf32> to vector<32x128xf32>
    %130 = vector.extract_strided_slice %119 {offsets = [224, 0], sizes = [32, 128], strides = [1, 1]} : vector<256x128xf32> to vector<32x128xf32>
    %131 = vector.extract_strided_slice %118 {offsets = [0, 0], sizes = [1, 32], strides = [1, 1]} : vector<16x32xf32> to vector<1x32xf32>
    %cst_63 = arith.constant dense<0.000000e+00> : vector<1x128xf32>
    %132 = tpu.matmul %131, %123, %cst_63 {dimension_numbers = #tpu.dot_dimension_numbers<[1], [0], [0], [1], [0, 0, 1, 1], [], []>} : vector<1x32xf32>, vector<32x128xf32>, vector<1x128xf32> -> vector<1x128xf32>
    %133 = arith.addf %120, %132 : vector<1x128xf32>
    %134 = vector.extract_strided_slice %118 {offsets = [1, 0], sizes = [1, 32], strides = [1, 1]} : vector<16x32xf32> to vector<1x32xf32>
    %cst_64 = arith.constant dense<0.000000e+00> : vector<1x128xf32>
    %135 = tpu.matmul %134, %124, %cst_64 {dimension_numbers = #tpu.dot_dimension_numbers<[1], [0], [0], [1], [0, 0, 1, 1], [], []>} : vector<1x32xf32>, vector<32x128xf32>, vector<1x128xf32> -> vector<1x128xf32>
    %136 = arith.addf %133, %135 : vector<1x128xf32>
    %137 = vector.extract_strided_slice %118 {offsets = [2, 0], sizes = [1, 32], strides = [1, 1]} : vector<16x32xf32> to vector<1x32xf32>
    %cst_65 = arith.constant dense<0.000000e+00> : vector<1x128xf32>
    %138 = tpu.matmul %137, %125, %cst_65 {dimension_numbers = #tpu.dot_dimension_numbers<[1], [0], [0], [1], [0, 0, 1, 1], [], []>} : vector<1x32xf32>, vector<32x128xf32>, vector<1x128xf32> -> vector<1x128xf32>
    %139 = arith.addf %136, %138 : vector<1x128xf32>
    %140 = vector.extract_strided_slice %118 {offsets = [3, 0], sizes = [1, 32], strides = [1, 1]} : vector<16x32xf32> to vector<1x32xf32>
    %cst_66 = arith.constant dense<0.000000e+00> : vector<1x128xf32>
    %141 = tpu.matmul %140, %126, %cst_66 {dimension_numbers = #tpu.dot_dimension_numbers<[1], [0], [0], [1], [0, 0, 1, 1], [], []>} : vector<1x32xf32>, vector<32x128xf32>, vector<1x128xf32> -> vector<1x128xf32>
    %142 = arith.addf %139, %141 : vector<1x128xf32>
    %143 = vector.extract_strided_slice %118 {offsets = [4, 0], sizes = [1, 32], strides = [1, 1]} : vector<16x32xf32> to vector<1x32xf32>
    %cst_67 = arith.constant dense<0.000000e+00> : vector<1x128xf32>
    %144 = tpu.matmul %143, %127, %cst_67 {dimension_numbers = #tpu.dot_dimension_numbers<[1], [0], [0], [1], [0, 0, 1, 1], [], []>} : vector<1x32xf32>, vector<32x128xf32>, vector<1x128xf32> -> vector<1x128xf32>
    %145 = arith.addf %142, %144 : vector<1x128xf32>
    %146 = vector.extract_strided_slice %118 {offsets = [5, 0], sizes = [1, 32], strides = [1, 1]} : vector<16x32xf32> to vector<1x32xf32>
    %cst_68 = arith.constant dense<0.000000e+00> : vector<1x128xf32>
    %147 = tpu.matmul %146, %128, %cst_68 {dimension_numbers = #tpu.dot_dimension_numbers<[1], [0], [0], [1], [0, 0, 1, 1], [], []>} : vector<1x32xf32>, vector<32x128xf32>, vector<1x128xf32> -> vector<1x128xf32>
    %148 = arith.addf %145, %147 : vector<1x128xf32>
    %149 = vector.extract_strided_slice %118 {offsets = [6, 0], sizes = [1, 32], strides = [1, 1]} : vector<16x32xf32> to vector<1x32xf32>
    %cst_69 = arith.constant dense<0.000000e+00> : vector<1x128xf32>
    %150 = tpu.matmul %149, %129, %cst_69 {dimension_numbers = #tpu.dot_dimension_numbers<[1], [0], [0], [1], [0, 0, 1, 1], [], []>} : vector<1x32xf32>, vector<32x128xf32>, vector<1x128xf32> -> vector<1x128xf32>
    %151 = arith.addf %148, %150 : vector<1x128xf32>
    %152 = vector.extract_strided_slice %118 {offsets = [7, 0], sizes = [1, 32], strides = [1, 1]} : vector<16x32xf32> to vector<1x32xf32>
    %cst_70 = arith.constant dense<0.000000e+00> : vector<1x128xf32>
    %153 = tpu.matmul %152, %130, %cst_70 {dimension_numbers = #tpu.dot_dimension_numbers<[1], [0], [0], [1], [0, 0, 1, 1], [], []>} : vector<1x32xf32>, vector<32x128xf32>, vector<1x128xf32> -> vector<1x128xf32>
    %154 = arith.addf %151, %153 : vector<1x128xf32>
    %cst_71 = arith.constant 0.000000e+00 : f32
    %155 = vector.broadcast %cst_71 : f32 to vector<1x128xf32>
    %156 = arith.maximumf %154, %155 : vector<1x128xf32>
    %cst_72 = arith.constant dense<0.000000e+00> : vector<1x2xf32>
    %157 = tpu.matmul %156, %121, %cst_72 {dimension_numbers = #tpu.dot_dimension_numbers<[1], [0], [0], [1], [0, 0, 1, 1], [], []>} : vector<1x128xf32>, vector<128x2xf32>, vector<1x2xf32> -> vector<1x2xf32>
    %158 = arith.addf %157, %122 : vector<1x2xf32>
    %c0_73 = arith.constant 0 : index
    %c0_74 = arith.constant 0 : index
    %159 = vector.load %arg14[%c0_73, %c0_74] : memref<2x2xf32, #tpu.memory_space<vmem>>, vector<1x2xf32>
    tpu.vector_store %arg14[%c0_73, %c0_74], %158 {strides = array<i32>} : memref<2x2xf32, #tpu.memory_space<vmem>>, vector<1x2xf32>,
    %160 = vector.extract_strided_slice %118 {offsets = [8, 0], sizes = [1, 32], strides = [1, 1]} : vector<16x32xf32> to vector<1x32xf32>
    %cst_75 = arith.constant dense<0.000000e+00> : vector<1x128xf32>
    %161 = tpu.matmul %160, %123, %cst_75 {dimension_numbers = #tpu.dot_dimension_numbers<[1], [0], [0], [1], [0, 0, 1, 1], [], []>} : vector<1x32xf32>, vector<32x128xf32>, vector<1x128xf32> -> vector<1x128xf32>
    %162 = arith.addf %120, %161 : vector<1x128xf32>
    %163 = vector.extract_strided_slice %118 {offsets = [9, 0], sizes = [1, 32], strides = [1, 1]} : vector<16x32xf32> to vector<1x32xf32>
    %cst_76 = arith.constant dense<0.000000e+00> : vector<1x128xf32>
    %164 = tpu.matmul %163, %124, %cst_76 {dimension_numbers = #tpu.dot_dimension_numbers<[1], [0], [0], [1], [0, 0, 1, 1], [], []>} : vector<1x32xf32>, vector<32x128xf32>, vector<1x128xf32> -> vector<1x128xf32>
    %165 = arith.addf %162, %164 : vector<1x128xf32>
    %166 = vector.extract_strided_slice %118 {offsets = [10, 0], sizes = [1, 32], strides = [1, 1]} : vector<16x32xf32> to vector<1x32xf32>
    %cst_77 = arith.constant dense<0.000000e+00> : vector<1x128xf32>
    %167 = tpu.matmul %166, %125, %cst_77 {dimension_numbers = #tpu.dot_dimension_numbers<[1], [0], [0], [1], [0, 0, 1, 1], [], []>} : vector<1x32xf32>, vector<32x128xf32>, vector<1x128xf32> -> vector<1x128xf32>
    %168 = arith.addf %165, %167 : vector<1x128xf32>
    %169 = vector.extract_strided_slice %118 {offsets = [11, 0], sizes = [1, 32], strides = [1, 1]} : vector<16x32xf32> to vector<1x32xf32>
    %cst_78 = arith.constant dense<0.000000e+00> : vector<1x128xf32>
    %170 = tpu.matmul %169, %126, %cst_78 {dimension_numbers = #tpu.dot_dimension_numbers<[1], [0], [0], [1], [0, 0, 1, 1], [], []>} : vector<1x32xf32>, vector<32x128xf32>, vector<1x128xf32> -> vector<1x128xf32>
    %171 = arith.addf %168, %170 : vector<1x128xf32>
    %172 = vector.extract_strided_slice %118 {offsets = [12, 0], sizes = [1, 32], strides = [1, 1]} : vector<16x32xf32> to vector<1x32xf32>
    %cst_79 = arith.constant dense<0.000000e+00> : vector<1x128xf32>
    %173 = tpu.matmul %172, %127, %cst_79 {dimension_numbers = #tpu.dot_dimension_numbers<[1], [0], [0], [1], [0, 0, 1, 1], [], []>} : vector<1x32xf32>, vector<32x128xf32>, vector<1x128xf32> -> vector<1x128xf32>
    %174 = arith.addf %171, %173 : vector<1x128xf32>
    %175 = vector.extract_strided_slice %118 {offsets = [13, 0], sizes = [1, 32], strides = [1, 1]} : vector<16x32xf32> to vector<1x32xf32>
    %cst_80 = arith.constant dense<0.000000e+00> : vector<1x128xf32>
    %176 = tpu.matmul %175, %128, %cst_80 {dimension_numbers = #tpu.dot_dimension_numbers<[1], [0], [0], [1], [0, 0, 1, 1], [], []>} : vector<1x32xf32>, vector<32x128xf32>, vector<1x128xf32> -> vector<1x128xf32>
    %177 = arith.addf %174, %176 : vector<1x128xf32>
    %178 = vector.extract_strided_slice %118 {offsets = [14, 0], sizes = [1, 32], strides = [1, 1]} : vector<16x32xf32> to vector<1x32xf32>
    %cst_81 = arith.constant dense<0.000000e+00> : vector<1x128xf32>
    %179 = tpu.matmul %178, %129, %cst_81 {dimension_numbers = #tpu.dot_dimension_numbers<[1], [0], [0], [1], [0, 0, 1, 1], [], []>} : vector<1x32xf32>, vector<32x128xf32>, vector<1x128xf32> -> vector<1x128xf32>
    %180 = arith.addf %177, %179 : vector<1x128xf32>
    %181 = vector.extract_strided_slice %118 {offsets = [15, 0], sizes = [1, 32], strides = [1, 1]} : vector<16x32xf32> to vector<1x32xf32>
    %cst_82 = arith.constant dense<0.000000e+00> : vector<1x128xf32>
    %182 = tpu.matmul %181, %130, %cst_82 {dimension_numbers = #tpu.dot_dimension_numbers<[1], [0], [0], [1], [0, 0, 1, 1], [], []>} : vector<1x32xf32>, vector<32x128xf32>, vector<1x128xf32> -> vector<1x128xf32>
    %183 = arith.addf %180, %182 : vector<1x128xf32>
    %cst_83 = arith.constant 0.000000e+00 : f32
    %184 = vector.broadcast %cst_83 : f32 to vector<1x128xf32>
    %185 = arith.maximumf %183, %184 : vector<1x128xf32>
    %cst_84 = arith.constant dense<0.000000e+00> : vector<1x2xf32>
    %186 = tpu.matmul %185, %121, %cst_84 {dimension_numbers = #tpu.dot_dimension_numbers<[1], [0], [0], [1], [0, 0, 1, 1], [], []>} : vector<1x128xf32>, vector<128x2xf32>, vector<1x2xf32> -> vector<1x2xf32>
    %187 = arith.addf %186, %122 : vector<1x2xf32>
    %c1 = arith.constant 1 : index
    %c0_85 = arith.constant 0 : index
    %188 = vector.load %arg14[%c1, %c0_85] : memref<2x2xf32, #tpu.memory_space<vmem>>, vector<1x2xf32>
    tpu.vector_store %arg14[%c1, %c0_85], %187 {strides = array<i32>} : memref<2x2xf32, #tpu.memory_space<vmem>>, vector<1x2xf32>,
    return
  }
  func.func @transform_0(%arg0: i32) -> (i32, i32) {
    %c0_i32 = arith.constant 0 : i32
    %c0_i32_0 = arith.constant 0 : i32
    %c0_i32_1 = arith.constant 0 : i32
    return %c0_i32, %c0_i32_0 : i32, i32
  }
  func.func @transform_1(%arg0: i32) -> (i32, i32) {
    %c0_i32 = arith.constant 0 : i32
    %c0_i32_0 = arith.constant 0 : i32
    %c0_i32_1 = arith.constant 0 : i32
    return %c0_i32, %c0_i32_0 : i32, i32
  }
  func.func @transform_2(%arg0: i32) -> (i32, i32) {
    %c0_i32 = arith.constant 0 : i32
    %c0_i32_0 = arith.constant 0 : i32
    %c0_i32_1 = arith.constant 0 : i32
    return %c0_i32, %c0_i32_0 : i32, i32
  }
  func.func @transform_3(%arg0: i32) -> (i32, i32, i32) {
    %c0_i32 = arith.constant 0 : i32
    %c0_i32_0 = arith.constant 0 : i32
    %c0_i32_1 = arith.constant 0 : i32
    %c0_i32_2 = arith.constant 0 : i32
    return %c0_i32, %c0_i32_0, %c0_i32_1 : i32, i32, i32
  }
  func.func @transform_4(%arg0: i32) -> (i32, i32, i32) {
    %c0_i32 = arith.constant 0 : i32
    %c0_i32_0 = arith.constant 0 : i32
    %c0_i32_1 = arith.constant 0 : i32
    %c0_i32_2 = arith.constant 0 : i32
    return %c0_i32, %c0_i32_0, %c0_i32_1 : i32, i32, i32
  }
  func.func @transform_5(%arg0: i32) -> (i32, i32, i32) {
    %c0_i32 = arith.constant 0 : i32
    %c0_i32_0 = arith.constant 0 : i32
    %c0_i32_1 = arith.constant 0 : i32
    %c0_i32_2 = arith.constant 0 : i32
    return %c0_i32, %c0_i32_0, %c0_i32_1 : i32, i32, i32
  }
  func.func @transform_6(%arg0: i32) -> (i32, i32, i32) {
    %c0_i32 = arith.constant 0 : i32
    %c0_i32_0 = arith.constant 0 : i32
    %c0_i32_1 = arith.constant 0 : i32
    %c0_i32_2 = arith.constant 0 : i32
    return %c0_i32, %c0_i32_0, %c0_i32_1 : i32, i32, i32
  }
  func.func @transform_7(%arg0: i32) -> (i32, i32) {
    %c0_i32 = arith.constant 0 : i32
    %c0_i32_0 = arith.constant 0 : i32
    %c0_i32_1 = arith.constant 0 : i32
    return %c0_i32, %c0_i32_0 : i32, i32
  }
  func.func @transform_8(%arg0: i32) -> (i32, i32) {
    %c0_i32 = arith.constant 0 : i32
    %c0_i32_0 = arith.constant 0 : i32
    %c0_i32_1 = arith.constant 0 : i32
    return %c0_i32, %c0_i32_0 : i32, i32
  }
  func.func @transform_9(%arg0: i32) -> (i32, i32) {
    %c0_i32 = arith.constant 0 : i32
    %c0_i32_0 = arith.constant 0 : i32
    %c0_i32_1 = arith.constant 0 : i32
    return %c0_i32, %c0_i32_0 : i32, i32
  }
  func.func @transform_10(%arg0: i32) -> (i32, i32) {
    %c0_i32 = arith.constant 0 : i32
    %c0_i32_0 = arith.constant 0 : i32
    %c0_i32_1 = arith.constant 0 : i32
    return %c0_i32, %c0_i32_0 : i32, i32
  }
  func.func @transform_11(%arg0: i32) -> (i32, i32) {
    %c0_i32 = arith.constant 0 : i32
    %c0_i32_0 = arith.constant 0 : i32
    %c0_i32_1 = arith.constant 0 : i32
    return %c0_i32, %c0_i32_0 : i32, i32
  }
  func.func @transform_12(%arg0: i32) -> (i32, i32) {
    %c0_i32 = arith.constant 0 : i32
    %c0_i32_0 = arith.constant 0 : i32
    %c0_i32_1 = arith.constant 0 : i32
    return %c0_i32, %c0_i32_0 : i32, i32
  }
  func.func @transform_13(%arg0: i32) -> (i32, i32) {
    %c0_i32 = arith.constant 0 : i32
    %c0_i32_0 = arith.constant 0 : i32
    %c0_i32_1 = arith.constant 0 : i32
    return %c0_i32, %c0_i32_0 : i32, i32
  }
}

</mosaic_0001>

<llo_original>
// kernel: tpu_custom_call.1
$region0: #{tpu_custom_call.1}
  #allocation0 [shape = 'u32[]', space=smem, size = 0x4, offset = 0x4, fixed_abs, tag = 'smem constant byte address 0x4 - core index']
  #allocation1 [shape = 'u32[144,128]{1,0:T(1,128)}', space=vmem, size = 0x12000, scoped, tag = 'internal scratch']
  #allocation2 [shape = 'f32[16,32]{1,0:T(8,128)}', space=vmem, size = 0x2000, scoped, tag = 'scratch operand']
  %s0 = inlined_call_operand.vmem [shape: f32[16,32], index: 0, kind: input, shape index: {}]
  %s1 = inlined_call_operand.vmem [shape: f32[16,32], index: 1, kind: input, shape index: {}]
  %s2 = inlined_call_operand.vmem [shape: f32[16,16], index: 2, kind: input, shape index: {}]
  %s3 = inlined_call_operand.vmem [shape: f32[1,32,96], index: 3, kind: input, shape index: {}]
  %s4 = inlined_call_operand.hbm [shape: f32[1,1,96], index: 4, kind: input, shape index: {}]
  %s5 = inlined_call_operand.vmem [shape: f32[1,32,32], index: 5, kind: input, shape index: {}]
  %s6 = inlined_call_operand.hbm [shape: f32[1,1,32], index: 6, kind: input, shape index: {}]
  %s7 = inlined_call_operand.vmem [shape: f32[16,32], index: 7, kind: input, shape index: {}]
  %s8 = inlined_call_operand.vmem [shape: f32[16,32], index: 8, kind: input, shape index: {}]
  %s9 = inlined_call_operand.hbm [shape: f32[256,128], index: 9, kind: input, shape index: {}]
  %s10 = inlined_call_operand.vmem [shape: f32[1,128], index: 10, kind: input, shape index: {}]
  %s11 = inlined_call_operand.vmem [shape: f32[128,2], index: 11, kind: input, shape index: {}]
  %s12 = inlined_call_operand.vmem [shape: f32[1,2], index: 12, kind: input, shape index: {}]
  %s13 = inlined_call_operand.hbm [shape: f32[2,2], index: 13, kind: output, shape index: {}]
  %s14 = sld [smem:[#allocation0]]
  $region74: #{tpu_custom_call.1} parent=0
    _
  %s16 = ssub.s32 1, %s14
  %s17 = scalar_select 0, %s16, %s14
  $region1: #{tpu_custom_call.1} parent=0
    #allocation3 [shape = 'u8[512]{0}', space=vmem, size = 0x400, scoped, tag = 'input window, operand 4, single buffered']
    #allocation4 [shape = 's32[1]{0}', space=sflag, size = 0x4, scoped, tag = 'scoped memory for tpu_custom_call.1']
    #allocation5 [shape = 's32[1]{0}', space=sflag, size = 0x4, scoped, tag = 'scoped memory for tpu_custom_call.1']
    #allocation6 [shape = 'u8[512]{0}', space=vmem, size = 0x400, scoped, tag = 'input window, operand 6, single buffered']
    #allocation7 [shape = 's32[1]{0}', space=sflag, size = 0x4, scoped, tag = 'scoped memory for tpu_custom_call.1']
    #allocation8 [shape = 'u8[131072]{0}', space=vmem, size = 0x20000, scoped, tag = 'input window, operand 9, single buffered']
    #allocation9 [shape = 'u8[1024]{0}', space=vmem, size = 0x400, scoped, tag = 'output window, operand 0, single buffered']
    %18 = vsyncpa [#allocation4], 0
    %19 = vsyncpa [#allocation7], 0
    %20 = vsyncpa [#allocation5], 0
    // Predicated region
    $region2: #{tpu_custom_call.1} parent=1 // pred_check
      _
    $region3: #{tpu_custom_call.1} parent=1 // pred_check_branch
      %22 = sbr.rel (0) target = $region5
    $region4: #{tpu_custom_call.1} parent=1 // pred_region
      _
    $region5: #{tpu_custom_call.1} parent=1 // pred_fallthru
      _
    // Predicated region
    $region6: #{tpu_custom_call.1} parent=1 // pred_check
      _
    $region7: #{tpu_custom_call.1} parent=1 // pred_check_branch
      %24 = sbr.rel (0) target = $region9
    $region8: #{tpu_custom_call.1} parent=1 // pred_region
      _
    $region9: #{tpu_custom_call.1} parent=1 // pred_fallthru
      _
    // Predicated region
    $region10: #{tpu_custom_call.1} parent=1 // pred_check
      _
    $region11: #{tpu_custom_call.1} parent=1 // pred_check_branch
      %26 = sbr.rel (0) target = $region13
    $region12: #{tpu_custom_call.1} parent=1 // pred_region
      _
    $region13: #{tpu_custom_call.1} parent=1 // pred_fallthru
      _
    // Predicated region
    $region14: #{tpu_custom_call.1} parent=1 // pred_check
      _
    $region15: #{tpu_custom_call.1} parent=1 // pred_check_branch
      %28 = sbr.rel (0) target = $region17
    $region16: #{tpu_custom_call.1} parent=1 // pred_region
      _
    $region17: #{tpu_custom_call.1} parent=1 // pred_fallthru
      _
    // Predicated region
    $region18: #{tpu_custom_call.1} parent=1 // pred_check
      _
    $region19: #{tpu_custom_call.1} parent=1 // pred_check_branch
      %30 = sbr.rel (0) target = $region21
    $region20: #{tpu_custom_call.1} parent=1 // pred_region
      %s32 = ssub.s32 16, 16
      %33 = vsyncadd [#allocation4], %s32
      %s35 = sshll.u32 [#allocation3], 4
      %s36 = int_to_ptr.vmem [resolvable:$true] %s35
      %38 = dma.hbm_to_vmem [thread:$0]  %s4, 16, %s36, [#allocation4]
    $region21: #{tpu_custom_call.1} parent=1 // pred_fallthru
      _
    // Predicated region
    $region22: #{tpu_custom_call.1} parent=1 // pred_check
      _
    $region23: #{tpu_custom_call.1} parent=1 // pred_check_branch
      %40 = sbr.rel (0) target = $region25
    $region24: #{tpu_custom_call.1} parent=1 // pred_region
      _
    $region25: #{tpu_custom_call.1} parent=1 // pred_fallthru
      _
    // Predicated region
    $region26: #{tpu_custom_call.1} parent=1 // pred_check
      _
    $region27: #{tpu_custom_call.1} parent=1 // pred_check_branch
      %42 = sbr.rel (0) target = $region29
    $region28: #{tpu_custom_call.1} parent=1 // pred_region
      %s44 = ssub.s32 16, 16
      %45 = vsyncadd [#allocation7], %s44
      %s47 = sshll.u32 [#allocation6], 4
      %s48 = int_to_ptr.vmem [resolvable:$true] %s47
      %50 = dma.hbm_to_vmem [thread:$0]  %s6, 16, %s48, [#allocation7]
    $region29: #{tpu_custom_call.1} parent=1 // pred_fallthru
      _
    // Predicated region
    $region30: #{tpu_custom_call.1} parent=1 // pred_check
      _
    $region31: #{tpu_custom_call.1} parent=1 // pred_check_branch
      %52 = sbr.rel (0) target = $region33
    $region32: #{tpu_custom_call.1} parent=1 // pred_region
      _
    $region33: #{tpu_custom_call.1} parent=1 // pred_fallthru
      _
    // Predicated region
    $region34: #{tpu_custom_call.1} parent=1 // pred_check
      _
    $region35: #{tpu_custom_call.1} parent=1 // pred_check_branch
      %54 = sbr.rel (0) target = $region37
    $region36: #{tpu_custom_call.1} parent=1 // pred_region
      _
    $region37: #{tpu_custom_call.1} parent=1 // pred_fallthru
      _
    // Predicated region
    $region38: #{tpu_custom_call.1} parent=1 // pred_check
      _
    $region39: #{tpu_custom_call.1} parent=1 // pred_check_branch
      %56 = sbr.rel (0) target = $region41
    $region40: #{tpu_custom_call.1} parent=1 // pred_region
      %s58 = ssub.s32 4096, 4096
      %59 = vsyncadd [#allocation7], %s58
      %s60 = sshll.u32 [#allocation8], 4
      %s61 = int_to_ptr.vmem [resolvable:$true] %s60
      %66 = dma.hbm_to_vmem [thread:$0]  %s9, 4096, %s61, [#allocation7], 128, 128, 8
    $region41: #{tpu_custom_call.1} parent=1 // pred_fallthru
      _
    // Predicated region
    $region42: #{tpu_custom_call.1} parent=1 // pred_check
      _
    $region43: #{tpu_custom_call.1} parent=1 // pred_check_branch
      %68 = sbr.rel (0) target = $region45
    $region44: #{tpu_custom_call.1} parent=1 // pred_region
      _
    $region45: #{tpu_custom_call.1} parent=1 // pred_fallthru
      _
    // Predicated region
    $region46: #{tpu_custom_call.1} parent=1 // pred_check
      _
    $region47: #{tpu_custom_call.1} parent=1 // pred_check_branch
      %70 = sbr.rel (0) target = $region49
    $region48: #{tpu_custom_call.1} parent=1 // pred_region
      _
    $region49: #{tpu_custom_call.1} parent=1 // pred_fallthru
      _
    // Predicated region
    $region50: #{tpu_custom_call.1} parent=1 // pred_check
      _
    $region51: #{tpu_custom_call.1} parent=1 // pred_check_branch
      %72 = sbr.rel (0) target = $region53
    $region52: #{tpu_custom_call.1} parent=1 // pred_region
      _
    $region53: #{tpu_custom_call.1} parent=1 // pred_fallthru
      _
    // Predicated region
    $region54: #{tpu_custom_call.1} parent=1 // pred_check
      _
    $region55: #{tpu_custom_call.1} parent=1 // pred_check_branch
      %74 = sbr.rel (0) target = $region57
    $region56: #{tpu_custom_call.1} parent=1 // pred_region
      %75 = dma.done [#allocation4], 16
    $region57: #{tpu_custom_call.1} parent=1 // pred_fallthru
      _
    // Predicated region
    $region58: #{tpu_custom_call.1} parent=1 // pred_check
      _
    $region59: #{tpu_custom_call.1} parent=1 // pred_check_branch
      %77 = sbr.rel (0) target = $region61
    $region60: #{tpu_custom_call.1} parent=1 // pred_region
      %78 = dma.done [#allocation7], 16
    $region61: #{tpu_custom_call.1} parent=1 // pred_fallthru
      _
    // Predicated region
    $region62: #{tpu_custom_call.1} parent=1 // pred_check
      _
    $region63: #{tpu_custom_call.1} parent=1 // pred_check_branch
      %80 = sbr.rel (0) target = $region65
    $region64: #{tpu_custom_call.1} parent=1 // pred_region
      %81 = dma.done [#allocation7], 4096
    $region65: #{tpu_custom_call.1} parent=1 // pred_fallthru
      _
    %v82 = vld [vmem:[%s0] sm:$0xff]
    %v83 = vld [vmem:[%s0 + $0x8] sm:$0xff]
    %v84 = vld [vmem:[%s1] sm:$0xff]
    %v85 = vld [vmem:[%s1 + $0x8] sm:$0xff]
    %v86 = vadd.f32 %v82, %v84
    %v87 = vadd.f32 %v83, %v85
    %v88 = vld [vmem:[%s2] sm:$0xff]
    %v89 = vld [vmem:[%s2 + $0x8] sm:$0xff]
    %v90 = vsub.f32 %v88, 1.0
    %v91 = vsub.f32 %v89, 1.0
    %v92 = vmul.f32 %v90, 1e+30
    %v93 = vmul.f32 %v91, 1e+30
    %v94 = vld [vmem:[%s7] sm:$0xff]
    %v95 = vld [vmem:[%s7 + $0x8] sm:$0xff]
    %v96 = vld [vmem:[%s8] sm:$0xff]
    %v97 = vld [vmem:[%s8 + $0x8] sm:$0xff]
    %v98 = vld [vmem:[%s3] sm:$0xff]
    %v99 = vld [vmem:[%s3 + $0x8] sm:$0xff]
    %v100 = vld [vmem:[%s3 + $0x10] sm:$0xff]
    %v101 = vld [vmem:[%s3 + $0x18] sm:$0xff]
    %v102 = vld [vmem:[#allocation3] sm:$0x1]
    %v103 = vld [vmem:[%s5] sm:$0xff]
    %v104 = vld [vmem:[%s5 + $0x8] sm:$0xff]
    %v105 = vld [vmem:[%s5 + $0x10] sm:$0xff]
    %v106 = vld [vmem:[%s5 + $0x18] sm:$0xff]
    %v107 = vld [vmem:[#allocation6] sm:$0x1]
    %v109 = vlaneseq
    %v110 = vshrl.u32 %v109, 7
    %v111 = vsub.s32 0, %v110
    %v112 = vrot.slane %v102, %v111
    %vm114 = vcmask 261120
    %v116 = vsel %vm114, %v86, 0
    %v119 = vsel %vm114, %v87, 0
    %121 = vmatprep.subr.mxu0 0.0
    %122 = vmatpush1.msra.mxu0 0.0
    %123 = vmatprep.subr.mxu0 0.0
    %124 = vmatpush1.msra.mxu0 0.0
    %125 = vmatprep.subr.mxu0 0.0
    %126 = vmatpush1.msra.mxu0 0.0
    %127 = vmatprep.subr.mxu0 0.0
    %128 = vmatpush1.msra.mxu0 0.0
    %129 = vmatprep.subr.mxu0 0.0
    %130 = vmatpush1.msra.mxu0 0.0
    %131 = vmatprep.subr.mxu0 0.0
    %132 = vmatpush1.msra.mxu0 0.0
    %133 = vmatprep.subr.mxu0 0.0
    %134 = vmatpush1.msra.mxu0 0.0
    %135 = vmatprep.subr.mxu0 0.0
    %136 = vmatpush1.msra.mxu0 0.0
    %137 = vmatprep.subr.mxu0 0.0
    %138 = vmatpush1.msra.mxu0 0.0
    %139 = vmatprep.subr.mxu0 0.0
    %140 = vmatpush1.msra.mxu0 0.0
    %141 = vmatprep.subr.mxu0 0.0
    %142 = vmatpush1.msra.mxu0 0.0
    %143 = vmatprep.subr.mxu0 0.0
    %144 = vmatpush1.msra.mxu0 0.0
    %145 = vmatprep.subr.mxu0 0.0
    %146 = vmatpush1.msra.mxu0 %v101
    %147 = vmatprep.subr.mxu0 0.0
    %148 = vmatpush1.msra.mxu0 %v100
    %149 = vmatprep.subr.mxu0 0.0
    %150 = vmatpush1.msra.mxu0 %v99
    %151 = vmatprep.subr.mxu0 0.0
    %152 = vmatpush1.msra.mxu0 %v98
    %153 = vmatprep.subr.mxu0 0.0
    %154 = vmatpush2.msra.mxu0 0.0
    %155 = vmatprep.subr.mxu0 0.0
    %156 = vmatpush2.msra.mxu0 0.0
    %157 = vmatprep.subr.mxu0 0.0
    %158 = vmatpush2.msra.mxu0 0.0
    %159 = vmatprep.subr.mxu0 0.0
    %160 = vmatpush2.msra.mxu0 0.0
    %161 = vmatprep.subr.mxu0 0.0
    %162 = vmatpush2.msra.mxu0 0.0
    %163 = vmatprep.subr.mxu0 0.0
    %164 = vmatpush2.msra.mxu0 0.0
    %165 = vmatprep.subr.mxu0 0.0
    %166 = vmatpush2.msra.mxu0 0.0
    %167 = vmatprep.subr.mxu0 0.0
    %168 = vmatpush2.msra.mxu0 0.0
    %169 = vmatprep.subr.mxu0 0.0
    %170 = vmatpush2.msra.mxu0 0.0
    %171 = vmatprep.subr.mxu0 0.0
    %172 = vmatpush2.msra.mxu0 0.0
    %173 = vmatprep.subr.mxu0 0.0
    %174 = vmatpush2.msra.mxu0 0.0
    %175 = vmatprep.subr.mxu0 0.0
    %176 = vmatpush2.msra.mxu0 0.0
    %177 = vmatprep.subr.mxu0 0.0
    %178 = vmatpush2.msra.mxu0 0.0
    %179 = vmatprep.subr.mxu0 0.0
    %180 = vmatpush2.msra.mxu0 0.0
    %181 = vmatprep.subr.mxu0 0.0
    %182 = vmatpush2.msra.mxu0 0.0
    %183 = vmatprep.subr.mxu0 0.0
    %184 = vmatpush2.msra.mxu0 0.0
    %185 = vmatprep.mubr.f32.mxu0 0.0
    %186 = vmatmul.mubr.f32.gmra.mxu0 %v116
    %v187 = vpop.f32.mrf.mxu0
    %v188 = vadd.f32 %v112, %v187
    %v189 = vpop.f32.mrf.mxu0
    %190 = vmatprep.mubr.f32.mxu0 0.0
    %191 = vmatmul.mubr.f32.gmra.mxu0 %v119
    %v192 = vpop.f32.mrf.mxu0
    %v193 = vadd.f32 %v112, %v192
    %v194 = vpop.f32.mrf.mxu0
    %195 = vdwg.mxu0
    %v196 = vmul.f32 %v188, 0.35355338
    %v197 = vmul.f32 %v193, 0.35355338
    %200 = vrot.lane.b32.xlu0 %v188, 96
    %v201 = vpop.permute.xlu0 %200
    %202 = vrot.lane.b32.xlu0 %v193, 96
    %v203 = vpop.permute.xlu0 %202
    %vm204 = vcmask 64512
    %v206 = vsel %vm204, %v196, 0
    %v209 = vsel %vm204, %v197, 0
    %v211 = vsel %vm204, %v201, 0
    %v213 = vsel %vm204, %v203, 0
    %215 = vmatprep.subr.mxu0 0.0
    %216 = vmatpush1.xpose.msra.mxu0 0.0
    %217 = vmatprep.subr.mxu0 0.0
    %218 = vmatpush1.xpose.msra.mxu0 0.0
    %219 = vmatprep.subr.mxu0 0.0
    %220 = vmatpush1.xpose.msra.mxu0 0.0
    %221 = vmatprep.subr.mxu0 0.0
    %222 = vmatpush1.xpose.msra.mxu0 0.0
    %223 = vmatprep.subr.mxu0 0.0
    %224 = vmatpush1.xpose.msra.mxu0 0.0
    %225 = vmatprep.subr.mxu0 0.0
    %226 = vmatpush1.xpose.msra.mxu0 0.0
    %227 = vmatprep.subr.mxu0 0.0
    %228 = vmatpush1.xpose.msra.mxu0 0.0
    %229 = vmatprep.subr.mxu0 0.0
    %230 = vmatpush1.xpose.msra.mxu0 0.0
    %231 = vmatprep.subr.mxu0 0.0
    %232 = vmatpush1.xpose.msra.mxu0 0.0
    %233 = vmatprep.subr.mxu0 0.0
    %234 = vmatpush1.xpose.msra.mxu0 0.0
    %235 = vmatprep.subr.mxu0 0.0
    %236 = vmatpush1.xpose.msra.mxu0 0.0
    %237 = vmatprep.subr.mxu0 0.0
    %238 = vmatpush1.xpose.msra.mxu0 0.0
    %239 = vmatprep.subr.mxu0 0.0
    %240 = vmatpush1.xpose.msra.mxu0 0.0
    %241 = vmatprep.subr.mxu0 0.0
    %242 = vmatpush1.xpose.msra.mxu0 0.0
    %243 = vmatprep.subr.mxu0 0.0
    %244 = vmatpush1.xpose.msra.mxu0 %v213
    %245 = vmatprep.subr.mxu0 0.0
    %246 = vmatpush1.xpose.msra.mxu0 %v211
    %247 = vmatprep.subr.mxu0 0.0
    %248 = vmatpush2.xpose.msra.mxu0 0.0
    %249 = vmatprep.subr.mxu0 0.0
    %250 = vmatpush2.xpose.msra.mxu0 0.0
    %251 = vmatprep.subr.mxu0 0.0
    %252 = vmatpush2.xpose.msra.mxu0 0.0
    %253 = vmatprep.subr.mxu0 0.0
    %254 = vmatpush2.xpose.msra.mxu0 0.0
    %255 = vmatprep.subr.mxu0 0.0
    %256 = vmatpush2.xpose.msra.mxu0 0.0
    %257 = vmatprep.subr.mxu0 0.0
    %258 = vmatpush2.xpose.msra.mxu0 0.0
    %259 = vmatprep.subr.mxu0 0.0
    %260 = vmatpush2.xpose.msra.mxu0 0.0
    %261 = vmatprep.subr.mxu0 0.0
    %262 = vmatpush2.xpose.msra.mxu0 0.0
    %263 = vmatprep.subr.mxu0 0.0
    %264 = vmatpush2.xpose.msra.mxu0 0.0
    %265 = vmatprep.subr.mxu0 0.0
    %266 = vmatpush2.xpose.msra.mxu0 0.0
    %267 = vmatprep.subr.mxu0 0.0
    %268 = vmatpush2.xpose.msra.mxu0 0.0
    %269 = vmatprep.subr.mxu0 0.0
    %270 = vmatpush2.xpose.msra.mxu0 0.0
    %271 = vmatprep.subr.mxu0 0.0
    %272 = vmatpush2.xpose.msra.mxu0 0.0
    %273 = vmatprep.subr.mxu0 0.0
    %274 = vmatpush2.xpose.msra.mxu0 0.0
    %275 = vmatprep.subr.mxu0 0.0
    %276 = vmatpush2.xpose.msra.mxu0 0.0
    %277 = vmatprep.subr.mxu0 0.0
    %278 = vmatpush2.xpose.msra.mxu0 0.0
    %279 = vmatprep.mubr.f32.mxu0 0.0
    %280 = vmatmul.mubr.f32.gmra.mxu0 %v206
    %v281 = vpop.f32.mrf.mxu0
    %v282 = vadd.f32 %v92, %v281
    %v283 = vpop.f32.mrf.mxu0
    %284 = vmatprep.mubr.f32.mxu0 0.0
    %285 = vmatmul.mubr.f32.gmra.mxu0 %v209
    %v286 = vpop.f32.mrf.mxu0
    %v287 = vadd.f32 %v93, %v286
    %v288 = vpop.f32.mrf.mxu0
    %289 = vdwg.mxu0
    %vm290 = vcmask 130048
    %v291 = vsel %vm290, %v282, -inf
    %292 = vmax.xlane.f32.xlu0 %v291
    %v293 = vpop.xlane.xlu0 %292
    %v294 = vsel %vm290, %v287, -inf
    %295 = vmax.xlane.f32.xlu0 %v294
    %v296 = vpop.xlane.xlu0 %295
    %v297 = vsub.f32 %v282, %v293
    %v298 = vsub.f32 %v287, %v296
    %v299 = vmul.f32 %v297, 1.442695
    %v300 = vpow.pop %v299
    %v301 = vmul.f32 %v298, 1.442695
    %v302 = vpow.pop %v301
    %v303 = vsel %vm290, %v300, 0.0
    %304 = vadd.xlane.f32.xlu0 %v303
    %v305 = vpop.xlane.xlu0 %304
    %v306 = vsel %vm290, %v302, 0.0
    %307 = vadd.xlane.f32.xlu0 %v306
    %v308 = vpop.xlane.xlu0 %307
    %v309 = vrcp.pop %v305
    %v310 = vrcp.pop %v308
    %v311 = vmul.f32 %v300, %v309
    %v312 = vmul.f32 %v302, %v310
    %313 = vrot.lane.b32.xlu0 %v188, 64
    %v314 = vpop.permute.xlu0 %313
    %315 = vrot.lane.b32.xlu0 %v193, 64
    %v316 = vpop.permute.xlu0 %315
    %v320 = vsel %vm290, %v311, 0
    %v323 = vsel %vm290, %v312, 0
    %325 = vmatprep.subr.mxu0 0.0
    %326 = vmatpush1.msra.mxu0 0.0
    %327 = vmatprep.subr.mxu0 0.0
    %328 = vmatpush1.msra.mxu0 0.0
    %329 = vmatprep.subr.mxu0 0.0
    %330 = vmatpush1.msra.mxu0 0.0
    %331 = vmatprep.subr.mxu0 0.0
    %332 = vmatpush1.msra.mxu0 0.0
    %333 = vmatprep.subr.mxu0 0.0
    %334 = vmatpush1.msra.mxu0 0.0
    %335 = vmatprep.subr.mxu0 0.0
    %336 = vmatpush1.msra.mxu0 0.0
    %337 = vmatprep.subr.mxu0 0.0
    %338 = vmatpush1.msra.mxu0 0.0
    %339 = vmatprep.subr.mxu0 0.0
    %340 = vmatpush1.msra.mxu0 0.0
    %341 = vmatprep.subr.mxu0 0.0
    %342 = vmatpush1.msra.mxu0 0.0
    %343 = vmatprep.subr.mxu0 0.0
    %344 = vmatpush1.msra.mxu0 0.0
    %345 = vmatprep.subr.mxu0 0.0
    %346 = vmatpush1.msra.mxu0 0.0
    %347 = vmatprep.subr.mxu0 0.0
    %348 = vmatpush1.msra.mxu0 0.0
    %349 = vmatprep.subr.mxu0 0.0
    %350 = vmatpush1.msra.mxu0 0.0
    %351 = vmatprep.subr.mxu0 0.0
    %352 = vmatpush1.msra.mxu0 0.0
    %353 = vmatprep.subr.mxu0 0.0
    %354 = vmatpush1.msra.mxu0 %v316
    %355 = vmatprep.subr.mxu0 0.0
    %356 = vmatpush1.msra.mxu0 %v314
    %357 = vmatprep.subr.mxu0 0.0
    %358 = vmatpush2.msra.mxu0 0.0
    %359 = vmatprep.subr.mxu0 0.0
    %360 = vmatpush2.msra.mxu0 0.0
    %361 = vmatprep.subr.mxu0 0.0
    %362 = vmatpush2.msra.mxu0 0.0
    %363 = vmatprep.subr.mxu0 0.0
    %364 = vmatpush2.msra.mxu0 0.0
    %365 = vmatprep.subr.mxu0 0.0
    %366 = vmatpush2.msra.mxu0 0.0
    %367 = vmatprep.subr.mxu0 0.0
    %368 = vmatpush2.msra.mxu0 0.0
    %369 = vmatprep.subr.mxu0 0.0
    %370 = vmatpush2.msra.mxu0 0.0
    %371 = vmatprep.subr.mxu0 0.0
    %372 = vmatpush2.msra.mxu0 0.0
    %373 = vmatprep.subr.mxu0 0.0
    %374 = vmatpush2.msra.mxu0 0.0
    %375 = vmatprep.subr.mxu0 0.0
    %376 = vmatpush2.msra.mxu0 0.0
    %377 = vmatprep.subr.mxu0 0.0
    %378 = vmatpush2.msra.mxu0 0.0
    %379 = vmatprep.subr.mxu0 0.0
    %380 = vmatpush2.msra.mxu0 0.0
    %381 = vmatprep.subr.mxu0 0.0
    %382 = vmatpush2.msra.mxu0 0.0
    %383 = vmatprep.subr.mxu0 0.0
    %384 = vmatpush2.msra.mxu0 0.0
    %385 = vmatprep.subr.mxu0 0.0
    %386 = vmatpush2.msra.mxu0 0.0
    %387 = vmatprep.subr.mxu0 0.0
    %388 = vmatpush2.msra.mxu0 0.0
    %389 = vmatprep.mubr.f32.mxu0 0.0
    %390 = vmatmul.mubr.f32.gmra.mxu0 %v320
    %v391 = vpop.f32.mrf.mxu0
    %v392 = vadd.f32 0.0, %v391
    %v393 = vpop.f32.mrf.mxu0
    %394 = vmatprep.mubr.f32.mxu0 0.0
    %395 = vmatmul.mubr.f32.gmra.mxu0 %v323
    %v396 = vpop.f32.mrf.mxu0
    %v397 = vadd.f32 0.0, %v396
    %v398 = vpop.f32.mrf.mxu0
    %399 = vdwg.mxu0
    %400 = vst.msk [vmem:[#allocation2] sm:$0xff] %vm204, %v392
    %401 = vst.msk [vmem:[#allocation2 + $0x8] sm:$0xff] %vm204, %v397
    %402 = vrot.lane.b32.xlu0 %v196, 120
    %v403 = vpop.permute.xlu0 %402
    %404 = vrot.lane.b32.xlu0 %v197, 120
    %v405 = vpop.permute.xlu0 %404
    %406 = vrot.lane.b32.xlu0 %v188, 88
    %v407 = vpop.permute.xlu0 %406
    %408 = vrot.lane.b32.xlu0 %v193, 88
    %v409 = vpop.permute.xlu0 %408
    %v410 = vsel %vm204, %v403, 0
    %v412 = vsel %vm204, %v405, 0
    %v414 = vsel %vm204, %v407, 0
    %v416 = vsel %vm204, %v409, 0
    %418 = vmatprep.subr.mxu0 0.0
    %419 = vmatpush1.xpose.msra.mxu0 0.0
    %420 = vmatprep.subr.mxu0 0.0
    %421 = vmatpush1.xpose.msra.mxu0 0.0
    %422 = vmatprep.subr.mxu0 0.0
    %423 = vmatpush1.xpose.msra.mxu0 0.0
    %424 = vmatprep.subr.mxu0 0.0
    %425 = vmatpush1.xpose.msra.mxu0 0.0
    %426 = vmatprep.subr.mxu0 0.0
    %427 = vmatpush1.xpose.msra.mxu0 0.0
    %428 = vmatprep.subr.mxu0 0.0
    %429 = vmatpush1.xpose.msra.mxu0 0.0
    %430 = vmatprep.subr.mxu0 0.0
    %431 = vmatpush1.xpose.msra.mxu0 0.0
    %432 = vmatprep.subr.mxu0 0.0
    %433 = vmatpush1.xpose.msra.mxu0 0.0
    %434 = vmatprep.subr.mxu0 0.0
    %435 = vmatpush1.xpose.msra.mxu0 0.0
    %436 = vmatprep.subr.mxu0 0.0
    %437 = vmatpush1.xpose.msra.mxu0 0.0
    %438 = vmatprep.subr.mxu0 0.0
    %439 = vmatpush1.xpose.msra.mxu0 0.0
    %440 = vmatprep.subr.mxu0 0.0
    %441 = vmatpush1.xpose.msra.mxu0 0.0
    %442 = vmatprep.subr.mxu0 0.0
    %443 = vmatpush1.xpose.msra.mxu0 0.0
    %444 = vmatprep.subr.mxu0 0.0
    %445 = vmatpush1.xpose.msra.mxu0 0.0
    %446 = vmatprep.subr.mxu0 0.0
    %447 = vmatpush1.xpose.msra.mxu0 %v416
    %448 = vmatprep.subr.mxu0 0.0
    %449 = vmatpush1.xpose.msra.mxu0 %v414
    %450 = vmatprep.subr.mxu0 0.0
    %451 = vmatpush2.xpose.msra.mxu0 0.0
    %452 = vmatprep.subr.mxu0 0.0
    %453 = vmatpush2.xpose.msra.mxu0 0.0
    %454 = vmatprep.subr.mxu0 0.0
    %455 = vmatpush2.xpose.msra.mxu0 0.0
    %456 = vmatprep.subr.mxu0 0.0
    %457 = vmatpush2.xpose.msra.mxu0 0.0
    %458 = vmatprep.subr.mxu0 0.0
    %459 = vmatpush2.xpose.msra.mxu0 0.0
    %460 = vmatprep.subr.mxu0 0.0
    %461 = vmatpush2.xpose.msra.mxu0 0.0
    %462 = vmatprep.subr.mxu0 0.0
    %463 = vmatpush2.xpose.msra.mxu0 0.0
    %464 = vmatprep.subr.mxu0 0.0
    %465 = vmatpush2.xpose.msra.mxu0 0.0
    %466 = vmatprep.subr.mxu0 0.0
    %467 = vmatpush2.xpose.msra.mxu0 0.0
    %468 = vmatprep.subr.mxu0 0.0
    %469 = vmatpush2.xpose.msra.mxu0 0.0
    %470 = vmatprep.subr.mxu0 0.0
    %471 = vmatpush2.xpose.msra.mxu0 0.0
    %472 = vmatprep.subr.mxu0 0.0
    %473 = vmatpush2.xpose.msra.mxu0 0.0
    %474 = vmatprep.subr.mxu0 0.0
    %475 = vmatpush2.xpose.msra.mxu0 0.0
    %476 = vmatprep.subr.mxu0 0.0
    %477 = vmatpush2.xpose.msra.mxu0 0.0
    %478 = vmatprep.subr.mxu0 0.0
    %479 = vmatpush2.xpose.msra.mxu0 0.0
    %480 = vmatprep.subr.mxu0 0.0
    %481 = vmatpush2.xpose.msra.mxu0 0.0
    %482 = vmatprep.mubr.f32.mxu0 0.0
    %483 = vmatmul.mubr.f32.gmra.mxu0 %v410
    %v484 = vpop.f32.mrf.mxu0
    %v485 = vadd.f32 %v92, %v484
    %v486 = vpop.f32.mrf.mxu0
    %487 = vmatprep.mubr.f32.mxu0 0.0
    %488 = vmatmul.mubr.f32.gmra.mxu0 %v412
    %v489 = vpop.f32.mrf.mxu0
    %v490 = vadd.f32 %v93, %v489
    %v491 = vpop.f32.mrf.mxu0
    %492 = vdwg.mxu0
    %v493 = vsel %vm290, %v485, -inf
    %494 = vmax.xlane.f32.xlu0 %v493
    %v495 = vpop.xlane.xlu0 %494
    %v496 = vsel %vm290, %v490, -inf
    %497 = vmax.xlane.f32.xlu0 %v496
    %v498 = vpop.xlane.xlu0 %497
    %v499 = vsub.f32 %v485, %v495
    %v500 = vsub.f32 %v490, %v498
    %v501 = vmul.f32 %v499, 1.442695
    %v502 = vpow.pop %v501
    %v503 = vmul.f32 %v500, 1.442695
    %v504 = vpow.pop %v503
    %v505 = vsel %vm290, %v502, 0.0
    %506 = vadd.xlane.f32.xlu0 %v505
    %v507 = vpop.xlane.xlu0 %506
    %v508 = vsel %vm290, %v504, 0.0
    %509 = vadd.xlane.f32.xlu0 %v508
    %v510 = vpop.xlane.xlu0 %509
    %v511 = vrcp.pop %v507
    %v512 = vrcp.pop %v510
    %v513 = vmul.f32 %v502, %v511
    %v514 = vmul.f32 %v504, %v512
    %515 = vrot.lane.b32.xlu0 %v188, 56
    %v516 = vpop.permute.xlu0 %515
    %517 = vrot.lane.b32.xlu0 %v193, 56
    %v518 = vpop.permute.xlu0 %517
    %v522 = vsel %vm290, %v513, 0
    %v525 = vsel %vm290, %v514, 0
    %527 = vmatprep.subr.mxu0 0.0
    %528 = vmatpush1.msra.mxu0 0.0
    %529 = vmatprep.subr.mxu0 0.0
    %530 = vmatpush1.msra.mxu0 0.0
    %531 = vmatprep.subr.mxu0 0.0
    %532 = vmatpush1.msra.mxu0 0.0
    %533 = vmatprep.subr.mxu0 0.0
    %534 = vmatpush1.msra.mxu0 0.0
    %535 = vmatprep.subr.mxu0 0.0
    %536 = vmatpush1.msra.mxu0 0.0
    %537 = vmatprep.subr.mxu0 0.0
    %538 = vmatpush1.msra.mxu0 0.0
    %539 = vmatprep.subr.mxu0 0.0
    %540 = vmatpush1.msra.mxu0 0.0
    %541 = vmatprep.subr.mxu0 0.0
    %542 = vmatpush1.msra.mxu0 0.0
    %543 = vmatprep.subr.mxu0 0.0
    %544 = vmatpush1.msra.mxu0 0.0
    %545 = vmatprep.subr.mxu0 0.0
    %546 = vmatpush1.msra.mxu0 0.0
    %547 = vmatprep.subr.mxu0 0.0
    %548 = vmatpush1.msra.mxu0 0.0
    %549 = vmatprep.subr.mxu0 0.0
    %550 = vmatpush1.msra.mxu0 0.0
    %551 = vmatprep.subr.mxu0 0.0
    %552 = vmatpush1.msra.mxu0 0.0
    %553 = vmatprep.subr.mxu0 0.0
    %554 = vmatpush1.msra.mxu0 0.0
    %555 = vmatprep.subr.mxu0 0.0
    %556 = vmatpush1.msra.mxu0 %v518
    %557 = vmatprep.subr.mxu0 0.0
    %558 = vmatpush1.msra.mxu0 %v516
    %559 = vmatprep.subr.mxu0 0.0
    %560 = vmatpush2.msra.mxu0 0.0
    %561 = vmatprep.subr.mxu0 0.0
    %562 = vmatpush2.msra.mxu0 0.0
    %563 = vmatprep.subr.mxu0 0.0
    %564 = vmatpush2.msra.mxu0 0.0
    %565 = vmatprep.subr.mxu0 0.0
    %566 = vmatpush2.msra.mxu0 0.0
    %567 = vmatprep.subr.mxu0 0.0
    %568 = vmatpush2.msra.mxu0 0.0
    %569 = vmatprep.subr.mxu0 0.0
    %570 = vmatpush2.msra.mxu0 0.0
    %571 = vmatprep.subr.mxu0 0.0
    %572 = vmatpush2.msra.mxu0 0.0
    %573 = vmatprep.subr.mxu0 0.0
    %574 = vmatpush2.msra.mxu0 0.0
    %575 = vmatprep.subr.mxu0 0.0
    %576 = vmatpush2.msra.mxu0 0.0
    %577 = vmatprep.subr.mxu0 0.0
    %578 = vmatpush2.msra.mxu0 0.0
    %579 = vmatprep.subr.mxu0 0.0
    %580 = vmatpush2.msra.mxu0 0.0
    %581 = vmatprep.subr.mxu0 0.0
    %582 = vmatpush2.msra.mxu0 0.0
    %583 = vmatprep.subr.mxu0 0.0
    %584 = vmatpush2.msra.mxu0 0.0
    %585 = vmatprep.subr.mxu0 0.0
    %586 = vmatpush2.msra.mxu0 0.0
    %587 = vmatprep.subr.mxu0 0.0
    %588 = vmatpush2.msra.mxu0 0.0
    %589 = vmatprep.subr.mxu0 0.0
    %590 = vmatpush2.msra.mxu0 0.0
    %591 = vmatprep.mubr.f32.mxu0 0.0
    %592 = vmatmul.mubr.f32.gmra.mxu0 %v522
    %v593 = vpop.f32.mrf.mxu0
    %v594 = vadd.f32 0.0, %v593
    %v595 = vpop.f32.mrf.mxu0
    %596 = vmatprep.mubr.f32.mxu0 0.0
    %597 = vmatmul.mubr.f32.gmra.mxu0 %v525
    %v598 = vpop.f32.mrf.mxu0
    %v599 = vadd.f32 0.0, %v598
    %v600 = vpop.f32.mrf.mxu0
    %601 = vdwg.mxu0
    %604 = vrot.lane.b32.xlu0 %v594, 8
    %v605 = vpop.permute.xlu0 %604
    %606 = vrot.lane.b32.xlu0 %v599, 8
    %v607 = vpop.permute.xlu0 %606
    %vm610 = vcmask 130112
    %611 = vst.msk [vmem:[#allocation2] sm:$0xff] %vm610, %v605
    %612 = vst.msk [vmem:[#allocation2 + $0x8] sm:$0xff] %vm610, %v607
    %613 = vrot.lane.b32.xlu0 %v196, 112
    %v614 = vpop.permute.xlu0 %613
    %615 = vrot.lane.b32.xlu0 %v197, 112
    %v616 = vpop.permute.xlu0 %615
    %617 = vrot.lane.b32.xlu0 %v188, 80
    %v618 = vpop.permute.xlu0 %617
    %619 = vrot.lane.b32.xlu0 %v193, 80
    %v620 = vpop.permute.xlu0 %619
    %v621 = vsel %vm204, %v614, 0
    %v623 = vsel %vm204, %v616, 0
    %v625 = vsel %vm204, %v618, 0
    %v627 = vsel %vm204, %v620, 0
    %629 = vmatprep.subr.mxu0 0.0
    %630 = vmatpush1.xpose.msra.mxu0 0.0
    %631 = vmatprep.subr.mxu0 0.0
    %632 = vmatpush1.xpose.msra.mxu0 0.0
    %633 = vmatprep.subr.mxu0 0.0
    %634 = vmatpush1.xpose.msra.mxu0 0.0
    %635 = vmatprep.subr.mxu0 0.0
    %636 = vmatpush1.xpose.msra.mxu0 0.0
    %637 = vmatprep.subr.mxu0 0.0
    %638 = vmatpush1.xpose.msra.mxu0 0.0
    %639 = vmatprep.subr.mxu0 0.0
    %640 = vmatpush1.xpose.msra.mxu0 0.0
    %641 = vmatprep.subr.mxu0 0.0
    %642 = vmatpush1.xpose.msra.mxu0 0.0
    %643 = vmatprep.subr.mxu0 0.0
    %644 = vmatpush1.xpose.msra.mxu0 0.0
    %645 = vmatprep.subr.mxu0 0.0
    %646 = vmatpush1.xpose.msra.mxu0 0.0
    %647 = vmatprep.subr.mxu0 0.0
    %648 = vmatpush1.xpose.msra.mxu0 0.0
    %649 = vmatprep.subr.mxu0 0.0
    %650 = vmatpush1.xpose.msra.mxu0 0.0
    %651 = vmatprep.subr.mxu0 0.0
    %652 = vmatpush1.xpose.msra.mxu0 0.0
    %653 = vmatprep.subr.mxu0 0.0
    %654 = vmatpush1.xpose.msra.mxu0 0.0
    %655 = vmatprep.subr.mxu0 0.0
    %656 = vmatpush1.xpose.msra.mxu0 0.0
    %657 = vmatprep.subr.mxu0 0.0
    %658 = vmatpush1.xpose.msra.mxu0 %v627
    %659 = vmatprep.subr.mxu0 0.0
    %660 = vmatpush1.xpose.msra.mxu0 %v625
    %661 = vmatprep.subr.mxu0 0.0
    %662 = vmatpush2.xpose.msra.mxu0 0.0
    %663 = vmatprep.subr.mxu0 0.0
    %664 = vmatpush2.xpose.msra.mxu0 0.0
    %665 = vmatprep.subr.mxu0 0.0
    %666 = vmatpush2.xpose.msra.mxu0 0.0
    %667 = vmatprep.subr.mxu0 0.0
    %668 = vmatpush2.xpose.msra.mxu0 0.0
    %669 = vmatprep.subr.mxu0 0.0
    %670 = vmatpush2.xpose.msra.mxu0 0.0
    %671 = vmatprep.subr.mxu0 0.0
    %672 = vmatpush2.xpose.msra.mxu0 0.0
    %673 = vmatprep.subr.mxu0 0.0
    %674 = vmatpush2.xpose.msra.mxu0 0.0
    %675 = vmatprep.subr.mxu0 0.0
    %676 = vmatpush2.xpose.msra.mxu0 0.0
    %677 = vmatprep.subr.mxu0 0.0
    %678 = vmatpush2.xpose.msra.mxu0 0.0
    %679 = vmatprep.subr.mxu0 0.0
    %680 = vmatpush2.xpose.msra.mxu0 0.0
    %681 = vmatprep.subr.mxu0 0.0
    %682 = vmatpush2.xpose.msra.mxu0 0.0
    %683 = vmatprep.subr.mxu0 0.0
    %684 = vmatpush2.xpose.msra.mxu0 0.0
    %685 = vmatprep.subr.mxu0 0.0
    %686 = vmatpush2.xpose.msra.mxu0 0.0
    %687 = vmatprep.subr.mxu0 0.0
    %688 = vmatpush2.xpose.msra.mxu0 0.0
    %689 = vmatprep.subr.mxu0 0.0
    %690 = vmatpush2.xpose.msra.mxu0 0.0
    %691 = vmatprep.subr.mxu0 0.0
    %692 = vmatpush2.xpose.msra.mxu0 0.0
    %693 = vmatprep.mubr.f32.mxu0 0.0
    %694 = vmatmul.mubr.f32.gmra.mxu0 %v621
    %v695 = vpop.f32.mrf.mxu0
    %v696 = vadd.f32 %v92, %v695
    %v697 = vpop.f32.mrf.mxu0
    %698 = vmatprep.mubr.f32.mxu0 0.0
    %699 = vmatmul.mubr.f32.gmra.mxu0 %v623
    %v700 = vpop.f32.mrf.mxu0
    %v701 = vadd.f32 %v93, %v700
    %v702 = vpop.f32.mrf.mxu0
    %703 = vdwg.mxu0
    %v704 = vsel %vm290, %v696, -inf
    %705 = vmax.xlane.f32.xlu0 %v704
    %v706 = vpop.xlane.xlu0 %705
    %v707 = vsel %vm290, %v701, -inf
    %708 = vmax.xlane.f32.xlu0 %v707
    %v709 = vpop.xlane.xlu0 %708
    %v710 = vsub.f32 %v696, %v706
    %v711 = vsub.f32 %v701, %v709
    %v712 = vmul.f32 %v710, 1.442695
    %v713 = vpow.pop %v712
    %v714 = vmul.f32 %v711, 1.442695
    %v715 = vpow.pop %v714
    %v716 = vsel %vm290, %v713, 0.0
    %717 = vadd.xlane.f32.xlu0 %v716
    %v718 = vpop.xlane.xlu0 %717
    %v719 = vsel %vm290, %v715, 0.0
    %720 = vadd.xlane.f32.xlu0 %v719
    %v721 = vpop.xlane.xlu0 %720
    %v722 = vrcp.pop %v718
    %v723 = vrcp.pop %v721
    %v724 = vmul.f32 %v713, %v722
    %v725 = vmul.f32 %v715, %v723
    %726 = vrot.lane.b32.xlu0 %v188, 48
    %v727 = vpop.permute.xlu0 %726
    %728 = vrot.lane.b32.xlu0 %v193, 48
    %v729 = vpop.permute.xlu0 %728
    %v733 = vsel %vm290, %v724, 0
    %v736 = vsel %vm290, %v725, 0
    %738 = vmatprep.subr.mxu0 0.0
    %739 = vmatpush1.msra.mxu0 0.0
    %740 = vmatprep.subr.mxu0 0.0
    %741 = vmatpush1.msra.mxu0 0.0
    %742 = vmatprep.subr.mxu0 0.0
    %743 = vmatpush1.msra.mxu0 0.0
    %744 = vmatprep.subr.mxu0 0.0
    %745 = vmatpush1.msra.mxu0 0.0
    %746 = vmatprep.subr.mxu0 0.0
    %747 = vmatpush1.msra.mxu0 0.0
    %748 = vmatprep.subr.mxu0 0.0
    %749 = vmatpush1.msra.mxu0 0.0
    %750 = vmatprep.subr.mxu0 0.0
    %751 = vmatpush1.msra.mxu0 0.0
    %752 = vmatprep.subr.mxu0 0.0
    %753 = vmatpush1.msra.mxu0 0.0
    %754 = vmatprep.subr.mxu0 0.0
    %755 = vmatpush1.msra.mxu0 0.0
    %756 = vmatprep.subr.mxu0 0.0
    %757 = vmatpush1.msra.mxu0 0.0
    %758 = vmatprep.subr.mxu0 0.0
    %759 = vmatpush1.msra.mxu0 0.0
    %760 = vmatprep.subr.mxu0 0.0
    %761 = vmatpush1.msra.mxu0 0.0
    %762 = vmatprep.subr.mxu0 0.0
    %763 = vmatpush1.msra.mxu0 0.0
    %764 = vmatprep.subr.mxu0 0.0
    %765 = vmatpush1.msra.mxu0 0.0
    %766 = vmatprep.subr.mxu0 0.0
    %767 = vmatpush1.msra.mxu0 %v729
    %768 = vmatprep.subr.mxu0 0.0
    %769 = vmatpush1.msra.mxu0 %v727
    %770 = vmatprep.subr.mxu0 0.0
    %771 = vmatpush2.msra.mxu0 0.0
    %772 = vmatprep.subr.mxu0 0.0
    %773 = vmatpush2.msra.mxu0 0.0
    %774 = vmatprep.subr.mxu0 0.0
    %775 = vmatpush2.msra.mxu0 0.0
    %776 = vmatprep.subr.mxu0 0.0
    %777 = vmatpush2.msra.mxu0 0.0
    %778 = vmatprep.subr.mxu0 0.0
    %779 = vmatpush2.msra.mxu0 0.0
    %780 = vmatprep.subr.mxu0 0.0
    %781 = vmatpush2.msra.mxu0 0.0
    %782 = vmatprep.subr.mxu0 0.0
    %783 = vmatpush2.msra.mxu0 0.0
    %784 = vmatprep.subr.mxu0 0.0
    %785 = vmatpush2.msra.mxu0 0.0
    %786 = vmatprep.subr.mxu0 0.0
    %787 = vmatpush2.msra.mxu0 0.0
    %788 = vmatprep.subr.mxu0 0.0
    %789 = vmatpush2.msra.mxu0 0.0
    %790 = vmatprep.subr.mxu0 0.0
    %791 = vmatpush2.msra.mxu0 0.0
    %792 = vmatprep.subr.mxu0 0.0
    %793 = vmatpush2.msra.mxu0 0.0
    %794 = vmatprep.subr.mxu0 0.0
    %795 = vmatpush2.msra.mxu0 0.0
    %796 = vmatprep.subr.mxu0 0.0
    %797 = vmatpush2.msra.mxu0 0.0
    %798 = vmatprep.subr.mxu0 0.0
    %799 = vmatpush2.msra.mxu0 0.0
    %800 = vmatprep.subr.mxu0 0.0
    %801 = vmatpush2.msra.mxu0 0.0
    %802 = vmatprep.mubr.f32.mxu0 0.0
    %803 = vmatmul.mubr.f32.gmra.mxu0 %v733
    %v804 = vpop.f32.mrf.mxu0
    %v805 = vadd.f32 0.0, %v804
    %v806 = vpop.f32.mrf.mxu0
    %807 = vmatprep.mubr.f32.mxu0 0.0
    %808 = vmatmul.mubr.f32.gmra.mxu0 %v736
    %v809 = vpop.f32.mrf.mxu0
    %v810 = vadd.f32 0.0, %v809
    %v811 = vpop.f32.mrf.mxu0
    %812 = vdwg.mxu0
    %815 = vrot.lane.b32.xlu0 %v805, 16
    %v816 = vpop.permute.xlu0 %815
    %817 = vrot.lane.b32.xlu0 %v810, 16
    %v818 = vpop.permute.xlu0 %817
    %vm821 = vcmask 195712
    %822 = vst.msk [vmem:[#allocation2] sm:$0xff] %vm821, %v816
    %823 = vst.msk [vmem:[#allocation2 + $0x8] sm:$0xff] %vm821, %v818
    %824 = vrot.lane.b32.xlu0 %v196, 104
    %v825 = vpop.permute.xlu0 %824
    %826 = vrot.lane.b32.xlu0 %v197, 104
    %v827 = vpop.permute.xlu0 %826
    %828 = vrot.lane.b32.xlu0 %v188, 72
    %v829 = vpop.permute.xlu0 %828
    %830 = vrot.lane.b32.xlu0 %v193, 72
    %v831 = vpop.permute.xlu0 %830
    %v832 = vsel %vm204, %v825, 0
    %v834 = vsel %vm204, %v827, 0
    %v836 = vsel %vm204, %v829, 0
    %v838 = vsel %vm204, %v831, 0
    %840 = vmatprep.subr.mxu0 0.0
    %841 = vmatpush1.xpose.msra.mxu0 0.0
    %842 = vmatprep.subr.mxu0 0.0
    %843 = vmatpush1.xpose.msra.mxu0 0.0
    %844 = vmatprep.subr.mxu0 0.0
    %845 = vmatpush1.xpose.msra.mxu0 0.0
    %846 = vmatprep.subr.mxu0 0.0
    %847 = vmatpush1.xpose.msra.mxu0 0.0
    %848 = vmatprep.subr.mxu0 0.0
    %849 = vmatpush1.xpose.msra.mxu0 0.0
    %850 = vmatprep.subr.mxu0 0.0
    %851 = vmatpush1.xpose.msra.mxu0 0.0
    %852 = vmatprep.subr.mxu0 0.0
    %853 = vmatpush1.xpose.msra.mxu0 0.0
    %854 = vmatprep.subr.mxu0 0.0
    %855 = vmatpush1.xpose.msra.mxu0 0.0
    %856 = vmatprep.subr.mxu0 0.0
    %857 = vmatpush1.xpose.msra.mxu0 0.0
    %858 = vmatprep.subr.mxu0 0.0
    %859 = vmatpush1.xpose.msra.mxu0 0.0
    %860 = vmatprep.subr.mxu0 0.0
    %861 = vmatpush1.xpose.msra.mxu0 0.0
    %862 = vmatprep.subr.mxu0 0.0
    %863 = vmatpush1.xpose.msra.mxu0 0.0
    %864 = vmatprep.subr.mxu0 0.0
    %865 = vmatpush1.xpose.msra.mxu0 0.0
    %866 = vmatprep.subr.mxu0 0.0
    %867 = vmatpush1.xpose.msra.mxu0 0.0
    %868 = vmatprep.subr.mxu0 0.0
    %869 = vmatpush1.xpose.msra.mxu0 %v838
    %870 = vmatprep.subr.mxu0 0.0
    %871 = vmatpush1.xpose.msra.mxu0 %v836
    %872 = vmatprep.subr.mxu0 0.0
    %873 = vmatpush2.xpose.msra.mxu0 0.0
    %874 = vmatprep.subr.mxu0 0.0
    %875 = vmatpush2.xpose.msra.mxu0 0.0
    %876 = vmatprep.subr.mxu0 0.0
    %877 = vmatpush2.xpose.msra.mxu0 0.0
    %878 = vmatprep.subr.mxu0 0.0
    %879 = vmatpush2.xpose.msra.mxu0 0.0
    %880 = vmatprep.subr.mxu0 0.0
    %881 = vmatpush2.xpose.msra.mxu0 0.0
    %882 = vmatprep.subr.mxu0 0.0
    %883 = vmatpush2.xpose.msra.mxu0 0.0
    %884 = vmatprep.subr.mxu0 0.0
    %885 = vmatpush2.xpose.msra.mxu0 0.0
    %886 = vmatprep.subr.mxu0 0.0
    %887 = vmatpush2.xpose.msra.mxu0 0.0
    %888 = vmatprep.subr.mxu0 0.0
    %889 = vmatpush2.xpose.msra.mxu0 0.0
    %890 = vmatprep.subr.mxu0 0.0
    %891 = vmatpush2.xpose.msra.mxu0 0.0
    %892 = vmatprep.subr.mxu0 0.0
    %893 = vmatpush2.xpose.msra.mxu0 0.0
    %894 = vmatprep.subr.mxu0 0.0
    %895 = vmatpush2.xpose.msra.mxu0 0.0
    %896 = vmatprep.subr.mxu0 0.0
    %897 = vmatpush2.xpose.msra.mxu0 0.0
    %898 = vmatprep.subr.mxu0 0.0
    %899 = vmatpush2.xpose.msra.mxu0 0.0
    %900 = vmatprep.subr.mxu0 0.0
    %901 = vmatpush2.xpose.msra.mxu0 0.0
    %902 = vmatprep.subr.mxu0 0.0
    %903 = vmatpush2.xpose.msra.mxu0 0.0
    %904 = vmatprep.mubr.f32.mxu0 0.0
    %905 = vmatmul.mubr.f32.gmra.mxu0 %v832
    %v906 = vpop.f32.mrf.mxu0
    %v907 = vadd.f32 %v92, %v906
    %v908 = vpop.f32.mrf.mxu0
    %909 = vmatprep.mubr.f32.mxu0 0.0
    %910 = vmatmul.mubr.f32.gmra.mxu0 %v834
    %v911 = vpop.f32.mrf.mxu0
    %v912 = vadd.f32 %v93, %v911
    %v913 = vpop.f32.mrf.mxu0
    %914 = vdwg.mxu0
    %v915 = vsel %vm290, %v907, -inf
    %916 = vmax.xlane.f32.xlu0 %v915
    %v917 = vpop.xlane.xlu0 %916
    %v918 = vsel %vm290, %v912, -inf
    %919 = vmax.xlane.f32.xlu0 %v918
    %v920 = vpop.xlane.xlu0 %919
    %v921 = vsub.f32 %v907, %v917
    %v922 = vsub.f32 %v912, %v920
    %v923 = vmul.f32 %v921, 1.442695
    %v924 = vpow.pop %v923
    %v925 = vmul.f32 %v922, 1.442695
    %v926 = vpow.pop %v925
    %v927 = vsel %vm290, %v924, 0.0
    %928 = vadd.xlane.f32.xlu0 %v927
    %v929 = vpop.xlane.xlu0 %928
    %v930 = vsel %vm290, %v926, 0.0
    %931 = vadd.xlane.f32.xlu0 %v930
    %v932 = vpop.xlane.xlu0 %931
    %v933 = vrcp.pop %v929
    %v934 = vrcp.pop %v932
    %v935 = vmul.f32 %v924, %v933
    %v936 = vmul.f32 %v926, %v934
    %937 = vrot.lane.b32.xlu0 %v188, 40
    %v938 = vpop.permute.xlu0 %937
    %939 = vrot.lane.b32.xlu0 %v193, 40
    %v940 = vpop.permute.xlu0 %939
    %v944 = vsel %vm290, %v935, 0
    %v947 = vsel %vm290, %v936, 0
    %949 = vmatprep.subr.mxu0 0.0
    %950 = vmatpush1.msra.mxu0 0.0
    %951 = vmatprep.subr.mxu0 0.0
    %952 = vmatpush1.msra.mxu0 0.0
    %953 = vmatprep.subr.mxu0 0.0
    %954 = vmatpush1.msra.mxu0 0.0
    %955 = vmatprep.subr.mxu0 0.0
    %956 = vmatpush1.msra.mxu0 0.0
    %957 = vmatprep.subr.mxu0 0.0
    %958 = vmatpush1.msra.mxu0 0.0
    %959 = vmatprep.subr.mxu0 0.0
    %960 = vmatpush1.msra.mxu0 0.0
    %961 = vmatprep.subr.mxu0 0.0
    %962 = vmatpush1.msra.mxu0 0.0
    %963 = vmatprep.subr.mxu0 0.0
    %964 = vmatpush1.msra.mxu0 0.0
    %965 = vmatprep.subr.mxu0 0.0
    %966 = vmatpush1.msra.mxu0 0.0
    %967 = vmatprep.subr.mxu0 0.0
    %968 = vmatpush1.msra.mxu0 0.0
    %969 = vmatprep.subr.mxu0 0.0
    %970 = vmatpush1.msra.mxu0 0.0
    %971 = vmatprep.subr.mxu0 0.0
    %972 = vmatpush1.msra.mxu0 0.0
    %973 = vmatprep.subr.mxu0 0.0
    %974 = vmatpush1.msra.mxu0 0.0
    %975 = vmatprep.subr.mxu0 0.0
    %976 = vmatpush1.msra.mxu0 0.0
    %977 = vmatprep.subr.mxu0 0.0
    %978 = vmatpush1.msra.mxu0 %v940
    %979 = vmatprep.subr.mxu0 0.0
    %980 = vmatpush1.msra.mxu0 %v938
    %981 = vmatprep.subr.mxu0 0.0
    %982 = vmatpush2.msra.mxu0 0.0
    %983 = vmatprep.subr.mxu0 0.0
    %984 = vmatpush2.msra.mxu0 0.0
    %985 = vmatprep.subr.mxu0 0.0
    %986 = vmatpush2.msra.mxu0 0.0
    %987 = vmatprep.subr.mxu0 0.0
    %988 = vmatpush2.msra.mxu0 0.0
    %989 = vmatprep.subr.mxu0 0.0
    %990 = vmatpush2.msra.mxu0 0.0
    %991 = vmatprep.subr.mxu0 0.0
    %992 = vmatpush2.msra.mxu0 0.0
    %993 = vmatprep.subr.mxu0 0.0
    %994 = vmatpush2.msra.mxu0 0.0
    %995 = vmatprep.subr.mxu0 0.0
    %996 = vmatpush2.msra.mxu0 0.0
    %997 = vmatprep.subr.mxu0 0.0
    %998 = vmatpush2.msra.mxu0 0.0
    %999 = vmatprep.subr.mxu0 0.0
    %1000 = vmatpush2.msra.mxu0 0.0
    %1001 = vmatprep.subr.mxu0 0.0
    %1002 = vmatpush2.msra.mxu0 0.0
    %1003 = vmatprep.subr.mxu0 0.0
    %1004 = vmatpush2.msra.mxu0 0.0
    %1005 = vmatprep.subr.mxu0 0.0
    %1006 = vmatpush2.msra.mxu0 0.0
    %1007 = vmatprep.subr.mxu0 0.0
    %1008 = vmatpush2.msra.mxu0 0.0
    %1009 = vmatprep.subr.mxu0 0.0
    %1010 = vmatpush2.msra.mxu0 0.0
    %1011 = vmatprep.subr.mxu0 0.0
    %1012 = vmatpush2.msra.mxu0 0.0
    %1013 = vmatprep.mubr.f32.mxu0 0.0
    %1014 = vmatmul.mubr.f32.gmra.mxu0 %v944
    %v1015 = vpop.f32.mrf.mxu0
    %v1016 = vadd.f32 0.0, %v1015
    %v1017 = vpop.f32.mrf.mxu0
    %1018 = vmatprep.mubr.f32.mxu0 0.0
    %1019 = vmatmul.mubr.f32.gmra.mxu0 %v947
    %v1020 = vpop.f32.mrf.mxu0
    %v1021 = vadd.f32 0.0, %v1020
    %v1022 = vpop.f32.mrf.mxu0
    %1023 = vdwg.mxu0
    %1026 = vrot.lane.b32.xlu0 %v1016, 24
    %v1027 = vpop.permute.xlu0 %1026
    %1028 = vrot.lane.b32.xlu0 %v1021, 24
    %v1029 = vpop.permute.xlu0 %1028
    %vm1032 = vcmask 261312
    %1033 = vst.msk [vmem:[#allocation2] sm:$0xff] %vm1032, %v1027
    %1034 = vst.msk [vmem:[#allocation2 + $0x8] sm:$0xff] %vm1032, %v1029
    %v1035 = vld [vmem:[#allocation2] sm:$0xff]
    %v1036 = vld [vmem:[#allocation2 + $0x8] sm:$0xff]
    %v1038 = vlaneseq
    %v1039 = vshrl.u32 %v1038, 7
    %v1040 = vsub.s32 0, %v1039
    %v1041 = vrot.slane %v107, %v1040
    %v1044 = vsel %vm114, %v1035, 0
    %v1047 = vsel %vm114, %v1036, 0
    %1049 = vmatprep.subr.mxu0 0.0
    %1050 = vmatpush1.msra.mxu0 0.0
    %1051 = vmatprep.subr.mxu0 0.0
    %1052 = vmatpush1.msra.mxu0 0.0
    %1053 = vmatprep.subr.mxu0 0.0
    %1054 = vmatpush1.msra.mxu0 0.0
    %1055 = vmatprep.subr.mxu0 0.0
    %1056 = vmatpush1.msra.mxu0 0.0
    %1057 = vmatprep.subr.mxu0 0.0
    %1058 = vmatpush1.msra.mxu0 0.0
    %1059 = vmatprep.subr.mxu0 0.0
    %1060 = vmatpush1.msra.mxu0 0.0
    %1061 = vmatprep.subr.mxu0 0.0
    %1062 = vmatpush1.msra.mxu0 0.0
    %1063 = vmatprep.subr.mxu0 0.0
    %1064 = vmatpush1.msra.mxu0 0.0
    %1065 = vmatprep.subr.mxu0 0.0
    %1066 = vmatpush1.msra.mxu0 0.0
    %1067 = vmatprep.subr.mxu0 0.0
    %1068 = vmatpush1.msra.mxu0 0.0
    %1069 = vmatprep.subr.mxu0 0.0
    %1070 = vmatpush1.msra.mxu0 0.0
    %1071 = vmatprep.subr.mxu0 0.0
    %1072 = vmatpush1.msra.mxu0 0.0
    %1073 = vmatprep.subr.mxu0 0.0
    %1074 = vmatpush1.msra.mxu0 %v106
    %1075 = vmatprep.subr.mxu0 0.0
    %1076 = vmatpush1.msra.mxu0 %v105
    %1077 = vmatprep.subr.mxu0 0.0
    %1078 = vmatpush1.msra.mxu0 %v104
    %1079 = vmatprep.subr.mxu0 0.0
    %1080 = vmatpush1.msra.mxu0 %v103
    %1081 = vmatprep.subr.mxu0 0.0
    %1082 = vmatpush2.msra.mxu0 0.0
    %1083 = vmatprep.subr.mxu0 0.0
    %1084 = vmatpush2.msra.mxu0 0.0
    %1085 = vmatprep.subr.mxu0 0.0
    %1086 = vmatpush2.msra.mxu0 0.0
    %1087 = vmatprep.subr.mxu0 0.0
    %1088 = vmatpush2.msra.mxu0 0.0
    %1089 = vmatprep.subr.mxu0 0.0
    %1090 = vmatpush2.msra.mxu0 0.0
    %1091 = vmatprep.subr.mxu0 0.0
    %1092 = vmatpush2.msra.mxu0 0.0
    %1093 = vmatprep.subr.mxu0 0.0
    %1094 = vmatpush2.msra.mxu0 0.0
    %1095 = vmatprep.subr.mxu0 0.0
    %1096 = vmatpush2.msra.mxu0 0.0
    %1097 = vmatprep.subr.mxu0 0.0
    %1098 = vmatpush2.msra.mxu0 0.0
    %1099 = vmatprep.subr.mxu0 0.0
    %1100 = vmatpush2.msra.mxu0 0.0
    %1101 = vmatprep.subr.mxu0 0.0
    %1102 = vmatpush2.msra.mxu0 0.0
    %1103 = vmatprep.subr.mxu0 0.0
    %1104 = vmatpush2.msra.mxu0 0.0
    %1105 = vmatprep.subr.mxu0 0.0
    %1106 = vmatpush2.msra.mxu0 0.0
    %1107 = vmatprep.subr.mxu0 0.0
    %1108 = vmatpush2.msra.mxu0 0.0
    %1109 = vmatprep.subr.mxu0 0.0
    %1110 = vmatpush2.msra.mxu0 0.0
    %1111 = vmatprep.subr.mxu0 0.0
    %1112 = vmatpush2.msra.mxu0 0.0
    %1113 = vmatprep.mubr.f32.mxu0 0.0
    %1114 = vmatmul.mubr.f32.gmra.mxu0 %v1044
    %v1115 = vpop.f32.mrf.mxu0
    %v1116 = vadd.f32 %v1041, %v1115
    %v1117 = vpop.f32.mrf.mxu0
    %1118 = vmatprep.mubr.f32.mxu0 0.0
    %1119 = vmatmul.mubr.f32.gmra.mxu0 %v1047
    %v1120 = vpop.f32.mrf.mxu0
    %v1121 = vadd.f32 %v1041, %v1120
    %v1122 = vpop.f32.mrf.mxu0
    %1123 = vdwg.mxu0
    %v1124 = vadd.f32 %v86, %v1116
    %v1125 = vadd.f32 %v87, %v1121
    %v1126 = vsel %vm114, %v1124, 0.0
    %1127 = vadd.xlane.f32.xlu0 %v1126
    %v1128 = vpop.xlane.xlu0 %1127
    %v1129 = vsel %vm114, %v1125, 0.0
    %1130 = vadd.xlane.f32.xlu0 %v1129
    %v1131 = vpop.xlane.xlu0 %1130
    %v1133 = vsel %vm290, %v88, 0
    %v1136 = vsel %vm290, %v89, 0
    %1138 = vmatprep.subr.mxu0 0.0
    %1139 = vmatpush1.msra.mxu0 0.0
    %1140 = vmatprep.subr.mxu0 0.0
    %1141 = vmatpush1.msra.mxu0 0.0
    %1142 = vmatprep.subr.mxu0 0.0
    %1143 = vmatpush1.msra.mxu0 0.0
    %1144 = vmatprep.subr.mxu0 0.0
    %1145 = vmatpush1.msra.mxu0 0.0
    %1146 = vmatprep.subr.mxu0 0.0
    %1147 = vmatpush1.msra.mxu0 0.0
    %1148 = vmatprep.subr.mxu0 0.0
    %1149 = vmatpush1.msra.mxu0 0.0
    %1150 = vmatprep.subr.mxu0 0.0
    %1151 = vmatpush1.msra.mxu0 0.0
    %1152 = vmatprep.subr.mxu0 0.0
    %1153 = vmatpush1.msra.mxu0 0.0
    %1154 = vmatprep.subr.mxu0 0.0
    %1155 = vmatpush1.msra.mxu0 0.0
    %1156 = vmatprep.subr.mxu0 0.0
    %1157 = vmatpush1.msra.mxu0 0.0
    %1158 = vmatprep.subr.mxu0 0.0
    %1159 = vmatpush1.msra.mxu0 0.0
    %1160 = vmatprep.subr.mxu0 0.0
    %1161 = vmatpush1.msra.mxu0 0.0
    %1162 = vmatprep.subr.mxu0 0.0
    %1163 = vmatpush1.msra.mxu0 0.0
    %1164 = vmatprep.subr.mxu0 0.0
    %1165 = vmatpush1.msra.mxu0 0.0
    %1166 = vmatprep.subr.mxu0 0.0
    %1167 = vmatpush1.msra.mxu0 %v1131
    %1168 = vmatprep.subr.mxu0 0.0
    %1169 = vmatpush1.msra.mxu0 %v1128
    %1170 = vmatprep.subr.mxu0 0.0
    %1171 = vmatpush2.msra.mxu0 0.0
    %1172 = vmatprep.subr.mxu0 0.0
    %1173 = vmatpush2.msra.mxu0 0.0
    %1174 = vmatprep.subr.mxu0 0.0
    %1175 = vmatpush2.msra.mxu0 0.0
    %1176 = vmatprep.subr.mxu0 0.0
    %1177 = vmatpush2.msra.mxu0 0.0
    %1178 = vmatprep.subr.mxu0 0.0
    %1179 = vmatpush2.msra.mxu0 0.0
    %1180 = vmatprep.subr.mxu0 0.0
    %1181 = vmatpush2.msra.mxu0 0.0
    %1182 = vmatprep.subr.mxu0 0.0
    %1183 = vmatpush2.msra.mxu0 0.0
    %1184 = vmatprep.subr.mxu0 0.0
    %1185 = vmatpush2.msra.mxu0 0.0
    %1186 = vmatprep.subr.mxu0 0.0
    %1187 = vmatpush2.msra.mxu0 0.0
    %1188 = vmatprep.subr.mxu0 0.0
    %1189 = vmatpush2.msra.mxu0 0.0
    %1190 = vmatprep.subr.mxu0 0.0
    %1191 = vmatpush2.msra.mxu0 0.0
    %1192 = vmatprep.subr.mxu0 0.0
    %1193 = vmatpush2.msra.mxu0 0.0
    %1194 = vmatprep.subr.mxu0 0.0
    %1195 = vmatpush2.msra.mxu0 0.0
    %1196 = vmatprep.subr.mxu0 0.0
    %1197 = vmatpush2.msra.mxu0 0.0
    %1198 = vmatprep.subr.mxu0 0.0
    %1199 = vmatpush2.msra.mxu0 0.0
    %1200 = vmatprep.subr.mxu0 0.0
    %1201 = vmatpush2.msra.mxu0 0.0
    %1202 = vmatprep.mubr.f32.mxu0 0.0
    %1203 = vmatmul.mubr.f32.gmra.mxu0 %v1133
    %v1204 = vpop.f32.mrf.mxu0
    %v1205 = vadd.f32 0.0, %v1204
    %v1206 = vpop.f32.mrf.mxu0
    %1207 = vmatprep.mubr.f32.mxu0 0.0
    %1208 = vmatmul.mubr.f32.gmra.mxu0 %v1136
    %v1209 = vpop.f32.mrf.mxu0
    %v1210 = vadd.f32 0.0, %v1209
    %v1211 = vpop.f32.mrf.mxu0
    %1212 = vdwg.mxu0
    %v1213 = vmul.f32 %v1205, 0.00390625
    %v1214 = vmul.f32 %v1210, 0.00390625
    %1216 = vset.pattern.permute.xlu0 0
    %1217 = vperm.xlu0 %1216, %v1213
    %v1218 = vpop.permute.xlu0 %1217
    %1221 = vset.pattern.permute.xlu0 0
    %1222 = vperm.xlu0 %1221, %v1214
    %v1223 = vpop.permute.xlu0 %1222
    %v1225 = vsub.f32 %v1124, %v1218
    %v1226 = vsub.f32 %v1125, %v1223
    %v1227 = vmul.f32 %v1225, %v1225
    %v1228 = vmul.f32 %v1226, %v1226
    %v1229 = vsel %vm114, %v1227, 0.0
    %1230 = vadd.xlane.f32.xlu0 %v1229
    %v1231 = vpop.xlane.xlu0 %1230
    %v1232 = vsel %vm114, %v1228, 0.0
    %1233 = vadd.xlane.f32.xlu0 %v1232
    %v1234 = vpop.xlane.xlu0 %1233
    %1235 = vmatprep.subr.mxu0 0.0
    %1236 = vmatpush1.msra.mxu0 0.0
    %1237 = vmatprep.subr.mxu0 0.0
    %1238 = vmatpush1.msra.mxu0 0.0
    %1239 = vmatprep.subr.mxu0 0.0
    %1240 = vmatpush1.msra.mxu0 0.0
    %1241 = vmatprep.subr.mxu0 0.0
    %1242 = vmatpush1.msra.mxu0 0.0
    %1243 = vmatprep.subr.mxu0 0.0
    %1244 = vmatpush1.msra.mxu0 0.0
    %1245 = vmatprep.subr.mxu0 0.0
    %1246 = vmatpush1.msra.mxu0 0.0
    %1247 = vmatprep.subr.mxu0 0.0
    %1248 = vmatpush1.msra.mxu0 0.0
    %1249 = vmatprep.subr.mxu0 0.0
    %1250 = vmatpush1.msra.mxu0 0.0
    %1251 = vmatprep.subr.mxu0 0.0
    %1252 = vmatpush1.msra.mxu0 0.0
    %1253 = vmatprep.subr.mxu0 0.0
    %1254 = vmatpush1.msra.mxu0 0.0
    %1255 = vmatprep.subr.mxu0 0.0
    %1256 = vmatpush1.msra.mxu0 0.0
    %1257 = vmatprep.subr.mxu0 0.0
    %1258 = vmatpush1.msra.mxu0 0.0
    %1259 = vmatprep.subr.mxu0 0.0
    %1260 = vmatpush1.msra.mxu0 0.0
    %1261 = vmatprep.subr.mxu0 0.0
    %1262 = vmatpush1.msra.mxu0 0.0
    %1263 = vmatprep.subr.mxu0 0.0
    %1264 = vmatpush1.msra.mxu0 %v1234
    %1265 = vmatprep.subr.mxu0 0.0
    %1266 = vmatpush1.msra.mxu0 %v1231
    %1267 = vmatprep.subr.mxu0 0.0
    %1268 = vmatpush2.msra.mxu0 0.0
    %1269 = vmatprep.subr.mxu0 0.0
    %1270 = vmatpush2.msra.mxu0 0.0
    %1271 = vmatprep.subr.mxu0 0.0
    %1272 = vmatpush2.msra.mxu0 0.0
    %1273 = vmatprep.subr.mxu0 0.0
    %1274 = vmatpush2.msra.mxu0 0.0
    %1275 = vmatprep.subr.mxu0 0.0
    %1276 = vmatpush2.msra.mxu0 0.0
    %1277 = vmatprep.subr.mxu0 0.0
    %1278 = vmatpush2.msra.mxu0 0.0
    %1279 = vmatprep.subr.mxu0 0.0
    %1280 = vmatpush2.msra.mxu0 0.0
    %1281 = vmatprep.subr.mxu0 0.0
    %1282 = vmatpush2.msra.mxu0 0.0
    %1283 = vmatprep.subr.mxu0 0.0
    %1284 = vmatpush2.msra.mxu0 0.0
    %1285 = vmatprep.subr.mxu0 0.0
    %1286 = vmatpush2.msra.mxu0 0.0
    %1287 = vmatprep.subr.mxu0 0.0
    %1288 = vmatpush2.msra.mxu0 0.0
    %1289 = vmatprep.subr.mxu0 0.0
    %1290 = vmatpush2.msra.mxu0 0.0
    %1291 = vmatprep.subr.mxu0 0.0
    %1292 = vmatpush2.msra.mxu0 0.0
    %1293 = vmatprep.subr.mxu0 0.0
    %1294 = vmatpush2.msra.mxu0 0.0
    %1295 = vmatprep.subr.mxu0 0.0
    %1296 = vmatpush2.msra.mxu0 0.0
    %1297 = vmatprep.subr.mxu0 0.0
    %1298 = vmatpush2.msra.mxu0 0.0
    %1299 = vmatprep.mubr.f32.mxu0 0.0
    %1300 = vmatmul.mubr.f32.gmra.mxu0 %v1133
    %v1301 = vpop.f32.mrf.mxu0
    %v1302 = vadd.f32 0.0, %v1301
    %v1303 = vpop.f32.mrf.mxu0
    %1304 = vmatprep.mubr.f32.mxu0 0.0
    %1305 = vmatmul.mubr.f32.gmra.mxu0 %v1136
    %v1306 = vpop.f32.mrf.mxu0
    %v1307 = vadd.f32 0.0, %v1306
    %v1308 = vpop.f32.mrf.mxu0
    %1309 = vdwg.mxu0
    %v1310 = vmul.f32 %v1302, 0.00390625
    %v1311 = vmul.f32 %v1307, 0.00390625
    %v1312 = vadd.f32 %v1310, 1e-05
    %v1313 = vadd.f32 %v1311, 1e-05
    %v1314 = vrsqrt.pop %v1312
    %v1315 = vrsqrt.pop %v1313
    %1317 = vset.pattern.permute.xlu0 0
    %1318 = vperm.xlu0 %1317, %v1314
    %v1319 = vpop.permute.xlu0 %1318
    %1322 = vset.pattern.permute.xlu0 0
    %1323 = vperm.xlu0 %1322, %v1315
    %v1324 = vpop.permute.xlu0 %1323
    %v1326 = vmul.f32 %v1225, %v1319
    %v1327 = vmul.f32 %v1226, %v1324
    %v1328 = vmul.f32 %v1326, %v94
    %v1329 = vmul.f32 %v1327, %v95
    %v1330 = vadd.f32 %v1328, %v96
    %v1331 = vadd.f32 %v1329, %v97
    %v1332 = vld [vmem:[#allocation8] sm:$0xff]
    %v1333 = vld [vmem:[#allocation8 + $0x8] sm:$0xff]
    %v1334 = vld [vmem:[#allocation8 + $0x10] sm:$0xff]
    %v1335 = vld [vmem:[#allocation8 + $0x18] sm:$0xff]
    %v1336 = vld [vmem:[#allocation8 + $0x20] sm:$0xff]
    %v1337 = vld [vmem:[#allocation8 + $0x28] sm:$0xff]
    %v1338 = vld [vmem:[#allocation8 + $0x30] sm:$0xff]
    %v1339 = vld [vmem:[#allocation8 + $0x38] sm:$0xff]
    %v1340 = vld [vmem:[#allocation8 + $0x40] sm:$0xff]
    %v1341 = vld [vmem:[#allocation8 + $0x48] sm:$0xff]
    %v1342 = vld [vmem:[#allocation8 + $0x50] sm:$0xff]
    %v1343 = vld [vmem:[#allocation8 + $0x58] sm:$0xff]
    %v1344 = vld [vmem:[#allocation8 + $0x60] sm:$0xff]
    %v1345 = vld [vmem:[#allocation8 + $0x68] sm:$0xff]
    %v1346 = vld [vmem:[#allocation8 + $0x70] sm:$0xff]
    %v1347 = vld [vmem:[#allocation8 + $0x78] sm:$0xff]
    %v1348 = vld [vmem:[#allocation8 + $0x80] sm:$0xff]
    %v1349 = vld [vmem:[#allocation8 + $0x88] sm:$0xff]
    %v1350 = vld [vmem:[#allocation8 + $0x90] sm:$0xff]
    %v1351 = vld [vmem:[#allocation8 + $0x98] sm:$0xff]
    %v1352 = vld [vmem:[#allocation8 + $0xa0] sm:$0xff]
    %v1353 = vld [vmem:[#allocation8 + $0xa8] sm:$0xff]
    %v1354 = vld [vmem:[#allocation8 + $0xb0] sm:$0xff]
    %v1355 = vld [vmem:[#allocation8 + $0xb8] sm:$0xff]
    %v1356 = vld [vmem:[#allocation8 + $0xc0] sm:$0xff]
    %v1357 = vld [vmem:[#allocation8 + $0xc8] sm:$0xff]
    %v1358 = vld [vmem:[#allocation8 + $0xd0] sm:$0xff]
    %v1359 = vld [vmem:[#allocation8 + $0xd8] sm:$0xff]
    %v1360 = vld [vmem:[#allocation8 + $0xe0] sm:$0xff]
    %v1361 = vld [vmem:[#allocation8 + $0xe8] sm:$0xff]
    %v1362 = vld [vmem:[#allocation8 + $0xf0] sm:$0xff]
    %v1363 = vld [vmem:[#allocation8 + $0xf8] sm:$0xff]
    %v1364 = vld [vmem:[%s10] sm:$0x1]
    %v1365 = vld [vmem:[%s11] sm:$0xff]
    %v1366 = vld [vmem:[%s11 + $0x8] sm:$0xff]
    %v1367 = vld [vmem:[%s11 + $0x10] sm:$0xff]
    %v1368 = vld [vmem:[%s11 + $0x18] sm:$0xff]
    %v1369 = vld [vmem:[%s11 + $0x20] sm:$0xff]
    %v1370 = vld [vmem:[%s11 + $0x28] sm:$0xff]
    %v1371 = vld [vmem:[%s11 + $0x30] sm:$0xff]
    %v1372 = vld [vmem:[%s11 + $0x38] sm:$0xff]
    %v1373 = vld [vmem:[%s11 + $0x40] sm:$0xff]
    %v1374 = vld [vmem:[%s11 + $0x48] sm:$0xff]
    %v1375 = vld [vmem:[%s11 + $0x50] sm:$0xff]
    %v1376 = vld [vmem:[%s11 + $0x58] sm:$0xff]
    %v1377 = vld [vmem:[%s11 + $0x60] sm:$0xff]
    %v1378 = vld [vmem:[%s11 + $0x68] sm:$0xff]
    %v1379 = vld [vmem:[%s11 + $0x70] sm:$0xff]
    %v1380 = vld [vmem:[%s11 + $0x78] sm:$0xff]
    %v1381 = vld [vmem:[%s12] sm:$0x1]
    %v1383 = vsel %vm114, %v1330, 0
    %1385 = vmatprep.subr.mxu0 0.0
    %1386 = vmatpush1.msra.mxu0 0.0
    %1387 = vmatprep.subr.mxu0 0.0
    %1388 = vmatpush1.msra.mxu0 0.0
    %1389 = vmatprep.subr.mxu0 0.0
    %1390 = vmatpush1.msra.mxu0 0.0
    %1391 = vmatprep.subr.mxu0 0.0
    %1392 = vmatpush1.msra.mxu0 0.0
    %1393 = vmatprep.subr.mxu0 0.0
    %1394 = vmatpush1.msra.mxu0 0.0
    %1395 = vmatprep.subr.mxu0 0.0
    %1396 = vmatpush1.msra.mxu0 0.0
    %1397 = vmatprep.subr.mxu0 0.0
    %1398 = vmatpush1.msra.mxu0 0.0
    %1399 = vmatprep.subr.mxu0 0.0
    %1400 = vmatpush1.msra.mxu0 0.0
    %1401 = vmatprep.subr.mxu0 0.0
    %1402 = vmatpush1.msra.mxu0 0.0
    %1403 = vmatprep.subr.mxu0 0.0
    %1404 = vmatpush1.msra.mxu0 0.0
    %1405 = vmatprep.subr.mxu0 0.0
    %1406 = vmatpush1.msra.mxu0 0.0
    %1407 = vmatprep.subr.mxu0 0.0
    %1408 = vmatpush1.msra.mxu0 0.0
    %1409 = vmatprep.subr.mxu0 0.0
    %1410 = vmatpush1.msra.mxu0 %v1335
    %1411 = vmatprep.subr.mxu0 0.0
    %1412 = vmatpush1.msra.mxu0 %v1334
    %1413 = vmatprep.subr.mxu0 0.0
    %1414 = vmatpush1.msra.mxu0 %v1333
    %1415 = vmatprep.subr.mxu0 0.0
    %1416 = vmatpush1.msra.mxu0 %v1332
    %1417 = vmatprep.subr.mxu0 0.0
    %1418 = vmatpush2.msra.mxu0 0.0
    %1419 = vmatprep.subr.mxu0 0.0
    %1420 = vmatpush2.msra.mxu0 0.0
    %1421 = vmatprep.subr.mxu0 0.0
    %1422 = vmatpush2.msra.mxu0 0.0
    %1423 = vmatprep.subr.mxu0 0.0
    %1424 = vmatpush2.msra.mxu0 0.0
    %1425 = vmatprep.subr.mxu0 0.0
    %1426 = vmatpush2.msra.mxu0 0.0
    %1427 = vmatprep.subr.mxu0 0.0
    %1428 = vmatpush2.msra.mxu0 0.0
    %1429 = vmatprep.subr.mxu0 0.0
    %1430 = vmatpush2.msra.mxu0 0.0
    %1431 = vmatprep.subr.mxu0 0.0
    %1432 = vmatpush2.msra.mxu0 0.0
    %1433 = vmatprep.subr.mxu0 0.0
    %1434 = vmatpush2.msra.mxu0 0.0
    %1435 = vmatprep.subr.mxu0 0.0
    %1436 = vmatpush2.msra.mxu0 0.0
    %1437 = vmatprep.subr.mxu0 0.0
    %1438 = vmatpush2.msra.mxu0 0.0
    %1439 = vmatprep.subr.mxu0 0.0
    %1440 = vmatpush2.msra.mxu0 0.0
    %1441 = vmatprep.subr.mxu0 0.0
    %1442 = vmatpush2.msra.mxu0 0.0
    %1443 = vmatprep.subr.mxu0 0.0
    %1444 = vmatpush2.msra.mxu0 0.0
    %1445 = vmatprep.subr.mxu0 0.0
    %1446 = vmatpush2.msra.mxu0 0.0
    %1447 = vmatprep.subr.mxu0 0.0
    %1448 = vmatpush2.msra.mxu0 0.0
    %1449 = vmatprep.mubr.f32.mxu0 0.0
    %1450 = vmatmul.mubr.f32.gmra.mxu0 %v1383
    %v1451 = vpop.f32.mrf.mxu0
    %v1452 = vadd.f32 0.0, %v1451
    %v1453 = vpop.f32.mrf.mxu0
    %1454 = vdwg.mxu0
    %v1455 = vadd.f32 %v1364, %v1452
    %v1456 = vrot.slane %v1330, 1
    %v1457 = vsel %vm114, %v1456, 0
    %1459 = vmatprep.subr.mxu0 0.0
    %1460 = vmatpush1.msra.mxu0 0.0
    %1461 = vmatprep.subr.mxu0 0.0
    %1462 = vmatpush1.msra.mxu0 0.0
    %1463 = vmatprep.subr.mxu0 0.0
    %1464 = vmatpush1.msra.mxu0 0.0
    %1465 = vmatprep.subr.mxu0 0.0
    %1466 = vmatpush1.msra.mxu0 0.0
    %1467 = vmatprep.subr.mxu0 0.0
    %1468 = vmatpush1.msra.mxu0 0.0
    %1469 = vmatprep.subr.mxu0 0.0
    %1470 = vmatpush1.msra.mxu0 0.0
    %1471 = vmatprep.subr.mxu0 0.0
    %1472 = vmatpush1.msra.mxu0 0.0
    %1473 = vmatprep.subr.mxu0 0.0
    %1474 = vmatpush1.msra.mxu0 0.0
    %1475 = vmatprep.subr.mxu0 0.0
    %1476 = vmatpush1.msra.mxu0 0.0
    %1477 = vmatprep.subr.mxu0 0.0
    %1478 = vmatpush1.msra.mxu0 0.0
    %1479 = vmatprep.subr.mxu0 0.0
    %1480 = vmatpush1.msra.mxu0 0.0
    %1481 = vmatprep.subr.mxu0 0.0
    %1482 = vmatpush1.msra.mxu0 0.0
    %1483 = vmatprep.subr.mxu0 0.0
    %1484 = vmatpush1.msra.mxu0 %v1339
    %1485 = vmatprep.subr.mxu0 0.0
    %1486 = vmatpush1.msra.mxu0 %v1338
    %1487 = vmatprep.subr.mxu0 0.0
    %1488 = vmatpush1.msra.mxu0 %v1337
    %1489 = vmatprep.subr.mxu0 0.0
    %1490 = vmatpush1.msra.mxu0 %v1336
    %1491 = vmatprep.subr.mxu0 0.0
    %1492 = vmatpush2.msra.mxu0 0.0
    %1493 = vmatprep.subr.mxu0 0.0
    %1494 = vmatpush2.msra.mxu0 0.0
    %1495 = vmatprep.subr.mxu0 0.0
    %1496 = vmatpush2.msra.mxu0 0.0
    %1497 = vmatprep.subr.mxu0 0.0
    %1498 = vmatpush2.msra.mxu0 0.0
    %1499 = vmatprep.subr.mxu0 0.0
    %1500 = vmatpush2.msra.mxu0 0.0
    %1501 = vmatprep.subr.mxu0 0.0
    %1502 = vmatpush2.msra.mxu0 0.0
    %1503 = vmatprep.subr.mxu0 0.0
    %1504 = vmatpush2.msra.mxu0 0.0
    %1505 = vmatprep.subr.mxu0 0.0
    %1506 = vmatpush2.msra.mxu0 0.0
    %1507 = vmatprep.subr.mxu0 0.0
    %1508 = vmatpush2.msra.mxu0 0.0
    %1509 = vmatprep.subr.mxu0 0.0
    %1510 = vmatpush2.msra.mxu0 0.0
    %1511 = vmatprep.subr.mxu0 0.0
    %1512 = vmatpush2.msra.mxu0 0.0
    %1513 = vmatprep.subr.mxu0 0.0
    %1514 = vmatpush2.msra.mxu0 0.0
    %1515 = vmatprep.subr.mxu0 0.0
    %1516 = vmatpush2.msra.mxu0 0.0
    %1517 = vmatprep.subr.mxu0 0.0
    %1518 = vmatpush2.msra.mxu0 0.0
    %1519 = vmatprep.subr.mxu0 0.0
    %1520 = vmatpush2.msra.mxu0 0.0
    %1521 = vmatprep.subr.mxu0 0.0
    %1522 = vmatpush2.msra.mxu0 0.0
    %1523 = vmatprep.mubr.f32.mxu0 0.0
    %1524 = vmatmul.mubr.f32.gmra.mxu0 %v1457
    %v1525 = vpop.f32.mrf.mxu0
    %v1526 = vadd.f32 0.0, %v1525
    %v1527 = vpop.f32.mrf.mxu0
    %1528 = vdwg.mxu0
    %v1529 = vadd.f32 %v1455, %v1526
    %v1530 = vrot.slane %v1330, 2
    %v1531 = vsel %vm114, %v1530, 0
    %1533 = vmatprep.subr.mxu0 0.0
    %1534 = vmatpush1.msra.mxu0 0.0
    %1535 = vmatprep.subr.mxu0 0.0
    %1536 = vmatpush1.msra.mxu0 0.0
    %1537 = vmatprep.subr.mxu0 0.0
    %1538 = vmatpush1.msra.mxu0 0.0
    %1539 = vmatprep.subr.mxu0 0.0
    %1540 = vmatpush1.msra.mxu0 0.0
    %1541 = vmatprep.subr.mxu0 0.0
    %1542 = vmatpush1.msra.mxu0 0.0
    %1543 = vmatprep.subr.mxu0 0.0
    %1544 = vmatpush1.msra.mxu0 0.0
    %1545 = vmatprep.subr.mxu0 0.0
    %1546 = vmatpush1.msra.mxu0 0.0
    %1547 = vmatprep.subr.mxu0 0.0
    %1548 = vmatpush1.msra.mxu0 0.0
    %1549 = vmatprep.subr.mxu0 0.0
    %1550 = vmatpush1.msra.mxu0 0.0
    %1551 = vmatprep.subr.mxu0 0.0
    %1552 = vmatpush1.msra.mxu0 0.0
    %1553 = vmatprep.subr.mxu0 0.0
    %1554 = vmatpush1.msra.mxu0 0.0
    %1555 = vmatprep.subr.mxu0 0.0
    %1556 = vmatpush1.msra.mxu0 0.0
    %1557 = vmatprep.subr.mxu0 0.0
    %1558 = vmatpush1.msra.mxu0 %v1343
    %1559 = vmatprep.subr.mxu0 0.0
    %1560 = vmatpush1.msra.mxu0 %v1342
    %1561 = vmatprep.subr.mxu0 0.0
    %1562 = vmatpush1.msra.mxu0 %v1341
    %1563 = vmatprep.subr.mxu0 0.0
    %1564 = vmatpush1.msra.mxu0 %v1340
    %1565 = vmatprep.subr.mxu0 0.0
    %1566 = vmatpush2.msra.mxu0 0.0
    %1567 = vmatprep.subr.mxu0 0.0
    %1568 = vmatpush2.msra.mxu0 0.0
    %1569 = vmatprep.subr.mxu0 0.0
    %1570 = vmatpush2.msra.mxu0 0.0
    %1571 = vmatprep.subr.mxu0 0.0
    %1572 = vmatpush2.msra.mxu0 0.0
    %1573 = vmatprep.subr.mxu0 0.0
    %1574 = vmatpush2.msra.mxu0 0.0
    %1575 = vmatprep.subr.mxu0 0.0
    %1576 = vmatpush2.msra.mxu0 0.0
    %1577 = vmatprep.subr.mxu0 0.0
    %1578 = vmatpush2.msra.mxu0 0.0
    %1579 = vmatprep.subr.mxu0 0.0
    %1580 = vmatpush2.msra.mxu0 0.0
    %1581 = vmatprep.subr.mxu0 0.0
    %1582 = vmatpush2.msra.mxu0 0.0
    %1583 = vmatprep.subr.mxu0 0.0
    %1584 = vmatpush2.msra.mxu0 0.0
    %1585 = vmatprep.subr.mxu0 0.0
    %1586 = vmatpush2.msra.mxu0 0.0
    %1587 = vmatprep.subr.mxu0 0.0
    %1588 = vmatpush2.msra.mxu0 0.0
    %1589 = vmatprep.subr.mxu0 0.0
    %1590 = vmatpush2.msra.mxu0 0.0
    %1591 = vmatprep.subr.mxu0 0.0
    %1592 = vmatpush2.msra.mxu0 0.0
    %1593 = vmatprep.subr.mxu0 0.0
    %1594 = vmatpush2.msra.mxu0 0.0
    %1595 = vmatprep.subr.mxu0 0.0
    %1596 = vmatpush2.msra.mxu0 0.0
    %1597 = vmatprep.mubr.f32.mxu0 0.0
    %1598 = vmatmul.mubr.f32.gmra.mxu0 %v1531
    %v1599 = vpop.f32.mrf.mxu0
    %v1600 = vadd.f32 0.0, %v1599
    %v1601 = vpop.f32.mrf.mxu0
    %1602 = vdwg.mxu0
    %v1603 = vadd.f32 %v1529, %v1600
    %v1604 = vrot.slane %v1330, 3
    %v1605 = vsel %vm114, %v1604, 0
    %1607 = vmatprep.subr.mxu0 0.0
    %1608 = vmatpush1.msra.mxu0 0.0
    %1609 = vmatprep.subr.mxu0 0.0
    %1610 = vmatpush1.msra.mxu0 0.0
    %1611 = vmatprep.subr.mxu0 0.0
    %1612 = vmatpush1.msra.mxu0 0.0
    %1613 = vmatprep.subr.mxu0 0.0
    %1614 = vmatpush1.msra.mxu0 0.0
    %1615 = vmatprep.subr.mxu0 0.0
    %1616 = vmatpush1.msra.mxu0 0.0
    %1617 = vmatprep.subr.mxu0 0.0
    %1618 = vmatpush1.msra.mxu0 0.0
    %1619 = vmatprep.subr.mxu0 0.0
    %1620 = vmatpush1.msra.mxu0 0.0
    %1621 = vmatprep.subr.mxu0 0.0
    %1622 = vmatpush1.msra.mxu0 0.0
    %1623 = vmatprep.subr.mxu0 0.0
    %1624 = vmatpush1.msra.mxu0 0.0
    %1625 = vmatprep.subr.mxu0 0.0
    %1626 = vmatpush1.msra.mxu0 0.0
    %1627 = vmatprep.subr.mxu0 0.0
    %1628 = vmatpush1.msra.mxu0 0.0
    %1629 = vmatprep.subr.mxu0 0.0
    %1630 = vmatpush1.msra.mxu0 0.0
    %1631 = vmatprep.subr.mxu0 0.0
    %1632 = vmatpush1.msra.mxu0 %v1347
    %1633 = vmatprep.subr.mxu0 0.0
    %1634 = vmatpush1.msra.mxu0 %v1346
    %1635 = vmatprep.subr.mxu0 0.0
    %1636 = vmatpush1.msra.mxu0 %v1345
    %1637 = vmatprep.subr.mxu0 0.0
    %1638 = vmatpush1.msra.mxu0 %v1344
    %1639 = vmatprep.subr.mxu0 0.0
    %1640 = vmatpush2.msra.mxu0 0.0
    %1641 = vmatprep.subr.mxu0 0.0
    %1642 = vmatpush2.msra.mxu0 0.0
    %1643 = vmatprep.subr.mxu0 0.0
    %1644 = vmatpush2.msra.mxu0 0.0
    %1645 = vmatprep.subr.mxu0 0.0
    %1646 = vmatpush2.msra.mxu0 0.0
    %1647 = vmatprep.subr.mxu0 0.0
    %1648 = vmatpush2.msra.mxu0 0.0
    %1649 = vmatprep.subr.mxu0 0.0
    %1650 = vmatpush2.msra.mxu0 0.0
    %1651 = vmatprep.subr.mxu0 0.0
    %1652 = vmatpush2.msra.mxu0 0.0
    %1653 = vmatprep.subr.mxu0 0.0
    %1654 = vmatpush2.msra.mxu0 0.0
    %1655 = vmatprep.subr.mxu0 0.0
    %1656 = vmatpush2.msra.mxu0 0.0
    %1657 = vmatprep.subr.mxu0 0.0
    %1658 = vmatpush2.msra.mxu0 0.0
    %1659 = vmatprep.subr.mxu0 0.0
    %1660 = vmatpush2.msra.mxu0 0.0
    %1661 = vmatprep.subr.mxu0 0.0
    %1662 = vmatpush2.msra.mxu0 0.0
    %1663 = vmatprep.subr.mxu0 0.0
    %1664 = vmatpush2.msra.mxu0 0.0
    %1665 = vmatprep.subr.mxu0 0.0
    %1666 = vmatpush2.msra.mxu0 0.0
    %1667 = vmatprep.subr.mxu0 0.0
    %1668 = vmatpush2.msra.mxu0 0.0
    %1669 = vmatprep.subr.mxu0 0.0
    %1670 = vmatpush2.msra.mxu0 0.0
    %1671 = vmatprep.mubr.f32.mxu0 0.0
    %1672 = vmatmul.mubr.f32.gmra.mxu0 %v1605
    %v1673 = vpop.f32.mrf.mxu0
    %v1674 = vadd.f32 0.0, %v1673
    %v1675 = vpop.f32.mrf.mxu0
    %1676 = vdwg.mxu0
    %v1677 = vadd.f32 %v1603, %v1674
    %v1678 = vrot.slane %v1330, 4
    %v1679 = vsel %vm114, %v1678, 0
    %1681 = vmatprep.subr.mxu0 0.0
    %1682 = vmatpush1.msra.mxu0 0.0
    %1683 = vmatprep.subr.mxu0 0.0
    %1684 = vmatpush1.msra.mxu0 0.0
    %1685 = vmatprep.subr.mxu0 0.0
    %1686 = vmatpush1.msra.mxu0 0.0
    %1687 = vmatprep.subr.mxu0 0.0
    %1688 = vmatpush1.msra.mxu0 0.0
    %1689 = vmatprep.subr.mxu0 0.0
    %1690 = vmatpush1.msra.mxu0 0.0
    %1691 = vmatprep.subr.mxu0 0.0
    %1692 = vmatpush1.msra.mxu0 0.0
    %1693 = vmatprep.subr.mxu0 0.0
    %1694 = vmatpush1.msra.mxu0 0.0
    %1695 = vmatprep.subr.mxu0 0.0
    %1696 = vmatpush1.msra.mxu0 0.0
    %1697 = vmatprep.subr.mxu0 0.0
    %1698 = vmatpush1.msra.mxu0 0.0
    %1699 = vmatprep.subr.mxu0 0.0
    %1700 = vmatpush1.msra.mxu0 0.0
    %1701 = vmatprep.subr.mxu0 0.0
    %1702 = vmatpush1.msra.mxu0 0.0
    %1703 = vmatprep.subr.mxu0 0.0
    %1704 = vmatpush1.msra.mxu0 0.0
    %1705 = vmatprep.subr.mxu0 0.0
    %1706 = vmatpush1.msra.mxu0 %v1351
    %1707 = vmatprep.subr.mxu0 0.0
    %1708 = vmatpush1.msra.mxu0 %v1350
    %1709 = vmatprep.subr.mxu0 0.0
    %1710 = vmatpush1.msra.mxu0 %v1349
    %1711 = vmatprep.subr.mxu0 0.0
    %1712 = vmatpush1.msra.mxu0 %v1348
    %1713 = vmatprep.subr.mxu0 0.0
    %1714 = vmatpush2.msra.mxu0 0.0
    %1715 = vmatprep.subr.mxu0 0.0
    %1716 = vmatpush2.msra.mxu0 0.0
    %1717 = vmatprep.subr.mxu0 0.0
    %1718 = vmatpush2.msra.mxu0 0.0
    %1719 = vmatprep.subr.mxu0 0.0
    %1720 = vmatpush2.msra.mxu0 0.0
    %1721 = vmatprep.subr.mxu0 0.0
    %1722 = vmatpush2.msra.mxu0 0.0
    %1723 = vmatprep.subr.mxu0 0.0
    %1724 = vmatpush2.msra.mxu0 0.0
    %1725 = vmatprep.subr.mxu0 0.0
    %1726 = vmatpush2.msra.mxu0 0.0
    %1727 = vmatprep.subr.mxu0 0.0
    %1728 = vmatpush2.msra.mxu0 0.0
    %1729 = vmatprep.subr.mxu0 0.0
    %1730 = vmatpush2.msra.mxu0 0.0
    %1731 = vmatprep.subr.mxu0 0.0
    %1732 = vmatpush2.msra.mxu0 0.0
    %1733 = vmatprep.subr.mxu0 0.0
    %1734 = vmatpush2.msra.mxu0 0.0
    %1735 = vmatprep.subr.mxu0 0.0
    %1736 = vmatpush2.msra.mxu0 0.0
    %1737 = vmatprep.subr.mxu0 0.0
    %1738 = vmatpush2.msra.mxu0 0.0
    %1739 = vmatprep.subr.mxu0 0.0
    %1740 = vmatpush2.msra.mxu0 0.0
    %1741 = vmatprep.subr.mxu0 0.0
    %1742 = vmatpush2.msra.mxu0 0.0
    %1743 = vmatprep.subr.mxu0 0.0
    %1744 = vmatpush2.msra.mxu0 0.0
    %1745 = vmatprep.mubr.f32.mxu0 0.0
    %1746 = vmatmul.mubr.f32.gmra.mxu0 %v1679
    %v1747 = vpop.f32.mrf.mxu0
    %v1748 = vadd.f32 0.0, %v1747
    %v1749 = vpop.f32.mrf.mxu0
    %1750 = vdwg.mxu0
    %v1751 = vadd.f32 %v1677, %v1748
    %v1752 = vrot.slane %v1330, 5
    %v1753 = vsel %vm114, %v1752, 0
    %1755 = vmatprep.subr.mxu0 0.0
    %1756 = vmatpush1.msra.mxu0 0.0
    %1757 = vmatprep.subr.mxu0 0.0
    %1758 = vmatpush1.msra.mxu0 0.0
    %1759 = vmatprep.subr.mxu0 0.0
    %1760 = vmatpush1.msra.mxu0 0.0
    %1761 = vmatprep.subr.mxu0 0.0
    %1762 = vmatpush1.msra.mxu0 0.0
    %1763 = vmatprep.subr.mxu0 0.0
    %1764 = vmatpush1.msra.mxu0 0.0
    %1765 = vmatprep.subr.mxu0 0.0
    %1766 = vmatpush1.msra.mxu0 0.0
    %1767 = vmatprep.subr.mxu0 0.0
    %1768 = vmatpush1.msra.mxu0 0.0
    %1769 = vmatprep.subr.mxu0 0.0
    %1770 = vmatpush1.msra.mxu0 0.0
    %1771 = vmatprep.subr.mxu0 0.0
    %1772 = vmatpush1.msra.mxu0 0.0
    %1773 = vmatprep.subr.mxu0 0.0
    %1774 = vmatpush1.msra.mxu0 0.0
    %1775 = vmatprep.subr.mxu0 0.0
    %1776 = vmatpush1.msra.mxu0 0.0
    %1777 = vmatprep.subr.mxu0 0.0
    %1778 = vmatpush1.msra.mxu0 0.0
    %1779 = vmatprep.subr.mxu0 0.0
    %1780 = vmatpush1.msra.mxu0 %v1355
    %1781 = vmatprep.subr.mxu0 0.0
    %1782 = vmatpush1.msra.mxu0 %v1354
    %1783 = vmatprep.subr.mxu0 0.0
    %1784 = vmatpush1.msra.mxu0 %v1353
    %1785 = vmatprep.subr.mxu0 0.0
    %1786 = vmatpush1.msra.mxu0 %v1352
    %1787 = vmatprep.subr.mxu0 0.0
    %1788 = vmatpush2.msra.mxu0 0.0
    %1789 = vmatprep.subr.mxu0 0.0
    %1790 = vmatpush2.msra.mxu0 0.0
    %1791 = vmatprep.subr.mxu0 0.0
    %1792 = vmatpush2.msra.mxu0 0.0
    %1793 = vmatprep.subr.mxu0 0.0
    %1794 = vmatpush2.msra.mxu0 0.0
    %1795 = vmatprep.subr.mxu0 0.0
    %1796 = vmatpush2.msra.mxu0 0.0
    %1797 = vmatprep.subr.mxu0 0.0
    %1798 = vmatpush2.msra.mxu0 0.0
    %1799 = vmatprep.subr.mxu0 0.0
    %1800 = vmatpush2.msra.mxu0 0.0
    %1801 = vmatprep.subr.mxu0 0.0
    %1802 = vmatpush2.msra.mxu0 0.0
    %1803 = vmatprep.subr.mxu0 0.0
    %1804 = vmatpush2.msra.mxu0 0.0
    %1805 = vmatprep.subr.mxu0 0.0
    %1806 = vmatpush2.msra.mxu0 0.0
    %1807 = vmatprep.subr.mxu0 0.0
    %1808 = vmatpush2.msra.mxu0 0.0
    %1809 = vmatprep.subr.mxu0 0.0
    %1810 = vmatpush2.msra.mxu0 0.0
    %1811 = vmatprep.subr.mxu0 0.0
    %1812 = vmatpush2.msra.mxu0 0.0
    %1813 = vmatprep.subr.mxu0 0.0
    %1814 = vmatpush2.msra.mxu0 0.0
    %1815 = vmatprep.subr.mxu0 0.0
    %1816 = vmatpush2.msra.mxu0 0.0
    %1817 = vmatprep.subr.mxu0 0.0
    %1818 = vmatpush2.msra.mxu0 0.0
    %1819 = vmatprep.mubr.f32.mxu0 0.0
    %1820 = vmatmul.mubr.f32.gmra.mxu0 %v1753
    %v1821 = vpop.f32.mrf.mxu0
    %v1822 = vadd.f32 0.0, %v1821
    %v1823 = vpop.f32.mrf.mxu0
    %1824 = vdwg.mxu0
    %v1825 = vadd.f32 %v1751, %v1822
    %v1826 = vrot.slane %v1330, 6
    %v1827 = vsel %vm114, %v1826, 0
    %1829 = vmatprep.subr.mxu0 0.0
    %1830 = vmatpush1.msra.mxu0 0.0
    %1831 = vmatprep.subr.mxu0 0.0
    %1832 = vmatpush1.msra.mxu0 0.0
    %1833 = vmatprep.subr.mxu0 0.0
    %1834 = vmatpush1.msra.mxu0 0.0
    %1835 = vmatprep.subr.mxu0 0.0
    %1836 = vmatpush1.msra.mxu0 0.0
    %1837 = vmatprep.subr.mxu0 0.0
    %1838 = vmatpush1.msra.mxu0 0.0
    %1839 = vmatprep.subr.mxu0 0.0
    %1840 = vmatpush1.msra.mxu0 0.0
    %1841 = vmatprep.subr.mxu0 0.0
    %1842 = vmatpush1.msra.mxu0 0.0
    %1843 = vmatprep.subr.mxu0 0.0
    %1844 = vmatpush1.msra.mxu0 0.0
    %1845 = vmatprep.subr.mxu0 0.0
    %1846 = vmatpush1.msra.mxu0 0.0
    %1847 = vmatprep.subr.mxu0 0.0
    %1848 = vmatpush1.msra.mxu0 0.0
    %1849 = vmatprep.subr.mxu0 0.0
    %1850 = vmatpush1.msra.mxu0 0.0
    %1851 = vmatprep.subr.mxu0 0.0
    %1852 = vmatpush1.msra.mxu0 0.0
    %1853 = vmatprep.subr.mxu0 0.0
    %1854 = vmatpush1.msra.mxu0 %v1359
    %1855 = vmatprep.subr.mxu0 0.0
    %1856 = vmatpush1.msra.mxu0 %v1358
    %1857 = vmatprep.subr.mxu0 0.0
    %1858 = vmatpush1.msra.mxu0 %v1357
    %1859 = vmatprep.subr.mxu0 0.0
    %1860 = vmatpush1.msra.mxu0 %v1356
    %1861 = vmatprep.subr.mxu0 0.0
    %1862 = vmatpush2.msra.mxu0 0.0
    %1863 = vmatprep.subr.mxu0 0.0
    %1864 = vmatpush2.msra.mxu0 0.0
    %1865 = vmatprep.subr.mxu0 0.0
    %1866 = vmatpush2.msra.mxu0 0.0
    %1867 = vmatprep.subr.mxu0 0.0
    %1868 = vmatpush2.msra.mxu0 0.0
    %1869 = vmatprep.subr.mxu0 0.0
    %1870 = vmatpush2.msra.mxu0 0.0
    %1871 = vmatprep.subr.mxu0 0.0
    %1872 = vmatpush2.msra.mxu0 0.0
    %1873 = vmatprep.subr.mxu0 0.0
    %1874 = vmatpush2.msra.mxu0 0.0
    %1875 = vmatprep.subr.mxu0 0.0
    %1876 = vmatpush2.msra.mxu0 0.0
    %1877 = vmatprep.subr.mxu0 0.0
    %1878 = vmatpush2.msra.mxu0 0.0
    %1879 = vmatprep.subr.mxu0 0.0
    %1880 = vmatpush2.msra.mxu0 0.0
    %1881 = vmatprep.subr.mxu0 0.0
    %1882 = vmatpush2.msra.mxu0 0.0
    %1883 = vmatprep.subr.mxu0 0.0
    %1884 = vmatpush2.msra.mxu0 0.0
    %1885 = vmatprep.subr.mxu0 0.0
    %1886 = vmatpush2.msra.mxu0 0.0
    %1887 = vmatprep.subr.mxu0 0.0
    %1888 = vmatpush2.msra.mxu0 0.0
    %1889 = vmatprep.subr.mxu0 0.0
    %1890 = vmatpush2.msra.mxu0 0.0
    %1891 = vmatprep.subr.mxu0 0.0
    %1892 = vmatpush2.msra.mxu0 0.0
    %1893 = vmatprep.mubr.f32.mxu0 0.0
    %1894 = vmatmul.mubr.f32.gmra.mxu0 %v1827
    %v1895 = vpop.f32.mrf.mxu0
    %v1896 = vadd.f32 0.0, %v1895
    %v1897 = vpop.f32.mrf.mxu0
    %1898 = vdwg.mxu0
    %v1899 = vadd.f32 %v1825, %v1896
    %v1900 = vrot.slane %v1330, 7
    %v1901 = vsel %vm114, %v1900, 0
    %1903 = vmatprep.subr.mxu0 0.0
    %1904 = vmatpush1.msra.mxu0 0.0
    %1905 = vmatprep.subr.mxu0 0.0
    %1906 = vmatpush1.msra.mxu0 0.0
    %1907 = vmatprep.subr.mxu0 0.0
    %1908 = vmatpush1.msra.mxu0 0.0
    %1909 = vmatprep.subr.mxu0 0.0
    %1910 = vmatpush1.msra.mxu0 0.0
    %1911 = vmatprep.subr.mxu0 0.0
    %1912 = vmatpush1.msra.mxu0 0.0
    %1913 = vmatprep.subr.mxu0 0.0
    %1914 = vmatpush1.msra.mxu0 0.0
    %1915 = vmatprep.subr.mxu0 0.0
    %1916 = vmatpush1.msra.mxu0 0.0
    %1917 = vmatprep.subr.mxu0 0.0
    %1918 = vmatpush1.msra.mxu0 0.0
    %1919 = vmatprep.subr.mxu0 0.0
    %1920 = vmatpush1.msra.mxu0 0.0
    %1921 = vmatprep.subr.mxu0 0.0
    %1922 = vmatpush1.msra.mxu0 0.0
    %1923 = vmatprep.subr.mxu0 0.0
    %1924 = vmatpush1.msra.mxu0 0.0
    %1925 = vmatprep.subr.mxu0 0.0
    %1926 = vmatpush1.msra.mxu0 0.0
    %1927 = vmatprep.subr.mxu0 0.0
    %1928 = vmatpush1.msra.mxu0 %v1363
    %1929 = vmatprep.subr.mxu0 0.0
    %1930 = vmatpush1.msra.mxu0 %v1362
    %1931 = vmatprep.subr.mxu0 0.0
    %1932 = vmatpush1.msra.mxu0 %v1361
    %1933 = vmatprep.subr.mxu0 0.0
    %1934 = vmatpush1.msra.mxu0 %v1360
    %1935 = vmatprep.subr.mxu0 0.0
    %1936 = vmatpush2.msra.mxu0 0.0
    %1937 = vmatprep.subr.mxu0 0.0
    %1938 = vmatpush2.msra.mxu0 0.0
    %1939 = vmatprep.subr.mxu0 0.0
    %1940 = vmatpush2.msra.mxu0 0.0
    %1941 = vmatprep.subr.mxu0 0.0
    %1942 = vmatpush2.msra.mxu0 0.0
    %1943 = vmatprep.subr.mxu0 0.0
    %1944 = vmatpush2.msra.mxu0 0.0
    %1945 = vmatprep.subr.mxu0 0.0
    %1946 = vmatpush2.msra.mxu0 0.0
    %1947 = vmatprep.subr.mxu0 0.0
    %1948 = vmatpush2.msra.mxu0 0.0
    %1949 = vmatprep.subr.mxu0 0.0
    %1950 = vmatpush2.msra.mxu0 0.0
    %1951 = vmatprep.subr.mxu0 0.0
    %1952 = vmatpush2.msra.mxu0 0.0
    %1953 = vmatprep.subr.mxu0 0.0
    %1954 = vmatpush2.msra.mxu0 0.0
    %1955 = vmatprep.subr.mxu0 0.0
    %1956 = vmatpush2.msra.mxu0 0.0
    %1957 = vmatprep.subr.mxu0 0.0
    %1958 = vmatpush2.msra.mxu0 0.0
    %1959 = vmatprep.subr.mxu0 0.0
    %1960 = vmatpush2.msra.mxu0 0.0
    %1961 = vmatprep.subr.mxu0 0.0
    %1962 = vmatpush2.msra.mxu0 0.0
    %1963 = vmatprep.subr.mxu0 0.0
    %1964 = vmatpush2.msra.mxu0 0.0
    %1965 = vmatprep.subr.mxu0 0.0
    %1966 = vmatpush2.msra.mxu0 0.0
    %1967 = vmatprep.mubr.f32.mxu0 0.0
    %1968 = vmatmul.mubr.f32.gmra.mxu0 %v1901
    %v1969 = vpop.f32.mrf.mxu0
    %v1970 = vadd.f32 0.0, %v1969
    %v1971 = vpop.f32.mrf.mxu0
    %1972 = vdwg.mxu0
    %v1973 = vadd.f32 %v1899, %v1970
    %v1974 = vmax.f32 %v1973, 0.0
    %1975 = vmatprep.subr.mxu0 0.0
    %1976 = vmatpush1.msra.mxu0 %v1380
    %1977 = vmatprep.subr.mxu0 0.0
    %1978 = vmatpush1.msra.mxu0 %v1379
    %1979 = vmatprep.subr.mxu0 0.0
    %1980 = vmatpush1.msra.mxu0 %v1378
    %1981 = vmatprep.subr.mxu0 0.0
    %1982 = vmatpush1.msra.mxu0 %v1377
    %1983 = vmatprep.subr.mxu0 0.0
    %1984 = vmatpush1.msra.mxu0 %v1376
    %1985 = vmatprep.subr.mxu0 0.0
    %1986 = vmatpush1.msra.mxu0 %v1375
    %1987 = vmatprep.subr.mxu0 0.0
    %1988 = vmatpush1.msra.mxu0 %v1374
    %1989 = vmatprep.subr.mxu0 0.0
    %1990 = vmatpush1.msra.mxu0 %v1373
    %1991 = vmatprep.subr.mxu0 0.0
    %1992 = vmatpush1.msra.mxu0 %v1372
    %1993 = vmatprep.subr.mxu0 0.0
    %1994 = vmatpush1.msra.mxu0 %v1371
    %1995 = vmatprep.subr.mxu0 0.0
    %1996 = vmatpush1.msra.mxu0 %v1370
    %1997 = vmatprep.subr.mxu0 0.0
    %1998 = vmatpush1.msra.mxu0 %v1369
    %1999 = vmatprep.subr.mxu0 0.0
    %2000 = vmatpush1.msra.mxu0 %v1368
    %2001 = vmatprep.subr.mxu0 0.0
    %2002 = vmatpush1.msra.mxu0 %v1367
    %2003 = vmatprep.subr.mxu0 0.0
    %2004 = vmatpush1.msra.mxu0 %v1366
    %2005 = vmatprep.subr.mxu0 0.0
    %2006 = vmatpush1.msra.mxu0 %v1365
    %2007 = vmatprep.subr.mxu0 0.0
    %2008 = vmatpush2.msra.mxu0 0.0
    %2009 = vmatprep.subr.mxu0 0.0
    %2010 = vmatpush2.msra.mxu0 0.0
    %2011 = vmatprep.subr.mxu0 0.0
    %2012 = vmatpush2.msra.mxu0 0.0
    %2013 = vmatprep.subr.mxu0 0.0
    %2014 = vmatpush2.msra.mxu0 0.0
    %2015 = vmatprep.subr.mxu0 0.0
    %2016 = vmatpush2.msra.mxu0 0.0
    %2017 = vmatprep.subr.mxu0 0.0
    %2018 = vmatpush2.msra.mxu0 0.0
    %2019 = vmatprep.subr.mxu0 0.0
    %2020 = vmatpush2.msra.mxu0 0.0
    %2021 = vmatprep.subr.mxu0 0.0
    %2022 = vmatpush2.msra.mxu0 0.0
    %2023 = vmatprep.subr.mxu0 0.0
    %2024 = vmatpush2.msra.mxu0 0.0
    %2025 = vmatprep.subr.mxu0 0.0
    %2026 = vmatpush2.msra.mxu0 0.0
    %2027 = vmatprep.subr.mxu0 0.0
    %2028 = vmatpush2.msra.mxu0 0.0
    %2029 = vmatprep.subr.mxu0 0.0
    %2030 = vmatpush2.msra.mxu0 0.0
    %2031 = vmatprep.subr.mxu0 0.0
    %2032 = vmatpush2.msra.mxu0 0.0
    %2033 = vmatprep.subr.mxu0 0.0
    %2034 = vmatpush2.msra.mxu0 0.0
    %2035 = vmatprep.subr.mxu0 0.0
    %2036 = vmatpush2.msra.mxu0 0.0
    %2037 = vmatprep.subr.mxu0 0.0
    %2038 = vmatpush2.msra.mxu0 0.0
    %2039 = vmatprep.mubr.f32.mxu0 0.0
    %2040 = vmatmul.mubr.f32.gmra.mxu0 %v1974
    %v2041 = vpop.f32.mrf.mxu0
    %v2042 = vadd.f32 %v1381, %v2041
    %v2043 = vpop.f32.mrf.mxu0
    %2044 = vdwg.mxu0
    %vm2045 = vcmask 8192
    %2046 = vst.msk [vmem:[#allocation9] sm:$0x1] %vm2045, %v2042
    %v2048 = vsel %vm114, %v1331, 0
    %2050 = vmatprep.subr.mxu0 0.0
    %2051 = vmatpush1.msra.mxu0 0.0
    %2052 = vmatprep.subr.mxu0 0.0
    %2053 = vmatpush1.msra.mxu0 0.0
    %2054 = vmatprep.subr.mxu0 0.0
    %2055 = vmatpush1.msra.mxu0 0.0
    %2056 = vmatprep.subr.mxu0 0.0
    %2057 = vmatpush1.msra.mxu0 0.0
    %2058 = vmatprep.subr.mxu0 0.0
    %2059 = vmatpush1.msra.mxu0 0.0
    %2060 = vmatprep.subr.mxu0 0.0
    %2061 = vmatpush1.msra.mxu0 0.0
    %2062 = vmatprep.subr.mxu0 0.0
    %2063 = vmatpush1.msra.mxu0 0.0
    %2064 = vmatprep.subr.mxu0 0.0
    %2065 = vmatpush1.msra.mxu0 0.0
    %2066 = vmatprep.subr.mxu0 0.0
    %2067 = vmatpush1.msra.mxu0 0.0
    %2068 = vmatprep.subr.mxu0 0.0
    %2069 = vmatpush1.msra.mxu0 0.0
    %2070 = vmatprep.subr.mxu0 0.0
    %2071 = vmatpush1.msra.mxu0 0.0
    %2072 = vmatprep.subr.mxu0 0.0
    %2073 = vmatpush1.msra.mxu0 0.0
    %2074 = vmatprep.subr.mxu0 0.0
    %2075 = vmatpush1.msra.mxu0 %v1335
    %2076 = vmatprep.subr.mxu0 0.0
    %2077 = vmatpush1.msra.mxu0 %v1334
    %2078 = vmatprep.subr.mxu0 0.0
    %2079 = vmatpush1.msra.mxu0 %v1333
    %2080 = vmatprep.subr.mxu0 0.0
    %2081 = vmatpush1.msra.mxu0 %v1332
    %2082 = vmatprep.subr.mxu0 0.0
    %2083 = vmatpush2.msra.mxu0 0.0
    %2084 = vmatprep.subr.mxu0 0.0
    %2085 = vmatpush2.msra.mxu0 0.0
    %2086 = vmatprep.subr.mxu0 0.0
    %2087 = vmatpush2.msra.mxu0 0.0
    %2088 = vmatprep.subr.mxu0 0.0
    %2089 = vmatpush2.msra.mxu0 0.0
    %2090 = vmatprep.subr.mxu0 0.0
    %2091 = vmatpush2.msra.mxu0 0.0
    %2092 = vmatprep.subr.mxu0 0.0
    %2093 = vmatpush2.msra.mxu0 0.0
    %2094 = vmatprep.subr.mxu0 0.0
    %2095 = vmatpush2.msra.mxu0 0.0
    %2096 = vmatprep.subr.mxu0 0.0
    %2097 = vmatpush2.msra.mxu0 0.0
    %2098 = vmatprep.subr.mxu0 0.0
    %2099 = vmatpush2.msra.mxu0 0.0
    %2100 = vmatprep.subr.mxu0 0.0
    %2101 = vmatpush2.msra.mxu0 0.0
    %2102 = vmatprep.subr.mxu0 0.0
    %2103 = vmatpush2.msra.mxu0 0.0
    %2104 = vmatprep.subr.mxu0 0.0
    %2105 = vmatpush2.msra.mxu0 0.0
    %2106 = vmatprep.subr.mxu0 0.0
    %2107 = vmatpush2.msra.mxu0 0.0
    %2108 = vmatprep.subr.mxu0 0.0
    %2109 = vmatpush2.msra.mxu0 0.0
    %2110 = vmatprep.subr.mxu0 0.0
    %2111 = vmatpush2.msra.mxu0 0.0
    %2112 = vmatprep.subr.mxu0 0.0
    %2113 = vmatpush2.msra.mxu0 0.0
    %2114 = vmatprep.mubr.f32.mxu0 0.0
    %2115 = vmatmul.mubr.f32.gmra.mxu0 %v2048
    %v2116 = vpop.f32.mrf.mxu0
    %v2117 = vadd.f32 0.0, %v2116
    %v2118 = vpop.f32.mrf.mxu0
    %2119 = vdwg.mxu0
    %v2120 = vadd.f32 %v1364, %v2117
    %v2121 = vrot.slane %v1331, 1
    %v2122 = vsel %vm114, %v2121, 0
    %2124 = vmatprep.subr.mxu0 0.0
    %2125 = vmatpush1.msra.mxu0 0.0
    %2126 = vmatprep.subr.mxu0 0.0
    %2127 = vmatpush1.msra.mxu0 0.0
    %2128 = vmatprep.subr.mxu0 0.0
    %2129 = vmatpush1.msra.mxu0 0.0
    %2130 = vmatprep.subr.mxu0 0.0
    %2131 = vmatpush1.msra.mxu0 0.0
    %2132 = vmatprep.subr.mxu0 0.0
    %2133 = vmatpush1.msra.mxu0 0.0
    %2134 = vmatprep.subr.mxu0 0.0
    %2135 = vmatpush1.msra.mxu0 0.0
    %2136 = vmatprep.subr.mxu0 0.0
    %2137 = vmatpush1.msra.mxu0 0.0
    %2138 = vmatprep.subr.mxu0 0.0
    %2139 = vmatpush1.msra.mxu0 0.0
    %2140 = vmatprep.subr.mxu0 0.0
    %2141 = vmatpush1.msra.mxu0 0.0
    %2142 = vmatprep.subr.mxu0 0.0
    %2143 = vmatpush1.msra.mxu0 0.0
    %2144 = vmatprep.subr.mxu0 0.0
    %2145 = vmatpush1.msra.mxu0 0.0
    %2146 = vmatprep.subr.mxu0 0.0
    %2147 = vmatpush1.msra.mxu0 0.0
    %2148 = vmatprep.subr.mxu0 0.0
    %2149 = vmatpush1.msra.mxu0 %v1339
    %2150 = vmatprep.subr.mxu0 0.0
    %2151 = vmatpush1.msra.mxu0 %v1338
    %2152 = vmatprep.subr.mxu0 0.0
    %2153 = vmatpush1.msra.mxu0 %v1337
    %2154 = vmatprep.subr.mxu0 0.0
    %2155 = vmatpush1.msra.mxu0 %v1336
    %2156 = vmatprep.subr.mxu0 0.0
    %2157 = vmatpush2.msra.mxu0 0.0
    %2158 = vmatprep.subr.mxu0 0.0
    %2159 = vmatpush2.msra.mxu0 0.0
    %2160 = vmatprep.subr.mxu0 0.0
    %2161 = vmatpush2.msra.mxu0 0.0
    %2162 = vmatprep.subr.mxu0 0.0
    %2163 = vmatpush2.msra.mxu0 0.0
    %2164 = vmatprep.subr.mxu0 0.0
    %2165 = vmatpush2.msra.mxu0 0.0
    %2166 = vmatprep.subr.mxu0 0.0
    %2167 = vmatpush2.msra.mxu0 0.0
    %2168 = vmatprep.subr.mxu0 0.0
    %2169 = vmatpush2.msra.mxu0 0.0
    %2170 = vmatprep.subr.mxu0 0.0
    %2171 = vmatpush2.msra.mxu0 0.0
    %2172 = vmatprep.subr.mxu0 0.0
    %2173 = vmatpush2.msra.mxu0 0.0
    %2174 = vmatprep.subr.mxu0 0.0
    %2175 = vmatpush2.msra.mxu0 0.0
    %2176 = vmatprep.subr.mxu0 0.0
    %2177 = vmatpush2.msra.mxu0 0.0
    %2178 = vmatprep.subr.mxu0 0.0
    %2179 = vmatpush2.msra.mxu0 0.0
    %2180 = vmatprep.subr.mxu0 0.0
    %2181 = vmatpush2.msra.mxu0 0.0
    %2182 = vmatprep.subr.mxu0 0.0
    %2183 = vmatpush2.msra.mxu0 0.0
    %2184 = vmatprep.subr.mxu0 0.0
    %2185 = vmatpush2.msra.mxu0 0.0
    %2186 = vmatprep.subr.mxu0 0.0
    %2187 = vmatpush2.msra.mxu0 0.0
    %2188 = vmatprep.mubr.f32.mxu0 0.0
    %2189 = vmatmul.mubr.f32.gmra.mxu0 %v2122
    %v2190 = vpop.f32.mrf.mxu0
    %v2191 = vadd.f32 0.0, %v2190
    %v2192 = vpop.f32.mrf.mxu0
    %2193 = vdwg.mxu0
    %v2194 = vadd.f32 %v2120, %v2191
    %v2195 = vrot.slane %v1331, 2
    %v2196 = vsel %vm114, %v2195, 0
    %2198 = vmatprep.subr.mxu0 0.0
    %2199 = vmatpush1.msra.mxu0 0.0
    %2200 = vmatprep.subr.mxu0 0.0
    %2201 = vmatpush1.msra.mxu0 0.0
    %2202 = vmatprep.subr.mxu0 0.0
    %2203 = vmatpush1.msra.mxu0 0.0
    %2204 = vmatprep.subr.mxu0 0.0
    %2205 = vmatpush1.msra.mxu0 0.0
    %2206 = vmatprep.subr.mxu0 0.0
    %2207 = vmatpush1.msra.mxu0 0.0
    %2208 = vmatprep.subr.mxu0 0.0
    %2209 = vmatpush1.msra.mxu0 0.0
    %2210 = vmatprep.subr.mxu0 0.0
    %2211 = vmatpush1.msra.mxu0 0.0
    %2212 = vmatprep.subr.mxu0 0.0
    %2213 = vmatpush1.msra.mxu0 0.0
    %2214 = vmatprep.subr.mxu0 0.0
    %2215 = vmatpush1.msra.mxu0 0.0
    %2216 = vmatprep.subr.mxu0 0.0
    %2217 = vmatpush1.msra.mxu0 0.0
    %2218 = vmatprep.subr.mxu0 0.0
    %2219 = vmatpush1.msra.mxu0 0.0
    %2220 = vmatprep.subr.mxu0 0.0
    %2221 = vmatpush1.msra.mxu0 0.0
    %2222 = vmatprep.subr.mxu0 0.0
    %2223 = vmatpush1.msra.mxu0 %v1343
    %2224 = vmatprep.subr.mxu0 0.0
    %2225 = vmatpush1.msra.mxu0 %v1342
    %2226 = vmatprep.subr.mxu0 0.0
    %2227 = vmatpush1.msra.mxu0 %v1341
    %2228 = vmatprep.subr.mxu0 0.0
    %2229 = vmatpush1.msra.mxu0 %v1340
    %2230 = vmatprep.subr.mxu0 0.0
    %2231 = vmatpush2.msra.mxu0 0.0
    %2232 = vmatprep.subr.mxu0 0.0
    %2233 = vmatpush2.msra.mxu0 0.0
    %2234 = vmatprep.subr.mxu0 0.0
    %2235 = vmatpush2.msra.mxu0 0.0
    %2236 = vmatprep.subr.mxu0 0.0
    %2237 = vmatpush2.msra.mxu0 0.0
    %2238 = vmatprep.subr.mxu0 0.0
    %2239 = vmatpush2.msra.mxu0 0.0
    %2240 = vmatprep.subr.mxu0 0.0
    %2241 = vmatpush2.msra.mxu0 0.0
    %2242 = vmatprep.subr.mxu0 0.0
    %2243 = vmatpush2.msra.mxu0 0.0
    %2244 = vmatprep.subr.mxu0 0.0
    %2245 = vmatpush2.msra.mxu0 0.0
    %2246 = vmatprep.subr.mxu0 0.0
    %2247 = vmatpush2.msra.mxu0 0.0
    %2248 = vmatprep.subr.mxu0 0.0
    %2249 = vmatpush2.msra.mxu0 0.0
    %2250 = vmatprep.subr.mxu0 0.0
    %2251 = vmatpush2.msra.mxu0 0.0
    %2252 = vmatprep.subr.mxu0 0.0
    %2253 = vmatpush2.msra.mxu0 0.0
    %2254 = vmatprep.subr.mxu0 0.0
    %2255 = vmatpush2.msra.mxu0 0.0
    %2256 = vmatprep.subr.mxu0 0.0
    %2257 = vmatpush2.msra.mxu0 0.0
    %2258 = vmatprep.subr.mxu0 0.0
    %2259 = vmatpush2.msra.mxu0 0.0
    %2260 = vmatprep.subr.mxu0 0.0
    %2261 = vmatpush2.msra.mxu0 0.0
    %2262 = vmatprep.mubr.f32.mxu0 0.0
    %2263 = vmatmul.mubr.f32.gmra.mxu0 %v2196
    %v2264 = vpop.f32.mrf.mxu0
    %v2265 = vadd.f32 0.0, %v2264
    %v2266 = vpop.f32.mrf.mxu0
    %2267 = vdwg.mxu0
    %v2268 = vadd.f32 %v2194, %v2265
    %v2269 = vrot.slane %v1331, 3
    %v2270 = vsel %vm114, %v2269, 0
    %2272 = vmatprep.subr.mxu0 0.0
    %2273 = vmatpush1.msra.mxu0 0.0
    %2274 = vmatprep.subr.mxu0 0.0
    %2275 = vmatpush1.msra.mxu0 0.0
    %2276 = vmatprep.subr.mxu0 0.0
    %2277 = vmatpush1.msra.mxu0 0.0
    %2278 = vmatprep.subr.mxu0 0.0
    %2279 = vmatpush1.msra.mxu0 0.0
    %2280 = vmatprep.subr.mxu0 0.0
    %2281 = vmatpush1.msra.mxu0 0.0
    %2282 = vmatprep.subr.mxu0 0.0
    %2283 = vmatpush1.msra.mxu0 0.0
    %2284 = vmatprep.subr.mxu0 0.0
    %2285 = vmatpush1.msra.mxu0 0.0
    %2286 = vmatprep.subr.mxu0 0.0
    %2287 = vmatpush1.msra.mxu0 0.0
    %2288 = vmatprep.subr.mxu0 0.0
    %2289 = vmatpush1.msra.mxu0 0.0
    %2290 = vmatprep.subr.mxu0 0.0
    %2291 = vmatpush1.msra.mxu0 0.0
    %2292 = vmatprep.subr.mxu0 0.0
    %2293 = vmatpush1.msra.mxu0 0.0
    %2294 = vmatprep.subr.mxu0 0.0
    %2295 = vmatpush1.msra.mxu0 0.0
    %2296 = vmatprep.subr.mxu0 0.0
    %2297 = vmatpush1.msra.mxu0 %v1347
    %2298 = vmatprep.subr.mxu0 0.0
    %2299 = vmatpush1.msra.mxu0 %v1346
    %2300 = vmatprep.subr.mxu0 0.0
    %2301 = vmatpush1.msra.mxu0 %v1345
    %2302 = vmatprep.subr.mxu0 0.0
    %2303 = vmatpush1.msra.mxu0 %v1344
    %2304 = vmatprep.subr.mxu0 0.0
    %2305 = vmatpush2.msra.mxu0 0.0
    %2306 = vmatprep.subr.mxu0 0.0
    %2307 = vmatpush2.msra.mxu0 0.0
    %2308 = vmatprep.subr.mxu0 0.0
    %2309 = vmatpush2.msra.mxu0 0.0
    %2310 = vmatprep.subr.mxu0 0.0
    %2311 = vmatpush2.msra.mxu0 0.0
    %2312 = vmatprep.subr.mxu0 0.0
    %2313 = vmatpush2.msra.mxu0 0.0
    %2314 = vmatprep.subr.mxu0 0.0
    %2315 = vmatpush2.msra.mxu0 0.0
    %2316 = vmatprep.subr.mxu0 0.0
    %2317 = vmatpush2.msra.mxu0 0.0
    %2318 = vmatprep.subr.mxu0 0.0
    %2319 = vmatpush2.msra.mxu0 0.0
    %2320 = vmatprep.subr.mxu0 0.0
    %2321 = vmatpush2.msra.mxu0 0.0
    %2322 = vmatprep.subr.mxu0 0.0
    %2323 = vmatpush2.msra.mxu0 0.0
    %2324 = vmatprep.subr.mxu0 0.0
    %2325 = vmatpush2.msra.mxu0 0.0
    %2326 = vmatprep.subr.mxu0 0.0
    %2327 = vmatpush2.msra.mxu0 0.0
    %2328 = vmatprep.subr.mxu0 0.0
    %2329 = vmatpush2.msra.mxu0 0.0
    %2330 = vmatprep.subr.mxu0 0.0
    %2331 = vmatpush2.msra.mxu0 0.0
    %2332 = vmatprep.subr.mxu0 0.0
    %2333 = vmatpush2.msra.mxu0 0.0
    %2334 = vmatprep.subr.mxu0 0.0
    %2335 = vmatpush2.msra.mxu0 0.0
    %2336 = vmatprep.mubr.f32.mxu0 0.0
    %2337 = vmatmul.mubr.f32.gmra.mxu0 %v2270
    %v2338 = vpop.f32.mrf.mxu0
    %v2339 = vadd.f32 0.0, %v2338
    %v2340 = vpop.f32.mrf.mxu0
    %2341 = vdwg.mxu0
    %v2342 = vadd.f32 %v2268, %v2339
    %v2343 = vrot.slane %v1331, 4
    %v2344 = vsel %vm114, %v2343, 0
    %2346 = vmatprep.subr.mxu0 0.0
    %2347 = vmatpush1.msra.mxu0 0.0
    %2348 = vmatprep.subr.mxu0 0.0
    %2349 = vmatpush1.msra.mxu0 0.0
    %2350 = vmatprep.subr.mxu0 0.0
    %2351 = vmatpush1.msra.mxu0 0.0
    %2352 = vmatprep.subr.mxu0 0.0
    %2353 = vmatpush1.msra.mxu0 0.0
    %2354 = vmatprep.subr.mxu0 0.0
    %2355 = vmatpush1.msra.mxu0 0.0
    %2356 = vmatprep.subr.mxu0 0.0
    %2357 = vmatpush1.msra.mxu0 0.0
    %2358 = vmatprep.subr.mxu0 0.0
    %2359 = vmatpush1.msra.mxu0 0.0
    %2360 = vmatprep.subr.mxu0 0.0
    %2361 = vmatpush1.msra.mxu0 0.0
    %2362 = vmatprep.subr.mxu0 0.0
    %2363 = vmatpush1.msra.mxu0 0.0
    %2364 = vmatprep.subr.mxu0 0.0
    %2365 = vmatpush1.msra.mxu0 0.0
    %2366 = vmatprep.subr.mxu0 0.0
    %2367 = vmatpush1.msra.mxu0 0.0
    %2368 = vmatprep.subr.mxu0 0.0
    %2369 = vmatpush1.msra.mxu0 0.0
    %2370 = vmatprep.subr.mxu0 0.0
    %2371 = vmatpush1.msra.mxu0 %v1351
    %2372 = vmatprep.subr.mxu0 0.0
    %2373 = vmatpush1.msra.mxu0 %v1350
    %2374 = vmatprep.subr.mxu0 0.0
    %2375 = vmatpush1.msra.mxu0 %v1349
    %2376 = vmatprep.subr.mxu0 0.0
    %2377 = vmatpush1.msra.mxu0 %v1348
    %2378 = vmatprep.subr.mxu0 0.0
    %2379 = vmatpush2.msra.mxu0 0.0
    %2380 = vmatprep.subr.mxu0 0.0
    %2381 = vmatpush2.msra.mxu0 0.0
    %2382 = vmatprep.subr.mxu0 0.0
    %2383 = vmatpush2.msra.mxu0 0.0
    %2384 = vmatprep.subr.mxu0 0.0
    %2385 = vmatpush2.msra.mxu0 0.0
    %2386 = vmatprep.subr.mxu0 0.0
    %2387 = vmatpush2.msra.mxu0 0.0
    %2388 = vmatprep.subr.mxu0 0.0
    %2389 = vmatpush2.msra.mxu0 0.0
    %2390 = vmatprep.subr.mxu0 0.0
    %2391 = vmatpush2.msra.mxu0 0.0
    %2392 = vmatprep.subr.mxu0 0.0
    %2393 = vmatpush2.msra.mxu0 0.0
    %2394 = vmatprep.subr.mxu0 0.0
    %2395 = vmatpush2.msra.mxu0 0.0
    %2396 = vmatprep.subr.mxu0 0.0
    %2397 = vmatpush2.msra.mxu0 0.0
    %2398 = vmatprep.subr.mxu0 0.0
    %2399 = vmatpush2.msra.mxu0 0.0
    %2400 = vmatprep.subr.mxu0 0.0
    %2401 = vmatpush2.msra.mxu0 0.0
    %2402 = vmatprep.subr.mxu0 0.0
    %2403 = vmatpush2.msra.mxu0 0.0
    %2404 = vmatprep.subr.mxu0 0.0
    %2405 = vmatpush2.msra.mxu0 0.0
    %2406 = vmatprep.subr.mxu0 0.0
    %2407 = vmatpush2.msra.mxu0 0.0
    %2408 = vmatprep.subr.mxu0 0.0
    %2409 = vmatpush2.msra.mxu0 0.0
    %2410 = vmatprep.mubr.f32.mxu0 0.0
    %2411 = vmatmul.mubr.f32.gmra.mxu0 %v2344
    %v2412 = vpop.f32.mrf.mxu0
    %v2413 = vadd.f32 0.0, %v2412
    %v2414 = vpop.f32.mrf.mxu0
    %2415 = vdwg.mxu0
    %v2416 = vadd.f32 %v2342, %v2413
    %v2417 = vrot.slane %v1331, 5
    %v2418 = vsel %vm114, %v2417, 0
    %2420 = vmatprep.subr.mxu0 0.0
    %2421 = vmatpush1.msra.mxu0 0.0
    %2422 = vmatprep.subr.mxu0 0.0
    %2423 = vmatpush1.msra.mxu0 0.0
    %2424 = vmatprep.subr.mxu0 0.0
    %2425 = vmatpush1.msra.mxu0 0.0
    %2426 = vmatprep.subr.mxu0 0.0
    %2427 = vmatpush1.msra.mxu0 0.0
    %2428 = vmatprep.subr.mxu0 0.0
    %2429 = vmatpush1.msra.mxu0 0.0
    %2430 = vmatprep.subr.mxu0 0.0
    %2431 = vmatpush1.msra.mxu0 0.0
    %2432 = vmatprep.subr.mxu0 0.0
    %2433 = vmatpush1.msra.mxu0 0.0
    %2434 = vmatprep.subr.mxu0 0.0
    %2435 = vmatpush1.msra.mxu0 0.0
    %2436 = vmatprep.subr.mxu0 0.0
    %2437 = vmatpush1.msra.mxu0 0.0
    %2438 = vmatprep.subr.mxu0 0.0
    %2439 = vmatpush1.msra.mxu0 0.0
    %2440 = vmatprep.subr.mxu0 0.0
    %2441 = vmatpush1.msra.mxu0 0.0
    %2442 = vmatprep.subr.mxu0 0.0
    %2443 = vmatpush1.msra.mxu0 0.0
    %2444 = vmatprep.subr.mxu0 0.0
    %2445 = vmatpush1.msra.mxu0 %v1355
    %2446 = vmatprep.subr.mxu0 0.0
    %2447 = vmatpush1.msra.mxu0 %v1354
    %2448 = vmatprep.subr.mxu0 0.0
    %2449 = vmatpush1.msra.mxu0 %v1353
    %2450 = vmatprep.subr.mxu0 0.0
    %2451 = vmatpush1.msra.mxu0 %v1352
    %2452 = vmatprep.subr.mxu0 0.0
    %2453 = vmatpush2.msra.mxu0 0.0
    %2454 = vmatprep.subr.mxu0 0.0
    %2455 = vmatpush2.msra.mxu0 0.0
    %2456 = vmatprep.subr.mxu0 0.0
    %2457 = vmatpush2.msra.mxu0 0.0
    %2458 = vmatprep.subr.mxu0 0.0
    %2459 = vmatpush2.msra.mxu0 0.0
    %2460 = vmatprep.subr.mxu0 0.0
    %2461 = vmatpush2.msra.mxu0 0.0
    %2462 = vmatprep.subr.mxu0 0.0
    %2463 = vmatpush2.msra.mxu0 0.0
    %2464 = vmatprep.subr.mxu0 0.0
    %2465 = vmatpush2.msra.mxu0 0.0
    %2466 = vmatprep.subr.mxu0 0.0
    %2467 = vmatpush2.msra.mxu0 0.0
    %2468 = vmatprep.subr.mxu0 0.0
    %2469 = vmatpush2.msra.mxu0 0.0
    %2470 = vmatprep.subr.mxu0 0.0
    %2471 = vmatpush2.msra.mxu0 0.0
    %2472 = vmatprep.subr.mxu0 0.0
    %2473 = vmatpush2.msra.mxu0 0.0
    %2474 = vmatprep.subr.mxu0 0.0
    %2475 = vmatpush2.msra.mxu0 0.0
    %2476 = vmatprep.subr.mxu0 0.0
    %2477 = vmatpush2.msra.mxu0 0.0
    %2478 = vmatprep.subr.mxu0 0.0
    %2479 = vmatpush2.msra.mxu0 0.0
    %2480 = vmatprep.subr.mxu0 0.0
    %2481 = vmatpush2.msra.mxu0 0.0
    %2482 = vmatprep.subr.mxu0 0.0
    %2483 = vmatpush2.msra.mxu0 0.0
    %2484 = vmatprep.mubr.f32.mxu0 0.0
    %2485 = vmatmul.mubr.f32.gmra.mxu0 %v2418
    %v2486 = vpop.f32.mrf.mxu0
    %v2487 = vadd.f32 0.0, %v2486
    %v2488 = vpop.f32.mrf.mxu0
    %2489 = vdwg.mxu0
    %v2490 = vadd.f32 %v2416, %v2487
    %v2491 = vrot.slane %v1331, 6
    %v2492 = vsel %vm114, %v2491, 0
    %2494 = vmatprep.subr.mxu0 0.0
    %2495 = vmatpush1.msra.mxu0 0.0
    %2496 = vmatprep.subr.mxu0 0.0
    %2497 = vmatpush1.msra.mxu0 0.0
    %2498 = vmatprep.subr.mxu0 0.0
    %2499 = vmatpush1.msra.mxu0 0.0
    %2500 = vmatprep.subr.mxu0 0.0
    %2501 = vmatpush1.msra.mxu0 0.0
    %2502 = vmatprep.subr.mxu0 0.0
    %2503 = vmatpush1.msra.mxu0 0.0
    %2504 = vmatprep.subr.mxu0 0.0
    %2505 = vmatpush1.msra.mxu0 0.0
    %2506 = vmatprep.subr.mxu0 0.0
    %2507 = vmatpush1.msra.mxu0 0.0
    %2508 = vmatprep.subr.mxu0 0.0
    %2509 = vmatpush1.msra.mxu0 0.0
    %2510 = vmatprep.subr.mxu0 0.0
    %2511 = vmatpush1.msra.mxu0 0.0
    %2512 = vmatprep.subr.mxu0 0.0
    %2513 = vmatpush1.msra.mxu0 0.0
    %2514 = vmatprep.subr.mxu0 0.0
    %2515 = vmatpush1.msra.mxu0 0.0
    %2516 = vmatprep.subr.mxu0 0.0
    %2517 = vmatpush1.msra.mxu0 0.0
    %2518 = vmatprep.subr.mxu0 0.0
    %2519 = vmatpush1.msra.mxu0 %v1359
    %2520 = vmatprep.subr.mxu0 0.0
    %2521 = vmatpush1.msra.mxu0 %v1358
    %2522 = vmatprep.subr.mxu0 0.0
    %2523 = vmatpush1.msra.mxu0 %v1357
    %2524 = vmatprep.subr.mxu0 0.0
    %2525 = vmatpush1.msra.mxu0 %v1356
    %2526 = vmatprep.subr.mxu0 0.0
    %2527 = vmatpush2.msra.mxu0 0.0
    %2528 = vmatprep.subr.mxu0 0.0
    %2529 = vmatpush2.msra.mxu0 0.0
    %2530 = vmatprep.subr.mxu0 0.0
    %2531 = vmatpush2.msra.mxu0 0.0
    %2532 = vmatprep.subr.mxu0 0.0
    %2533 = vmatpush2.msra.mxu0 0.0
    %2534 = vmatprep.subr.mxu0 0.0
    %2535 = vmatpush2.msra.mxu0 0.0
    %2536 = vmatprep.subr.mxu0 0.0
    %2537 = vmatpush2.msra.mxu0 0.0
    %2538 = vmatprep.subr.mxu0 0.0
    %2539 = vmatpush2.msra.mxu0 0.0
    %2540 = vmatprep.subr.mxu0 0.0
    %2541 = vmatpush2.msra.mxu0 0.0
    %2542 = vmatprep.subr.mxu0 0.0
    %2543 = vmatpush2.msra.mxu0 0.0
    %2544 = vmatprep.subr.mxu0 0.0
    %2545 = vmatpush2.msra.mxu0 0.0
    %2546 = vmatprep.subr.mxu0 0.0
    %2547 = vmatpush2.msra.mxu0 0.0
    %2548 = vmatprep.subr.mxu0 0.0
    %2549 = vmatpush2.msra.mxu0 0.0
    %2550 = vmatprep.subr.mxu0 0.0
    %2551 = vmatpush2.msra.mxu0 0.0
    %2552 = vmatprep.subr.mxu0 0.0
    %2553 = vmatpush2.msra.mxu0 0.0
    %2554 = vmatprep.subr.mxu0 0.0
    %2555 = vmatpush2.msra.mxu0 0.0
    %2556 = vmatprep.subr.mxu0 0.0
    %2557 = vmatpush2.msra.mxu0 0.0
    %2558 = vmatprep.mubr.f32.mxu0 0.0
    %2559 = vmatmul.mubr.f32.gmra.mxu0 %v2492
    %v2560 = vpop.f32.mrf.mxu0
    %v2561 = vadd.f32 0.0, %v2560
    %v2562 = vpop.f32.mrf.mxu0
    %2563 = vdwg.mxu0
    %v2564 = vadd.f32 %v2490, %v2561
    %v2565 = vrot.slane %v1331, 7
    %v2566 = vsel %vm114, %v2565, 0
    %2568 = vmatprep.subr.mxu0 0.0
    %2569 = vmatpush1.msra.mxu0 0.0
    %2570 = vmatprep.subr.mxu0 0.0
    %2571 = vmatpush1.msra.mxu0 0.0
    %2572 = vmatprep.subr.mxu0 0.0
    %2573 = vmatpush1.msra.mxu0 0.0
    %2574 = vmatprep.subr.mxu0 0.0
    %2575 = vmatpush1.msra.mxu0 0.0
    %2576 = vmatprep.subr.mxu0 0.0
    %2577 = vmatpush1.msra.mxu0 0.0
    %2578 = vmatprep.subr.mxu0 0.0
    %2579 = vmatpush1.msra.mxu0 0.0
    %2580 = vmatprep.subr.mxu0 0.0
    %2581 = vmatpush1.msra.mxu0 0.0
    %2582 = vmatprep.subr.mxu0 0.0
    %2583 = vmatpush1.msra.mxu0 0.0
    %2584 = vmatprep.subr.mxu0 0.0
    %2585 = vmatpush1.msra.mxu0 0.0
    %2586 = vmatprep.subr.mxu0 0.0
    %2587 = vmatpush1.msra.mxu0 0.0
    %2588 = vmatprep.subr.mxu0 0.0
    %2589 = vmatpush1.msra.mxu0 0.0
    %2590 = vmatprep.subr.mxu0 0.0
    %2591 = vmatpush1.msra.mxu0 0.0
    %2592 = vmatprep.subr.mxu0 0.0
    %2593 = vmatpush1.msra.mxu0 %v1363
    %2594 = vmatprep.subr.mxu0 0.0
    %2595 = vmatpush1.msra.mxu0 %v1362
    %2596 = vmatprep.subr.mxu0 0.0
    %2597 = vmatpush1.msra.mxu0 %v1361
    %2598 = vmatprep.subr.mxu0 0.0
    %2599 = vmatpush1.msra.mxu0 %v1360
    %2600 = vmatprep.subr.mxu0 0.0
    %2601 = vmatpush2.msra.mxu0 0.0
    %2602 = vmatprep.subr.mxu0 0.0
    %2603 = vmatpush2.msra.mxu0 0.0
    %2604 = vmatprep.subr.mxu0 0.0
    %2605 = vmatpush2.msra.mxu0 0.0
    %2606 = vmatprep.subr.mxu0 0.0
    %2607 = vmatpush2.msra.mxu0 0.0
    %2608 = vmatprep.subr.mxu0 0.0
    %2609 = vmatpush2.msra.mxu0 0.0
    %2610 = vmatprep.subr.mxu0 0.0
    %2611 = vmatpush2.msra.mxu0 0.0
    %2612 = vmatprep.subr.mxu0 0.0
    %2613 = vmatpush2.msra.mxu0 0.0
    %2614 = vmatprep.subr.mxu0 0.0
    %2615 = vmatpush2.msra.mxu0 0.0
    %2616 = vmatprep.subr.mxu0 0.0
    %2617 = vmatpush2.msra.mxu0 0.0
    %2618 = vmatprep.subr.mxu0 0.0
    %2619 = vmatpush2.msra.mxu0 0.0
    %2620 = vmatprep.subr.mxu0 0.0
    %2621 = vmatpush2.msra.mxu0 0.0
    %2622 = vmatprep.subr.mxu0 0.0
    %2623 = vmatpush2.msra.mxu0 0.0
    %2624 = vmatprep.subr.mxu0 0.0
    %2625 = vmatpush2.msra.mxu0 0.0
    %2626 = vmatprep.subr.mxu0 0.0
    %2627 = vmatpush2.msra.mxu0 0.0
    %2628 = vmatprep.subr.mxu0 0.0
    %2629 = vmatpush2.msra.mxu0 0.0
    %2630 = vmatprep.subr.mxu0 0.0
    %2631 = vmatpush2.msra.mxu0 0.0
    %2632 = vmatprep.mubr.f32.mxu0 0.0
    %2633 = vmatmul.mubr.f32.gmra.mxu0 %v2566
    %v2634 = vpop.f32.mrf.mxu0
    %v2635 = vadd.f32 0.0, %v2634
    %v2636 = vpop.f32.mrf.mxu0
    %2637 = vdwg.mxu0
    %v2638 = vadd.f32 %v2564, %v2635
    %v2639 = vmax.f32 %v2638, 0.0
    %2640 = vmatprep.subr.mxu0 0.0
    %2641 = vmatpush1.msra.mxu0 %v1380
    %2642 = vmatprep.subr.mxu0 0.0
    %2643 = vmatpush1.msra.mxu0 %v1379
    %2644 = vmatprep.subr.mxu0 0.0
    %2645 = vmatpush1.msra.mxu0 %v1378
    %2646 = vmatprep.subr.mxu0 0.0
    %2647 = vmatpush1.msra.mxu0 %v1377
    %2648 = vmatprep.subr.mxu0 0.0
    %2649 = vmatpush1.msra.mxu0 %v1376
    %2650 = vmatprep.subr.mxu0 0.0
    %2651 = vmatpush1.msra.mxu0 %v1375
    %2652 = vmatprep.subr.mxu0 0.0
    %2653 = vmatpush1.msra.mxu0 %v1374
    %2654 = vmatprep.subr.mxu0 0.0
    %2655 = vmatpush1.msra.mxu0 %v1373
    %2656 = vmatprep.subr.mxu0 0.0
    %2657 = vmatpush1.msra.mxu0 %v1372
    %2658 = vmatprep.subr.mxu0 0.0
    %2659 = vmatpush1.msra.mxu0 %v1371
    %2660 = vmatprep.subr.mxu0 0.0
    %2661 = vmatpush1.msra.mxu0 %v1370
    %2662 = vmatprep.subr.mxu0 0.0
    %2663 = vmatpush1.msra.mxu0 %v1369
    %2664 = vmatprep.subr.mxu0 0.0
    %2665 = vmatpush1.msra.mxu0 %v1368
    %2666 = vmatprep.subr.mxu0 0.0
    %2667 = vmatpush1.msra.mxu0 %v1367
    %2668 = vmatprep.subr.mxu0 0.0
    %2669 = vmatpush1.msra.mxu0 %v1366
    %2670 = vmatprep.subr.mxu0 0.0
    %2671 = vmatpush1.msra.mxu0 %v1365
    %2672 = vmatprep.subr.mxu0 0.0
    %2673 = vmatpush2.msra.mxu0 0.0
    %2674 = vmatprep.subr.mxu0 0.0
    %2675 = vmatpush2.msra.mxu0 0.0
    %2676 = vmatprep.subr.mxu0 0.0
    %2677 = vmatpush2.msra.mxu0 0.0
    %2678 = vmatprep.subr.mxu0 0.0
    %2679 = vmatpush2.msra.mxu0 0.0
    %2680 = vmatprep.subr.mxu0 0.0
    %2681 = vmatpush2.msra.mxu0 0.0
    %2682 = vmatprep.subr.mxu0 0.0
    %2683 = vmatpush2.msra.mxu0 0.0
    %2684 = vmatprep.subr.mxu0 0.0
    %2685 = vmatpush2.msra.mxu0 0.0
    %2686 = vmatprep.subr.mxu0 0.0
    %2687 = vmatpush2.msra.mxu0 0.0
    %2688 = vmatprep.subr.mxu0 0.0
    %2689 = vmatpush2.msra.mxu0 0.0
    %2690 = vmatprep.subr.mxu0 0.0
    %2691 = vmatpush2.msra.mxu0 0.0
    %2692 = vmatprep.subr.mxu0 0.0
    %2693 = vmatpush2.msra.mxu0 0.0
    %2694 = vmatprep.subr.mxu0 0.0
    %2695 = vmatpush2.msra.mxu0 0.0
    %2696 = vmatprep.subr.mxu0 0.0
    %2697 = vmatpush2.msra.mxu0 0.0
    %2698 = vmatprep.subr.mxu0 0.0
    %2699 = vmatpush2.msra.mxu0 0.0
    %2700 = vmatprep.subr.mxu0 0.0
    %2701 = vmatpush2.msra.mxu0 0.0
    %2702 = vmatprep.subr.mxu0 0.0
    %2703 = vmatpush2.msra.mxu0 0.0
    %2704 = vmatprep.mubr.f32.mxu0 0.0
    %2705 = vmatmul.mubr.f32.gmra.mxu0 %v2639
    %v2706 = vpop.f32.mrf.mxu0
    %v2707 = vadd.f32 %v1381, %v2706
    %v2708 = vpop.f32.mrf.mxu0
    %2709 = vdwg.mxu0
    %2710 = vst.msk [vmem:[#allocation9 + $0x1] sm:$0x1] %vm2045, %v2707
    // Predicated region
    $region66: #{tpu_custom_call.1} parent=1 // pred_check
      _
    $region67: #{tpu_custom_call.1} parent=1 // pred_check_branch
      %2712 = sbr.rel (0) target = $region69
    $region68: #{tpu_custom_call.1} parent=1 // pred_region
      %s2714 = ssub.s32 32, 32
      %2715 = vsyncadd [#allocation5], %s2714
      %s2717 = sshll.u32 [#allocation9], 4
      %s2718 = int_to_ptr.vmem [resolvable:$true] %s2717
      %2720 = dma.vmem_to_hbm [thread:$0]  %s2718, 32, %s13, [#allocation5]
    $region69: #{tpu_custom_call.1} parent=1 // pred_fallthru
      _
    // Predicated region
    $region70: #{tpu_custom_call.1} parent=1 // pred_check
      _
    $region71: #{tpu_custom_call.1} parent=1 // pred_check_branch
      %2722 = sbr.rel (0) target = $region73
    $region72: #{tpu_custom_call.1} parent=1 // pred_region
      %2723 = dma.done [#allocation5], 32
    $region73: #{tpu_custom_call.1} parent=1 // pred_fallthru
      _
    %2724 = vsyncpa [#allocation4], 1
    %2725 = vsyncpa [#allocation7], 1
    %2726 = vsyncpa [#allocation5], 1

</llo_original>
